<compile_context>
chip_gen: v5e
topology: v5e:2x2
jax: 0.10.0
libtpu: 0.0.40
codegen_flags: <defaults>
</compile_context>

<pallas_src>
import math

import jax
import jax.numpy as jnp
from jax import lax
from jax.experimental import pallas as pl
from jax.experimental.pallas import tpu as pltpu


B_BLK = 16  # batch rows per grid block (bf16 sublane packing = 16)


def _round_up(n, m):
    return ((n + m - 1) // m) * m


# ------------------------------ fused kernel -------------------------------- #

def _make_fused_kernel(T, num_layers, H):
    """Fused multi-layer LSTM + fc + softmax kernel for one batch block.

    All refs are 2-D (sizes already padded):
      x_ref:          (T*B_BLK, D)    time-major-within-block input, bf16
      per layer l:
        wih_ref:      (D_in_l, 4H)    W_ih^T, gate order [i, f, g, o], bf16
        whh_ref:      (H, 4H)         W_hh^T, bf16
        b_ref:        (1, 4H)         b_ih + b_hh, f32
      fcw_ref:        (H, O)          fc weight^T, bf16
      fcb_ref:        (1, O)          fc bias, f32 (padded classes = -1e30)
      out_ref:        (B_BLK, O)      softmax probabilities, f32
    Scratch:
      xw_scr:         (T*B_BLK, 4H)   hoisted input projection, f32
      y_scr:          (T*B_BLK, H)    inter-layer hidden sequence, bf16
    """

    def kernel(*refs):
        x_ref = refs[0]
        layer_refs = refs[1:1 + 3 * num_layers]
        fcw_ref = refs[1 + 3 * num_layers]
        fcb_ref = refs[2 + 3 * num_layers]
        out_ref = refs[3 + 3 * num_layers]
        xw_scr = refs[4 + 3 * num_layers]
        y_scr = refs[5 + 3 * num_layers]

        def sigmoid(v):
            # tanh identity: one EUP op (tanh) + cheap VPU ops, instead of the
            # exp + reciprocal pair jax.nn.sigmoid lowers to.
            return 0.5 * jnp.tanh(0.5 * v) + 0.5

        h_last = None
        for layer in range(num_layers):
            wih_ref = layer_refs[3 * layer + 0]
            whh_ref = layer_refs[3 * layer + 1]
            b_ref = layer_refs[3 * layer + 2]

            inp = x_ref[...] if layer == 0 else y_scr[...]      # bf16, 2-D

            # Hoisted input projection: one big 2-D bf16 MXU matmul (f32 acc)
            # off the serial recurrence path; rows are already time-major
            # within the batch block, so no reshape/relayout is needed.
            xw_scr[...] = (
                jnp.dot(inp, wih_ref[...], preferred_element_type=jnp.float32)
                + b_ref[...]
            )
            # TODO(synk): for large T, chunk this projection over T (xw_scr of
            # shape (T_chunk*B_BLK, 4H)) to fit v7x's 64 MiB VMEM and overlap
            # the next chunk's projection with this chunk's recurrence.

            write_seq = layer < num_layers - 1   # last layer: only h_T needed

            # Serial recurrence: latency-bound on the h_{t-1} -> h_t chain (the
            # recurrent matmul consumes h_t, so it cannot overlap the previous
            # step's gate math).
            # TODO(synk): hold W_hh weight-stationary in the MXU
            # (pltpu.matmul_push_rhs / matmul_acc_lhs / matmul_pop) so the
            # (H,4H) RHS is not re-streamed on every one of the T serial steps.
            def body(t, carry, whh_ref=whh_ref, write_seq=write_seq):
                h, c = carry                                     # f32 (B_BLK, H)
                row = pl.multiple_of(t * B_BLK, B_BLK)
                gates = xw_scr[pl.ds(row, B_BLK), :] + jnp.dot(
                    h.astype(jnp.bfloat16), whh_ref[...],
                    preferred_element_type=jnp.float32)
                # H is a multiple of 128 -> lane-aligned gate slices.
                i = sigmoid(gates[:, 0 * H:1 * H])
                f = sigmoid(gates[:, 1 * H:2 * H])
                g = jnp.tanh(gates[:, 2 * H:3 * H])
                o = sigmoid(gates[:, 3 * H:4 * H])
                c = f * c + i * g
                h = o * jnp.tanh(c)
                if write_seq:
                    y_scr[pl.ds(row, B_BLK), :] = h.astype(jnp.bfloat16)
                return (h, c)

            h0 = jnp.zeros((B_BLK, H), jnp.float32)
            c0 = jnp.zeros((B_BLK, H), jnp.float32)
            # Bounded unroll: enough for LLO scheduling visibility without
            # blowing up live ranges against 64 vregs at realistic T.
            h_last, _ = lax.fori_loop(0, T, body, (h0, c0), unroll=min(T, 8))

        # Fused classifier epilogue on the final hidden state.
        logits = (
            jnp.dot(h_last.astype(jnp.bfloat16), fcw_ref[...],
                    preferred_element_type=jnp.float32)
            + fcb_ref[...]
        )
        m = jnp.max(logits, axis=-1, keepdims=True)
        e = jnp.exp(logits - m)
        inv = pl.reciprocal(jnp.sum(e, axis=-1, keepdims=True), approx=True)
        out_ref[...] = (e * inv).astype(out_ref.dtype)

    return kernel


# -------------------------------- wrapper ------------------------------------ #

def _pad_gate_mat(w, d_in_pad, h, h_pad):
    """(d_in, 4h) -> (d_in_pad, 4*h_pad) with per-gate zero padding."""
    d_in = w.shape[0]
    w = w.reshape(d_in, 4, h)
    w = jnp.pad(w, ((0, d_in_pad - d_in), (0, 0), (0, h_pad - h)))
    return w.reshape(d_in_pad, 4 * h_pad)


def _pad_gate_bias(b, h, h_pad):
    """(1, 4h) -> (1, 4*h_pad) with per-gate zero padding."""
    b = b.reshape(1, 4, h)
    b = jnp.pad(b, ((0, 0), (0, 0), (0, h_pad - h)))
    return b.reshape(1, 4 * h_pad)


@jax.jit
def lstm_contempt_net_forward(x_btd, layer_params, fc_w_t, fc_b):
    """x_btd: (B, T, D) batch-first, like the PyTorch module."""
    B, T, D = x_btd.shape
    num_layers = len(layer_params)
    H = layer_params[0][1].shape[0]
    O = fc_w_t.shape[1]

    B_pad = _round_up(B, B_BLK)   # bf16 sublane packing (16)
    D_pad = _round_up(D, 128)     # lane
    H_pad = _round_up(H, 128)     # lane (also keeps gate slices lane-aligned)
    O_pad = _round_up(O, 128)     # lane-dense output store
    n_blk = B_pad // B_BLK

    # Glue (XLA side): pad, then lay x out as a 2-D (n_blk*T*B_BLK, D_pad)
    # array, time-major within each batch block — the kernel never reshapes.
    x = jnp.pad(x_btd.astype(jnp.float32),
                ((0, B_pad - B), (0, 0), (0, D_pad - D)))      # (B_pad, T, D_pad)
    x = x.reshape(n_blk, B_BLK, T, D_pad).transpose(0, 2, 1, 3)
    x = x.reshape(n_blk * T * B_BLK, D_pad).astype(jnp.bfloat16)

    padded_layers = []
    for layer, (wih_t, whh_t, b) in enumerate(layer_params):
        d_in_pad = D_pad if layer == 0 else H_pad
        padded_layers.append((
            _pad_gate_mat(wih_t, d_in_pad, H, H_pad).astype(jnp.bfloat16),
            _pad_gate_mat(whh_t, H_pad, H, H_pad).astype(jnp.bfloat16),
            _pad_gate_bias(b, H, H_pad),                        # stays f32
        ))

    fcw = jnp.pad(fc_w_t, ((0, H_pad - H), (0, O_pad - O))).astype(jnp.bfloat16)
    # Padded classes get a huge negative f32 bias -> ~0 softmax mass.
    fcb = jnp.pad(fc_b, ((0, 0), (0, O_pad - O)), constant_values=-1e30)

    kernel = _make_fused_kernel(T, num_layers, H_pad)

    in_specs = [pl.BlockSpec((T * B_BLK, D_pad), lambda i: (i, 0))]
    for layer in range(num_layers):
        d_in_pad = D_pad if layer == 0 else H_pad
        in_specs += [
            pl.BlockSpec((d_in_pad, 4 * H_pad), lambda i: (0, 0)),
            pl.BlockSpec((H_pad, 4 * H_pad), lambda i: (0, 0)),
            pl.BlockSpec((1, 4 * H_pad), lambda i: (0, 0)),
        ]
    in_specs += [
        pl.BlockSpec((H_pad, O_pad), lambda i: (0, 0)),
        pl.BlockSpec((1, O_pad), lambda i: (0, 0)),
    ]
    out_spec = pl.BlockSpec((B_BLK, O_pad), lambda i: (i, 0))

    # VMEM budget from the actual footprint (+50% and 2 MiB headroom), capped
    # at v7x's 64 MiB physical VMEM.
    w_bytes = 0
    for layer in range(num_layers):
        d_in_pad = D_pad if layer == 0 else H_pad
        w_bytes += (d_in_pad + H_pad) * 4 * H_pad * 2 + 4 * H_pad * 4
    w_bytes += H_pad * O_pad * 2 + O_pad * 4
    io_bytes = T * B_BLK * D_pad * 2 + B_BLK * O_pad * 4
    scr_bytes = T * B_BLK * 4 * H_pad * 4 + T * B_BLK * H_pad * 2
    footprint = 2 * io_bytes + 2 * w_bytes + scr_bytes
    vmem_limit = max(32 << 20, min(int(1.5 * footprint) + (2 << 20), 64 << 20))

    flat_params = [p for lp in padded_layers for p in lp]

    out_pad = pl.pallas_call(
        kernel,
        out_shape=jax.ShapeDtypeStruct((B_pad, O_pad), jnp.float32),
        grid=(n_blk,),
        in_specs=in_specs,
        out_specs=out_spec,
        scratch_shapes=[
            pltpu.VMEM((T * B_BLK, 4 * H_pad), jnp.float32),    # xw (f32 pre-acts)
            pltpu.VMEM((T * B_BLK, H_pad), jnp.bfloat16),       # inter-layer h seq
        ],
        compiler_params=pltpu.CompilerParams(
            dimension_semantics=("parallel",),   # v7x: 2 TCs take batch shards
            vmem_limit_bytes=vmem_limit,
        ),
    )(x, *flat_params, fcw, fcb)

    return out_pad[:B, :O]


# --------------------------- pure-JAX reference ------------------------------ #

def ref_forward(x_btd, layer_params, fc_w_t, fc_b):
    B = x_btd.shape[0]
    h_seq = jnp.transpose(x_btd, (1, 0, 2))
    for (wih_t, whh_t, b) in layer_params:
        H = whh_t.shape[0]
        h = jnp.zeros((B, H), jnp.float32)
        c = jnp.zeros((B, H), jnp.float32)
        outs = []
        for t in range(h_seq.shape[0]):
            gates = h_seq[t] @ wih_t + h @ whh_t + b
            i = jax.nn.sigmoid(gates[:, 0 * H:1 * H])
            f = jax.nn.sigmoid(gates[:, 1 * H:2 * H])
            g = jnp.tanh(gates[:, 2 * H:3 * H])
            o = jax.nn.sigmoid(gates[:, 3 * H:4 * H])
            c = f * c + i * g
            h = o * jnp.tanh(c)
            outs.append(h)
        h_seq = jnp.stack(outs, axis=0)
    logits = h_seq[-1] @ fc_w_t + fc_b
    return jax.nn.softmax(logits, axis=-1)


# -------------------------------- param init --------------------------------- #

def init_params(key, input_dim, hidden_dim, num_layers, output_dim):
    """Deterministic init mimicking PyTorch's U(-1/sqrt(H), 1/sqrt(H))."""
    k = 1.0 / math.sqrt(hidden_dim)
    layer_params = []
    for layer in range(num_layers):
        d_in = input_dim if layer == 0 else hidden_dim
        key, k1, k2, k3, k4 = jax.random.split(key, 5)
        w_ih = jax.random.uniform(k1, (4 * hidden_dim, d_in), jnp.float32, -k, k)
        w_hh = jax.random.uniform(k2, (4 * hidden_dim, hidden_dim), jnp.float32, -k, k)
        b_ih = jax.random.uniform(k3, (4 * hidden_dim,), jnp.float32, -k, k)
        b_hh = jax.random.uniform(k4, (4 * hidden_dim,), jnp.float32, -k, k)
        layer_params.append(
            (w_ih.T, w_hh.T, (b_ih + b_hh).reshape(1, 4 * hidden_dim))
        )
    key, k5, k6 = jax.random.split(key, 3)
    fc_w = jax.random.uniform(k5, (output_dim, hidden_dim), jnp.float32, -k, k)
    fc_b = jax.random.uniform(k6, (output_dim,), jnp.float32, -k, k)
    return layer_params, fc_w.T, fc_b.reshape(1, output_dim)


# ----------------------------------- main ------------------------------------ #

if __name__ == "__main__":
    B, T, D, H, L, O = 2, 8, 16, 32, 2, 4  # batch, seq, input_dim, hidden, layers, classes

    key = jax.random.PRNGKey(0)
    key, kx, kp = jax.random.split(key, 3)
    x = jax.random.normal(kx, (B, T, D), jnp.float32)

    layer_params, fc_w_t, fc_b = init_params(kp, D, H, L, O)

    out = jax.block_until_ready(
        lstm_contempt_net_forward(x, layer_params, fc_w_t, fc_b))
    ref = jax.block_until_ready(ref_forward(x, layer_params, fc_w_t, fc_b))

    assert out.shape == (B, O)
    # bf16 MXU operands (f32 accumulation) -> tolerance vs. the f32 reference
    # loosened to 2e-2 as anticipated in the performance review.
    assert jnp.allclose(out, ref, atol=2e-2, rtol=2e-2), "mismatch vs pure-JAX reference"
    assert jnp.allclose(jnp.sum(out, axis=-1), jnp.ones((B,)), atol=1e-2)

    print("KERNEL_OK")
</pallas_src>

<mosaic_0001>
module attributes {stable_mosaic.version = 11 : i64} {
  func.func @kernel(%arg0: i32, %arg1: memref<128x128xbf16, #tpu.memory_space<vmem>>, %arg2: memref<128x512xbf16, #tpu.memory_space<vmem>>, %arg3: memref<128x512xbf16, #tpu.memory_space<vmem>>, %arg4: memref<1x512xf32, #tpu.memory_space<vmem>>, %arg5: memref<128x512xbf16, #tpu.memory_space<vmem>>, %arg6: memref<128x512xbf16, #tpu.memory_space<vmem>>, %arg7: memref<1x512xf32, #tpu.memory_space<vmem>>, %arg8: memref<128x128xbf16, #tpu.memory_space<vmem>>, %arg9: memref<1x128xf32, #tpu.memory_space<vmem>>, %arg10: memref<16x128xf32, #tpu.memory_space<vmem>>, %arg11: memref<128x512xf32, #tpu.memory_space<vmem>>, %arg12: memref<128x128xbf16, #tpu.memory_space<vmem>>) attributes {dimension_semantics = [#tpu.dimension_semantics<parallel>], iteration_bounds = array<i64: 1>, scalar_prefetch = 0 : i64, scratch_operands = 2 : i64, tpu.core_type = #tpu.core_type<tc>, window_params = [{transform_indices = @transform_0, window_bounds = array<i64: 128, 128>}, {pipeline_mode = #tpu.pipeline_mode<synchronous>, transform_indices = @transform_1, window_bounds = array<i64: 128, 512>}, {pipeline_mode = #tpu.pipeline_mode<synchronous>, transform_indices = @transform_2, window_bounds = array<i64: 128, 512>}, {pipeline_mode = #tpu.pipeline_mode<synchronous>, transform_indices = @transform_3, window_bounds = array<i64: 1, 512>}, {pipeline_mode = #tpu.pipeline_mode<synchronous>, transform_indices = @transform_4, window_bounds = array<i64: 128, 512>}, {pipeline_mode = #tpu.pipeline_mode<synchronous>, transform_indices = @transform_5, window_bounds = array<i64: 128, 512>}, {pipeline_mode = #tpu.pipeline_mode<synchronous>, transform_indices = @transform_6, window_bounds = array<i64: 1, 512>}, {pipeline_mode = #tpu.pipeline_mode<synchronous>, transform_indices = @transform_7, window_bounds = array<i64: 128, 128>}, {pipeline_mode = #tpu.pipeline_mode<synchronous>, transform_indices = @transform_8, window_bounds = array<i64: 1, 128>}, {transform_indices = @transform_9, window_bounds = array<i64: 16, 128>}]} {
    %c0 = arith.constant 0 : index
    %c0_0 = arith.constant 0 : index
    %0 = vector.load %arg1[%c0, %c0_0] : memref<128x128xbf16, #tpu.memory_space<vmem>>, vector<128x128xbf16>
    %c0_1 = arith.constant 0 : index
    %c0_2 = arith.constant 0 : index
    %1 = vector.load %arg2[%c0_1, %c0_2] : memref<128x512xbf16, #tpu.memory_space<vmem>>, vector<128x512xbf16>
    %cst = arith.constant dense<0.000000e+00> : vector<128x512xf32>
    %2 = tpu.matmul %0, %1, %cst {dimension_numbers = #tpu.dot_dimension_numbers<[1], [0], [0], [1], [0, 0, 1, 1], [], []>} : vector<128x128xbf16>, vector<128x512xbf16>, vector<128x512xf32> -> vector<128x512xf32>
    %c0_3 = arith.constant 0 : index
    %c0_4 = arith.constant 0 : index
    %3 = vector.load %arg4[%c0_3, %c0_4] : memref<1x512xf32, #tpu.memory_space<vmem>>, vector<1x512xf32>
    %4 = vector.broadcast %3 : vector<1x512xf32> to vector<128x512xf32>
    %5 = arith.addf %2, %4 : vector<128x512xf32>
    %c0_5 = arith.constant 0 : index
    %c0_6 = arith.constant 0 : index
    %6 = vector.load %arg11[%c0_5, %c0_6] : memref<128x512xf32, #tpu.memory_space<vmem>>, vector<128x512xf32>
    tpu.vector_store %arg11[%c0_5, %c0_6], %5 {strides = array<i32>} : memref<128x512xf32, #tpu.memory_space<vmem>>, vector<128x512xf32>,
    %cst_7 = arith.constant 0.000000e+00 : f32
    %7 = vector.broadcast %cst_7 : f32 to vector<16x128xf32>
    %cst_8 = arith.constant 0.000000e+00 : f32
    %8 = vector.broadcast %cst_8 : f32 to vector<16x128xf32>
    %c0_i32 = arith.constant 0 : i32
    %c16_i32 = arith.constant 16 : i32
    %9 = arith.muli %c0_i32, %c16_i32 : i32
    %10 = tpu.assume_multiple %9, 16 : i32
    %11 = arith.index_cast %10 : i32 to index
    %c0_9 = arith.constant 0 : index
    %12 = vector.load %arg11[%11, %c0_9] : memref<128x512xf32, #tpu.memory_space<vmem>>, vector<16x512xf32>
    %13 = arith.truncf %7 : vector<16x128xf32> to vector<16x128xbf16>
    %c0_10 = arith.constant 0 : index
    %c0_11 = arith.constant 0 : index
    %14 = vector.load %arg3[%c0_10, %c0_11] : memref<128x512xbf16, #tpu.memory_space<vmem>>, vector<128x512xbf16>
    %cst_12 = arith.constant dense<0.000000e+00> : vector<16x512xf32>
    %15 = tpu.matmul %13, %14, %cst_12 {dimension_numbers = #tpu.dot_dimension_numbers<[1], [0], [0], [1], [0, 0, 1, 1], [], []>} : vector<16x128xbf16>, vector<128x512xbf16>, vector<16x512xf32> -> vector<16x512xf32>
    %16 = arith.addf %12, %15 : vector<16x512xf32>
    %17 = vector.extract_strided_slice %16 {offsets = [0, 0], sizes = [16, 128], strides = [1, 1]} : vector<16x512xf32> to vector<16x128xf32>
    %cst_13 = arith.constant 5.000000e-01 : f32
    %18 = vector.broadcast %cst_13 : f32 to vector<16x128xf32>
    %19 = arith.mulf %18, %17 : vector<16x128xf32>
    %20 = math.tanh %19 : vector<16x128xf32>
    %cst_14 = arith.constant 5.000000e-01 : f32
    %21 = vector.broadcast %cst_14 : f32 to vector<16x128xf32>
    %22 = arith.mulf %21, %20 : vector<16x128xf32>
    %cst_15 = arith.constant 5.000000e-01 : f32
    %23 = vector.broadcast %cst_15 : f32 to vector<16x128xf32>
    %24 = arith.addf %22, %23 : vector<16x128xf32>
    %25 = vector.extract_strided_slice %16 {offsets = [0, 128], sizes = [16, 128], strides = [1, 1]} : vector<16x512xf32> to vector<16x128xf32>
    %cst_16 = arith.constant 5.000000e-01 : f32
    %26 = vector.broadcast %cst_16 : f32 to vector<16x128xf32>
    %27 = arith.mulf %26, %25 : vector<16x128xf32>
    %28 = math.tanh %27 : vector<16x128xf32>
    %cst_17 = arith.constant 5.000000e-01 : f32
    %29 = vector.broadcast %cst_17 : f32 to vector<16x128xf32>
    %30 = arith.mulf %29, %28 : vector<16x128xf32>
    %cst_18 = arith.constant 5.000000e-01 : f32
    %31 = vector.broadcast %cst_18 : f32 to vector<16x128xf32>
    %32 = arith.addf %30, %31 : vector<16x128xf32>
    %33 = vector.extract_strided_slice %16 {offsets = [0, 256], sizes = [16, 128], strides = [1, 1]} : vector<16x512xf32> to vector<16x128xf32>
    %34 = math.tanh %33 : vector<16x128xf32>
    %35 = vector.extract_strided_slice %16 {offsets = [0, 384], sizes = [16, 128], strides = [1, 1]} : vector<16x512xf32> to vector<16x128xf32>
    %cst_19 = arith.constant 5.000000e-01 : f32
    %36 = vector.broadcast %cst_19 : f32 to vector<16x128xf32>
    %37 = arith.mulf %36, %35 : vector<16x128xf32>
    %38 = math.tanh %37 : vector<16x128xf32>
    %cst_20 = arith.constant 5.000000e-01 : f32
    %39 = vector.broadcast %cst_20 : f32 to vector<16x128xf32>
    %40 = arith.mulf %39, %38 : vector<16x128xf32>
    %cst_21 = arith.constant 5.000000e-01 : f32
    %41 = vector.broadcast %cst_21 : f32 to vector<16x128xf32>
    %42 = arith.addf %40, %41 : vector<16x128xf32>
    %43 = arith.mulf %32, %8 : vector<16x128xf32>
    %44 = arith.mulf %24, %34 : vector<16x128xf32>
    %45 = arith.addf %43, %44 : vector<16x128xf32>
    %46 = math.tanh %45 : vector<16x128xf32>
    %47 = arith.mulf %42, %46 : vector<16x128xf32>
    %48 = arith.truncf %47 : vector<16x128xf32> to vector<16x128xbf16>
    %49 = arith.index_cast %10 : i32 to index
    %c0_22 = arith.constant 0 : index
    %50 = vector.load %arg12[%49, %c0_22] : memref<128x128xbf16, #tpu.memory_space<vmem>>, vector<16x128xbf16>
    tpu.vector_store %arg12[%49, %c0_22], %48 {strides = array<i32>} : memref<128x128xbf16, #tpu.memory_space<vmem>>, vector<16x128xbf16>,
    %c1_i32 = arith.constant 1 : i32
    %c16_i32_23 = arith.constant 16 : i32
    %51 = arith.muli %c1_i32, %c16_i32_23 : i32
    %52 = tpu.assume_multiple %51, 16 : i32
    %53 = arith.index_cast %52 : i32 to index
    %c0_24 = arith.constant 0 : index
    %54 = vector.load %arg11[%53, %c0_24] : memref<128x512xf32, #tpu.memory_space<vmem>>, vector<16x512xf32>
    %55 = arith.truncf %47 : vector<16x128xf32> to vector<16x128xbf16>
    %c0_25 = arith.constant 0 : index
    %c0_26 = arith.constant 0 : index
    %56 = vector.load %arg3[%c0_25, %c0_26] : memref<128x512xbf16, #tpu.memory_space<vmem>>, vector<128x512xbf16>
    %cst_27 = arith.constant dense<0.000000e+00> : vector<16x512xf32>
    %57 = tpu.matmul %55, %56, %cst_27 {dimension_numbers = #tpu.dot_dimension_numbers<[1], [0], [0], [1], [0, 0, 1, 1], [], []>} : vector<16x128xbf16>, vector<128x512xbf16>, vector<16x512xf32> -> vector<16x512xf32>
    %58 = arith.addf %54, %57 : vector<16x512xf32>
    %59 = vector.extract_strided_slice %58 {offsets = [0, 0], sizes = [16, 128], strides = [1, 1]} : vector<16x512xf32> to vector<16x128xf32>
    %cst_28 = arith.constant 5.000000e-01 : f32
    %60 = vector.broadcast %cst_28 : f32 to vector<16x128xf32>
    %61 = arith.mulf %60, %59 : vector<16x128xf32>
    %62 = math.tanh %61 : vector<16x128xf32>
    %cst_29 = arith.constant 5.000000e-01 : f32
    %63 = vector.broadcast %cst_29 : f32 to vector<16x128xf32>
    %64 = arith.mulf %63, %62 : vector<16x128xf32>
    %cst_30 = arith.constant 5.000000e-01 : f32
    %65 = vector.broadcast %cst_30 : f32 to vector<16x128xf32>
    %66 = arith.addf %64, %65 : vector<16x128xf32>
    %67 = vector.extract_strided_slice %58 {offsets = [0, 128], sizes = [16, 128], strides = [1, 1]} : vector<16x512xf32> to vector<16x128xf32>
    %cst_31 = arith.constant 5.000000e-01 : f32
    %68 = vector.broadcast %cst_31 : f32 to vector<16x128xf32>
    %69 = arith.mulf %68, %67 : vector<16x128xf32>
    %70 = math.tanh %69 : vector<16x128xf32>
    %cst_32 = arith.constant 5.000000e-01 : f32
    %71 = vector.broadcast %cst_32 : f32 to vector<16x128xf32>
    %72 = arith.mulf %71, %70 : vector<16x128xf32>
    %cst_33 = arith.constant 5.000000e-01 : f32
    %73 = vector.broadcast %cst_33 : f32 to vector<16x128xf32>
    %74 = arith.addf %72, %73 : vector<16x128xf32>
    %75 = vector.extract_strided_slice %58 {offsets = [0, 256], sizes = [16, 128], strides = [1, 1]} : vector<16x512xf32> to vector<16x128xf32>
    %76 = math.tanh %75 : vector<16x128xf32>
    %77 = vector.extract_strided_slice %58 {offsets = [0, 384], sizes = [16, 128], strides = [1, 1]} : vector<16x512xf32> to vector<16x128xf32>
    %cst_34 = arith.constant 5.000000e-01 : f32
    %78 = vector.broadcast %cst_34 : f32 to vector<16x128xf32>
    %79 = arith.mulf %78, %77 : vector<16x128xf32>
    %80 = math.tanh %79 : vector<16x128xf32>
    %cst_35 = arith.constant 5.000000e-01 : f32
    %81 = vector.broadcast %cst_35 : f32 to vector<16x128xf32>
    %82 = arith.mulf %81, %80 : vector<16x128xf32>
    %cst_36 = arith.constant 5.000000e-01 : f32
    %83 = vector.broadcast %cst_36 : f32 to vector<16x128xf32>
    %84 = arith.addf %82, %83 : vector<16x128xf32>
    %85 = arith.mulf %74, %45 : vector<16x128xf32>
    %86 = arith.mulf %66, %76 : vector<16x128xf32>
    %87 = arith.addf %85, %86 : vector<16x128xf32>
    %88 = math.tanh %87 : vector<16x128xf32>
    %89 = arith.mulf %84, %88 : vector<16x128xf32>
    %90 = arith.truncf %89 : vector<16x128xf32> to vector<16x128xbf16>
    %91 = arith.index_cast %52 : i32 to index
    %c0_37 = arith.constant 0 : index
    %92 = vector.load %arg12[%91, %c0_37] : memref<128x128xbf16, #tpu.memory_space<vmem>>, vector<16x128xbf16>
    tpu.vector_store %arg12[%91, %c0_37], %90 {strides = array<i32>} : memref<128x128xbf16, #tpu.memory_space<vmem>>, vector<16x128xbf16>,
    %c2_i32 = arith.constant 2 : i32
    %c16_i32_38 = arith.constant 16 : i32
    %93 = arith.muli %c2_i32, %c16_i32_38 : i32
    %94 = tpu.assume_multiple %93, 16 : i32
    %95 = arith.index_cast %94 : i32 to index
    %c0_39 = arith.constant 0 : index
    %96 = vector.load %arg11[%95, %c0_39] : memref<128x512xf32, #tpu.memory_space<vmem>>, vector<16x512xf32>
    %97 = arith.truncf %89 : vector<16x128xf32> to vector<16x128xbf16>
    %c0_40 = arith.constant 0 : index
    %c0_41 = arith.constant 0 : index
    %98 = vector.load %arg3[%c0_40, %c0_41] : memref<128x512xbf16, #tpu.memory_space<vmem>>, vector<128x512xbf16>
    %cst_42 = arith.constant dense<0.000000e+00> : vector<16x512xf32>
    %99 = tpu.matmul %97, %98, %cst_42 {dimension_numbers = #tpu.dot_dimension_numbers<[1], [0], [0], [1], [0, 0, 1, 1], [], []>} : vector<16x128xbf16>, vector<128x512xbf16>, vector<16x512xf32> -> vector<16x512xf32>
    %100 = arith.addf %96, %99 : vector<16x512xf32>
    %101 = vector.extract_strided_slice %100 {offsets = [0, 0], sizes = [16, 128], strides = [1, 1]} : vector<16x512xf32> to vector<16x128xf32>
    %cst_43 = arith.constant 5.000000e-01 : f32
    %102 = vector.broadcast %cst_43 : f32 to vector<16x128xf32>
    %103 = arith.mulf %102, %101 : vector<16x128xf32>
    %104 = math.tanh %103 : vector<16x128xf32>
    %cst_44 = arith.constant 5.000000e-01 : f32
    %105 = vector.broadcast %cst_44 : f32 to vector<16x128xf32>
    %106 = arith.mulf %105, %104 : vector<16x128xf32>
    %cst_45 = arith.constant 5.000000e-01 : f32
    %107 = vector.broadcast %cst_45 : f32 to vector<16x128xf32>
    %108 = arith.addf %106, %107 : vector<16x128xf32>
    %109 = vector.extract_strided_slice %100 {offsets = [0, 128], sizes = [16, 128], strides = [1, 1]} : vector<16x512xf32> to vector<16x128xf32>
    %cst_46 = arith.constant 5.000000e-01 : f32
    %110 = vector.broadcast %cst_46 : f32 to vector<16x128xf32>
    %111 = arith.mulf %110, %109 : vector<16x128xf32>
    %112 = math.tanh %111 : vector<16x128xf32>
    %cst_47 = arith.constant 5.000000e-01 : f32
    %113 = vector.broadcast %cst_47 : f32 to vector<16x128xf32>
    %114 = arith.mulf %113, %112 : vector<16x128xf32>
    %cst_48 = arith.constant 5.000000e-01 : f32
    %115 = vector.broadcast %cst_48 : f32 to vector<16x128xf32>
    %116 = arith.addf %114, %115 : vector<16x128xf32>
    %117 = vector.extract_strided_slice %100 {offsets = [0, 256], sizes = [16, 128], strides = [1, 1]} : vector<16x512xf32> to vector<16x128xf32>
    %118 = math.tanh %117 : vector<16x128xf32>
    %119 = vector.extract_strided_slice %100 {offsets = [0, 384], sizes = [16, 128], strides = [1, 1]} : vector<16x512xf32> to vector<16x128xf32>
    %cst_49 = arith.constant 5.000000e-01 : f32
    %120 = vector.broadcast %cst_49 : f32 to vector<16x128xf32>
    %121 = arith.mulf %120, %119 : vector<16x128xf32>
    %122 = math.tanh %121 : vector<16x128xf32>
    %cst_50 = arith.constant 5.000000e-01 : f32
    %123 = vector.broadcast %cst_50 : f32 to vector<16x128xf32>
    %124 = arith.mulf %123, %122 : vector<16x128xf32>
    %cst_51 = arith.constant 5.000000e-01 : f32
    %125 = vector.broadcast %cst_51 : f32 to vector<16x128xf32>
    %126 = arith.addf %124, %125 : vector<16x128xf32>
    %127 = arith.mulf %116, %87 : vector<16x128xf32>
    %128 = arith.mulf %108, %118 : vector<16x128xf32>
    %129 = arith.addf %127, %128 : vector<16x128xf32>
    %130 = math.tanh %129 : vector<16x128xf32>
    %131 = arith.mulf %126, %130 : vector<16x128xf32>
    %132 = arith.truncf %131 : vector<16x128xf32> to vector<16x128xbf16>
    %133 = arith.index_cast %94 : i32 to index
    %c0_52 = arith.constant 0 : index
    %134 = vector.load %arg12[%133, %c0_52] : memref<128x128xbf16, #tpu.memory_space<vmem>>, vector<16x128xbf16>
    tpu.vector_store %arg12[%133, %c0_52], %132 {strides = array<i32>} : memref<128x128xbf16, #tpu.memory_space<vmem>>, vector<16x128xbf16>,
    %c3_i32 = arith.constant 3 : i32
    %c16_i32_53 = arith.constant 16 : i32
    %135 = arith.muli %c3_i32, %c16_i32_53 : i32
    %136 = tpu.assume_multiple %135, 16 : i32
    %137 = arith.index_cast %136 : i32 to index
    %c0_54 = arith.constant 0 : index
    %138 = vector.load %arg11[%137, %c0_54] : memref<128x512xf32, #tpu.memory_space<vmem>>, vector<16x512xf32>
    %139 = arith.truncf %131 : vector<16x128xf32> to vector<16x128xbf16>
    %c0_55 = arith.constant 0 : index
    %c0_56 = arith.constant 0 : index
    %140 = vector.load %arg3[%c0_55, %c0_56] : memref<128x512xbf16, #tpu.memory_space<vmem>>, vector<128x512xbf16>
    %cst_57 = arith.constant dense<0.000000e+00> : vector<16x512xf32>
    %141 = tpu.matmul %139, %140, %cst_57 {dimension_numbers = #tpu.dot_dimension_numbers<[1], [0], [0], [1], [0, 0, 1, 1], [], []>} : vector<16x128xbf16>, vector<128x512xbf16>, vector<16x512xf32> -> vector<16x512xf32>
    %142 = arith.addf %138, %141 : vector<16x512xf32>
    %143 = vector.extract_strided_slice %142 {offsets = [0, 0], sizes = [16, 128], strides = [1, 1]} : vector<16x512xf32> to vector<16x128xf32>
    %cst_58 = arith.constant 5.000000e-01 : f32
    %144 = vector.broadcast %cst_58 : f32 to vector<16x128xf32>
    %145 = arith.mulf %144, %143 : vector<16x128xf32>
    %146 = math.tanh %145 : vector<16x128xf32>
    %cst_59 = arith.constant 5.000000e-01 : f32
    %147 = vector.broadcast %cst_59 : f32 to vector<16x128xf32>
    %148 = arith.mulf %147, %146 : vector<16x128xf32>
    %cst_60 = arith.constant 5.000000e-01 : f32
    %149 = vector.broadcast %cst_60 : f32 to vector<16x128xf32>
    %150 = arith.addf %148, %149 : vector<16x128xf32>
    %151 = vector.extract_strided_slice %142 {offsets = [0, 128], sizes = [16, 128], strides = [1, 1]} : vector<16x512xf32> to vector<16x128xf32>
    %cst_61 = arith.constant 5.000000e-01 : f32
    %152 = vector.broadcast %cst_61 : f32 to vector<16x128xf32>
    %153 = arith.mulf %152, %151 : vector<16x128xf32>
    %154 = math.tanh %153 : vector<16x128xf32>
    %cst_62 = arith.constant 5.000000e-01 : f32
    %155 = vector.broadcast %cst_62 : f32 to vector<16x128xf32>
    %156 = arith.mulf %155, %154 : vector<16x128xf32>
    %cst_63 = arith.constant 5.000000e-01 : f32
    %157 = vector.broadcast %cst_63 : f32 to vector<16x128xf32>
    %158 = arith.addf %156, %157 : vector<16x128xf32>
    %159 = vector.extract_strided_slice %142 {offsets = [0, 256], sizes = [16, 128], strides = [1, 1]} : vector<16x512xf32> to vector<16x128xf32>
    %160 = math.tanh %159 : vector<16x128xf32>
    %161 = vector.extract_strided_slice %142 {offsets = [0, 384], sizes = [16, 128], strides = [1, 1]} : vector<16x512xf32> to vector<16x128xf32>
    %cst_64 = arith.constant 5.000000e-01 : f32
    %162 = vector.broadcast %cst_64 : f32 to vector<16x128xf32>
    %163 = arith.mulf %162, %161 : vector<16x128xf32>
    %164 = math.tanh %163 : vector<16x128xf32>
    %cst_65 = arith.constant 5.000000e-01 : f32
    %165 = vector.broadcast %cst_65 : f32 to vector<16x128xf32>
    %166 = arith.mulf %165, %164 : vector<16x128xf32>
    %cst_66 = arith.constant 5.000000e-01 : f32
    %167 = vector.broadcast %cst_66 : f32 to vector<16x128xf32>
    %168 = arith.addf %166, %167 : vector<16x128xf32>
    %169 = arith.mulf %158, %129 : vector<16x128xf32>
    %170 = arith.mulf %150, %160 : vector<16x128xf32>
    %171 = arith.addf %169, %170 : vector<16x128xf32>
    %172 = math.tanh %171 : vector<16x128xf32>
    %173 = arith.mulf %168, %172 : vector<16x128xf32>
    %174 = arith.truncf %173 : vector<16x128xf32> to vector<16x128xbf16>
    %175 = arith.index_cast %136 : i32 to index
    %c0_67 = arith.constant 0 : index
    %176 = vector.load %arg12[%175, %c0_67] : memref<128x128xbf16, #tpu.memory_space<vmem>>, vector<16x128xbf16>
    tpu.vector_store %arg12[%175, %c0_67], %174 {strides = array<i32>} : memref<128x128xbf16, #tpu.memory_space<vmem>>, vector<16x128xbf16>,
    %c4_i32 = arith.constant 4 : i32
    %c16_i32_68 = arith.constant 16 : i32
    %177 = arith.muli %c4_i32, %c16_i32_68 : i32
    %178 = tpu.assume_multiple %177, 16 : i32
    %179 = arith.index_cast %178 : i32 to index
    %c0_69 = arith.constant 0 : index
    %180 = vector.load %arg11[%179, %c0_69] : memref<128x512xf32, #tpu.memory_space<vmem>>, vector<16x512xf32>
    %181 = arith.truncf %173 : vector<16x128xf32> to vector<16x128xbf16>
    %c0_70 = arith.constant 0 : index
    %c0_71 = arith.constant 0 : index
    %182 = vector.load %arg3[%c0_70, %c0_71] : memref<128x512xbf16, #tpu.memory_space<vmem>>, vector<128x512xbf16>
    %cst_72 = arith.constant dense<0.000000e+00> : vector<16x512xf32>
    %183 = tpu.matmul %181, %182, %cst_72 {dimension_numbers = #tpu.dot_dimension_numbers<[1], [0], [0], [1], [0, 0, 1, 1], [], []>} : vector<16x128xbf16>, vector<128x512xbf16>, vector<16x512xf32> -> vector<16x512xf32>
    %184 = arith.addf %180, %183 : vector<16x512xf32>
    %185 = vector.extract_strided_slice %184 {offsets = [0, 0], sizes = [16, 128], strides = [1, 1]} : vector<16x512xf32> to vector<16x128xf32>
    %cst_73 = arith.constant 5.000000e-01 : f32
    %186 = vector.broadcast %cst_73 : f32 to vector<16x128xf32>
    %187 = arith.mulf %186, %185 : vector<16x128xf32>
    %188 = math.tanh %187 : vector<16x128xf32>
    %cst_74 = arith.constant 5.000000e-01 : f32
    %189 = vector.broadcast %cst_74 : f32 to vector<16x128xf32>
    %190 = arith.mulf %189, %188 : vector<16x128xf32>
    %cst_75 = arith.constant 5.000000e-01 : f32
    %191 = vector.broadcast %cst_75 : f32 to vector<16x128xf32>
    %192 = arith.addf %190, %191 : vector<16x128xf32>
    %193 = vector.extract_strided_slice %184 {offsets = [0, 128], sizes = [16, 128], strides = [1, 1]} : vector<16x512xf32> to vector<16x128xf32>
    %cst_76 = arith.constant 5.000000e-01 : f32
    %194 = vector.broadcast %cst_76 : f32 to vector<16x128xf32>
    %195 = arith.mulf %194, %193 : vector<16x128xf32>
    %196 = math.tanh %195 : vector<16x128xf32>
    %cst_77 = arith.constant 5.000000e-01 : f32
    %197 = vector.broadcast %cst_77 : f32 to vector<16x128xf32>
    %198 = arith.mulf %197, %196 : vector<16x128xf32>
    %cst_78 = arith.constant 5.000000e-01 : f32
    %199 = vector.broadcast %cst_78 : f32 to vector<16x128xf32>
    %200 = arith.addf %198, %199 : vector<16x128xf32>
    %201 = vector.extract_strided_slice %184 {offsets = [0, 256], sizes = [16, 128], strides = [1, 1]} : vector<16x512xf32> to vector<16x128xf32>
    %202 = math.tanh %201 : vector<16x128xf32>
    %203 = vector.extract_strided_slice %184 {offsets = [0, 384], sizes = [16, 128], strides = [1, 1]} : vector<16x512xf32> to vector<16x128xf32>
    %cst_79 = arith.constant 5.000000e-01 : f32
    %204 = vector.broadcast %cst_79 : f32 to vector<16x128xf32>
    %205 = arith.mulf %204, %203 : vector<16x128xf32>
    %206 = math.tanh %205 : vector<16x128xf32>
    %cst_80 = arith.constant 5.000000e-01 : f32
    %207 = vector.broadcast %cst_80 : f32 to vector<16x128xf32>
    %208 = arith.mulf %207, %206 : vector<16x128xf32>
    %cst_81 = arith.constant 5.000000e-01 : f32
    %209 = vector.broadcast %cst_81 : f32 to vector<16x128xf32>
    %210 = arith.addf %208, %209 : vector<16x128xf32>
    %211 = arith.mulf %200, %171 : vector<16x128xf32>
    %212 = arith.mulf %192, %202 : vector<16x128xf32>
    %213 = arith.addf %211, %212 : vector<16x128xf32>
    %214 = math.tanh %213 : vector<16x128xf32>
    %215 = arith.mulf %210, %214 : vector<16x128xf32>
    %216 = arith.truncf %215 : vector<16x128xf32> to vector<16x128xbf16>
    %217 = arith.index_cast %178 : i32 to index
    %c0_82 = arith.constant 0 : index
    %218 = vector.load %arg12[%217, %c0_82] : memref<128x128xbf16, #tpu.memory_space<vmem>>, vector<16x128xbf16>
    tpu.vector_store %arg12[%217, %c0_82], %216 {strides = array<i32>} : memref<128x128xbf16, #tpu.memory_space<vmem>>, vector<16x128xbf16>,
    %c5_i32 = arith.constant 5 : i32
    %c16_i32_83 = arith.constant 16 : i32
    %219 = arith.muli %c5_i32, %c16_i32_83 : i32
    %220 = tpu.assume_multiple %219, 16 : i32
    %221 = arith.index_cast %220 : i32 to index
    %c0_84 = arith.constant 0 : index
    %222 = vector.load %arg11[%221, %c0_84] : memref<128x512xf32, #tpu.memory_space<vmem>>, vector<16x512xf32>
    %223 = arith.truncf %215 : vector<16x128xf32> to vector<16x128xbf16>
    %c0_85 = arith.constant 0 : index
    %c0_86 = arith.constant 0 : index
    %224 = vector.load %arg3[%c0_85, %c0_86] : memref<128x512xbf16, #tpu.memory_space<vmem>>, vector<128x512xbf16>
    %cst_87 = arith.constant dense<0.000000e+00> : vector<16x512xf32>
    %225 = tpu.matmul %223, %224, %cst_87 {dimension_numbers = #tpu.dot_dimension_numbers<[1], [0], [0], [1], [0, 0, 1, 1], [], []>} : vector<16x128xbf16>, vector<128x512xbf16>, vector<16x512xf32> -> vector<16x512xf32>
    %226 = arith.addf %222, %225 : vector<16x512xf32>
    %227 = vector.extract_strided_slice %226 {offsets = [0, 0], sizes = [16, 128], strides = [1, 1]} : vector<16x512xf32> to vector<16x128xf32>
    %cst_88 = arith.constant 5.000000e-01 : f32
    %228 = vector.broadcast %cst_88 : f32 to vector<16x128xf32>
    %229 = arith.mulf %228, %227 : vector<16x128xf32>
    %230 = math.tanh %229 : vector<16x128xf32>
    %cst_89 = arith.constant 5.000000e-01 : f32
    %231 = vector.broadcast %cst_89 : f32 to vector<16x128xf32>
    %232 = arith.mulf %231, %230 : vector<16x128xf32>
    %cst_90 = arith.constant 5.000000e-01 : f32
    %233 = vector.broadcast %cst_90 : f32 to vector<16x128xf32>
    %234 = arith.addf %232, %233 : vector<16x128xf32>
    %235 = vector.extract_strided_slice %226 {offsets = [0, 128], sizes = [16, 128], strides = [1, 1]} : vector<16x512xf32> to vector<16x128xf32>
    %cst_91 = arith.constant 5.000000e-01 : f32
    %236 = vector.broadcast %cst_91 : f32 to vector<16x128xf32>
    %237 = arith.mulf %236, %235 : vector<16x128xf32>
    %238 = math.tanh %237 : vector<16x128xf32>
    %cst_92 = arith.constant 5.000000e-01 : f32
    %239 = vector.broadcast %cst_92 : f32 to vector<16x128xf32>
    %240 = arith.mulf %239, %238 : vector<16x128xf32>
    %cst_93 = arith.constant 5.000000e-01 : f32
    %241 = vector.broadcast %cst_93 : f32 to vector<16x128xf32>
    %242 = arith.addf %240, %241 : vector<16x128xf32>
    %243 = vector.extract_strided_slice %226 {offsets = [0, 256], sizes = [16, 128], strides = [1, 1]} : vector<16x512xf32> to vector<16x128xf32>
    %244 = math.tanh %243 : vector<16x128xf32>
    %245 = vector.extract_strided_slice %226 {offsets = [0, 384], sizes = [16, 128], strides = [1, 1]} : vector<16x512xf32> to vector<16x128xf32>
    %cst_94 = arith.constant 5.000000e-01 : f32
    %246 = vector.broadcast %cst_94 : f32 to vector<16x128xf32>
    %247 = arith.mulf %246, %245 : vector<16x128xf32>
    %248 = math.tanh %247 : vector<16x128xf32>
    %cst_95 = arith.constant 5.000000e-01 : f32
    %249 = vector.broadcast %cst_95 : f32 to vector<16x128xf32>
    %250 = arith.mulf %249, %248 : vector<16x128xf32>
    %cst_96 = arith.constant 5.000000e-01 : f32
    %251 = vector.broadcast %cst_96 : f32 to vector<16x128xf32>
    %252 = arith.addf %250, %251 : vector<16x128xf32>
    %253 = arith.mulf %242, %213 : vector<16x128xf32>
    %254 = arith.mulf %234, %244 : vector<16x128xf32>
    %255 = arith.addf %253, %254 : vector<16x128xf32>
    %256 = math.tanh %255 : vector<16x128xf32>
    %257 = arith.mulf %252, %256 : vector<16x128xf32>
    %258 = arith.truncf %257 : vector<16x128xf32> to vector<16x128xbf16>
    %259 = arith.index_cast %220 : i32 to index
    %c0_97 = arith.constant 0 : index
    %260 = vector.load %arg12[%259, %c0_97] : memref<128x128xbf16, #tpu.memory_space<vmem>>, vector<16x128xbf16>
    tpu.vector_store %arg12[%259, %c0_97], %258 {strides = array<i32>} : memref<128x128xbf16, #tpu.memory_space<vmem>>, vector<16x128xbf16>,
    %c6_i32 = arith.constant 6 : i32
    %c16_i32_98 = arith.constant 16 : i32
    %261 = arith.muli %c6_i32, %c16_i32_98 : i32
    %262 = tpu.assume_multiple %261, 16 : i32
    %263 = arith.index_cast %262 : i32 to index
    %c0_99 = arith.constant 0 : index
    %264 = vector.load %arg11[%263, %c0_99] : memref<128x512xf32, #tpu.memory_space<vmem>>, vector<16x512xf32>
    %265 = arith.truncf %257 : vector<16x128xf32> to vector<16x128xbf16>
    %c0_100 = arith.constant 0 : index
    %c0_101 = arith.constant 0 : index
    %266 = vector.load %arg3[%c0_100, %c0_101] : memref<128x512xbf16, #tpu.memory_space<vmem>>, vector<128x512xbf16>
    %cst_102 = arith.constant dense<0.000000e+00> : vector<16x512xf32>
    %267 = tpu.matmul %265, %266, %cst_102 {dimension_numbers = #tpu.dot_dimension_numbers<[1], [0], [0], [1], [0, 0, 1, 1], [], []>} : vector<16x128xbf16>, vector<128x512xbf16>, vector<16x512xf32> -> vector<16x512xf32>
    %268 = arith.addf %264, %267 : vector<16x512xf32>
    %269 = vector.extract_strided_slice %268 {offsets = [0, 0], sizes = [16, 128], strides = [1, 1]} : vector<16x512xf32> to vector<16x128xf32>
    %cst_103 = arith.constant 5.000000e-01 : f32
    %270 = vector.broadcast %cst_103 : f32 to vector<16x128xf32>
    %271 = arith.mulf %270, %269 : vector<16x128xf32>
    %272 = math.tanh %271 : vector<16x128xf32>
    %cst_104 = arith.constant 5.000000e-01 : f32
    %273 = vector.broadcast %cst_104 : f32 to vector<16x128xf32>
    %274 = arith.mulf %273, %272 : vector<16x128xf32>
    %cst_105 = arith.constant 5.000000e-01 : f32
    %275 = vector.broadcast %cst_105 : f32 to vector<16x128xf32>
    %276 = arith.addf %274, %275 : vector<16x128xf32>
    %277 = vector.extract_strided_slice %268 {offsets = [0, 128], sizes = [16, 128], strides = [1, 1]} : vector<16x512xf32> to vector<16x128xf32>
    %cst_106 = arith.constant 5.000000e-01 : f32
    %278 = vector.broadcast %cst_106 : f32 to vector<16x128xf32>
    %279 = arith.mulf %278, %277 : vector<16x128xf32>
    %280 = math.tanh %279 : vector<16x128xf32>
    %cst_107 = arith.constant 5.000000e-01 : f32
    %281 = vector.broadcast %cst_107 : f32 to vector<16x128xf32>
    %282 = arith.mulf %281, %280 : vector<16x128xf32>
    %cst_108 = arith.constant 5.000000e-01 : f32
    %283 = vector.broadcast %cst_108 : f32 to vector<16x128xf32>
    %284 = arith.addf %282, %283 : vector<16x128xf32>
    %285 = vector.extract_strided_slice %268 {offsets = [0, 256], sizes = [16, 128], strides = [1, 1]} : vector<16x512xf32> to vector<16x128xf32>
    %286 = math.tanh %285 : vector<16x128xf32>
    %287 = vector.extract_strided_slice %268 {offsets = [0, 384], sizes = [16, 128], strides = [1, 1]} : vector<16x512xf32> to vector<16x128xf32>
    %cst_109 = arith.constant 5.000000e-01 : f32
    %288 = vector.broadcast %cst_109 : f32 to vector<16x128xf32>
    %289 = arith.mulf %288, %287 : vector<16x128xf32>
    %290 = math.tanh %289 : vector<16x128xf32>
    %cst_110 = arith.constant 5.000000e-01 : f32
    %291 = vector.broadcast %cst_110 : f32 to vector<16x128xf32>
    %292 = arith.mulf %291, %290 : vector<16x128xf32>
    %cst_111 = arith.constant 5.000000e-01 : f32
    %293 = vector.broadcast %cst_111 : f32 to vector<16x128xf32>
    %294 = arith.addf %292, %293 : vector<16x128xf32>
    %295 = arith.mulf %284, %255 : vector<16x128xf32>
    %296 = arith.mulf %276, %286 : vector<16x128xf32>
    %297 = arith.addf %295, %296 : vector<16x128xf32>
    %298 = math.tanh %297 : vector<16x128xf32>
    %299 = arith.mulf %294, %298 : vector<16x128xf32>
    %300 = arith.truncf %299 : vector<16x128xf32> to vector<16x128xbf16>
    %301 = arith.index_cast %262 : i32 to index
    %c0_112 = arith.constant 0 : index
    %302 = vector.load %arg12[%301, %c0_112] : memref<128x128xbf16, #tpu.memory_space<vmem>>, vector<16x128xbf16>
    tpu.vector_store %arg12[%301, %c0_112], %300 {strides = array<i32>} : memref<128x128xbf16, #tpu.memory_space<vmem>>, vector<16x128xbf16>,
    %c7_i32 = arith.constant 7 : i32
    %c16_i32_113 = arith.constant 16 : i32
    %303 = arith.muli %c7_i32, %c16_i32_113 : i32
    %304 = tpu.assume_multiple %303, 16 : i32
    %305 = arith.index_cast %304 : i32 to index
    %c0_114 = arith.constant 0 : index
    %306 = vector.load %arg11[%305, %c0_114] : memref<128x512xf32, #tpu.memory_space<vmem>>, vector<16x512xf32>
    %307 = arith.truncf %299 : vector<16x128xf32> to vector<16x128xbf16>
    %c0_115 = arith.constant 0 : index
    %c0_116 = arith.constant 0 : index
    %308 = vector.load %arg3[%c0_115, %c0_116] : memref<128x512xbf16, #tpu.memory_space<vmem>>, vector<128x512xbf16>
    %cst_117 = arith.constant dense<0.000000e+00> : vector<16x512xf32>
    %309 = tpu.matmul %307, %308, %cst_117 {dimension_numbers = #tpu.dot_dimension_numbers<[1], [0], [0], [1], [0, 0, 1, 1], [], []>} : vector<16x128xbf16>, vector<128x512xbf16>, vector<16x512xf32> -> vector<16x512xf32>
    %310 = arith.addf %306, %309 : vector<16x512xf32>
    %311 = vector.extract_strided_slice %310 {offsets = [0, 0], sizes = [16, 128], strides = [1, 1]} : vector<16x512xf32> to vector<16x128xf32>
    %cst_118 = arith.constant 5.000000e-01 : f32
    %312 = vector.broadcast %cst_118 : f32 to vector<16x128xf32>
    %313 = arith.mulf %312, %311 : vector<16x128xf32>
    %314 = math.tanh %313 : vector<16x128xf32>
    %cst_119 = arith.constant 5.000000e-01 : f32
    %315 = vector.broadcast %cst_119 : f32 to vector<16x128xf32>
    %316 = arith.mulf %315, %314 : vector<16x128xf32>
    %cst_120 = arith.constant 5.000000e-01 : f32
    %317 = vector.broadcast %cst_120 : f32 to vector<16x128xf32>
    %318 = arith.addf %316, %317 : vector<16x128xf32>
    %319 = vector.extract_strided_slice %310 {offsets = [0, 128], sizes = [16, 128], strides = [1, 1]} : vector<16x512xf32> to vector<16x128xf32>
    %cst_121 = arith.constant 5.000000e-01 : f32
    %320 = vector.broadcast %cst_121 : f32 to vector<16x128xf32>
    %321 = arith.mulf %320, %319 : vector<16x128xf32>
    %322 = math.tanh %321 : vector<16x128xf32>
    %cst_122 = arith.constant 5.000000e-01 : f32
    %323 = vector.broadcast %cst_122 : f32 to vector<16x128xf32>
    %324 = arith.mulf %323, %322 : vector<16x128xf32>
    %cst_123 = arith.constant 5.000000e-01 : f32
    %325 = vector.broadcast %cst_123 : f32 to vector<16x128xf32>
    %326 = arith.addf %324, %325 : vector<16x128xf32>
    %327 = vector.extract_strided_slice %310 {offsets = [0, 256], sizes = [16, 128], strides = [1, 1]} : vector<16x512xf32> to vector<16x128xf32>
    %328 = math.tanh %327 : vector<16x128xf32>
    %329 = vector.extract_strided_slice %310 {offsets = [0, 384], sizes = [16, 128], strides = [1, 1]} : vector<16x512xf32> to vector<16x128xf32>
    %cst_124 = arith.constant 5.000000e-01 : f32
    %330 = vector.broadcast %cst_124 : f32 to vector<16x128xf32>
    %331 = arith.mulf %330, %329 : vector<16x128xf32>
    %332 = math.tanh %331 : vector<16x128xf32>
    %cst_125 = arith.constant 5.000000e-01 : f32
    %333 = vector.broadcast %cst_125 : f32 to vector<16x128xf32>
    %334 = arith.mulf %333, %332 : vector<16x128xf32>
    %cst_126 = arith.constant 5.000000e-01 : f32
    %335 = vector.broadcast %cst_126 : f32 to vector<16x128xf32>
    %336 = arith.addf %334, %335 : vector<16x128xf32>
    %337 = arith.mulf %326, %297 : vector<16x128xf32>
    %338 = arith.mulf %318, %328 : vector<16x128xf32>
    %339 = arith.addf %337, %338 : vector<16x128xf32>
    %340 = math.tanh %339 : vector<16x128xf32>
    %341 = arith.mulf %336, %340 : vector<16x128xf32>
    %342 = arith.truncf %341 : vector<16x128xf32> to vector<16x128xbf16>
    %343 = arith.index_cast %304 : i32 to index
    %c0_127 = arith.constant 0 : index
    %344 = vector.load %arg12[%343, %c0_127] : memref<128x128xbf16, #tpu.memory_space<vmem>>, vector<16x128xbf16>
    tpu.vector_store %arg12[%343, %c0_127], %342 {strides = array<i32>} : memref<128x128xbf16, #tpu.memory_space<vmem>>, vector<16x128xbf16>,
    %c8_i32 = arith.constant 8 : i32
    %c0_128 = arith.constant 0 : index
    %c0_129 = arith.constant 0 : index
    %345 = vector.load %arg12[%c0_128, %c0_129] : memref<128x128xbf16, #tpu.memory_space<vmem>>, vector<128x128xbf16>
    %c0_130 = arith.constant 0 : index
    %c0_131 = arith.constant 0 : index
    %346 = vector.load %arg5[%c0_130, %c0_131] : memref<128x512xbf16, #tpu.memory_space<vmem>>, vector<128x512xbf16>
    %cst_132 = arith.constant dense<0.000000e+00> : vector<128x512xf32>
    %347 = tpu.matmul %345, %346, %cst_132 {dimension_numbers = #tpu.dot_dimension_numbers<[1], [0], [0], [1], [0, 0, 1, 1], [], []>} : vector<128x128xbf16>, vector<128x512xbf16>, vector<128x512xf32> -> vector<128x512xf32>
    %c0_133 = arith.constant 0 : index
    %c0_134 = arith.constant 0 : index
    %348 = vector.load %arg7[%c0_133, %c0_134] : memref<1x512xf32, #tpu.memory_space<vmem>>, vector<1x512xf32>
    %349 = vector.broadcast %348 : vector<1x512xf32> to vector<128x512xf32>
    %350 = arith.addf %347, %349 : vector<128x512xf32>
    %c0_135 = arith.constant 0 : index
    %c0_136 = arith.constant 0 : index
    %351 = vector.load %arg11[%c0_135, %c0_136] : memref<128x512xf32, #tpu.memory_space<vmem>>, vector<128x512xf32>
    tpu.vector_store %arg11[%c0_135, %c0_136], %350 {strides = array<i32>} : memref<128x512xf32, #tpu.memory_space<vmem>>, vector<128x512xf32>,
    %cst_137 = arith.constant 0.000000e+00 : f32
    %352 = vector.broadcast %cst_137 : f32 to vector<16x128xf32>
    %cst_138 = arith.constant 0.000000e+00 : f32
    %353 = vector.broadcast %cst_138 : f32 to vector<16x128xf32>
    %c0_i32_139 = arith.constant 0 : i32
    %c16_i32_140 = arith.constant 16 : i32
    %354 = arith.muli %c0_i32_139, %c16_i32_140 : i32
    %355 = tpu.assume_multiple %354, 16 : i32
    %356 = arith.index_cast %355 : i32 to index
    %c0_141 = arith.constant 0 : index
    %357 = vector.load %arg11[%356, %c0_141] : memref<128x512xf32, #tpu.memory_space<vmem>>, vector<16x512xf32>
    %358 = arith.truncf %352 : vector<16x128xf32> to vector<16x128xbf16>
    %c0_142 = arith.constant 0 : index
    %c0_143 = arith.constant 0 : index
    %359 = vector.load %arg6[%c0_142, %c0_143] : memref<128x512xbf16, #tpu.memory_space<vmem>>, vector<128x512xbf16>
    %cst_144 = arith.constant dense<0.000000e+00> : vector<16x512xf32>
    %360 = tpu.matmul %358, %359, %cst_144 {dimension_numbers = #tpu.dot_dimension_numbers<[1], [0], [0], [1], [0, 0, 1, 1], [], []>} : vector<16x128xbf16>, vector<128x512xbf16>, vector<16x512xf32> -> vector<16x512xf32>
    %361 = arith.addf %357, %360 : vector<16x512xf32>
    %362 = vector.extract_strided_slice %361 {offsets = [0, 0], sizes = [16, 128], strides = [1, 1]} : vector<16x512xf32> to vector<16x128xf32>
    %cst_145 = arith.constant 5.000000e-01 : f32
    %363 = vector.broadcast %cst_145 : f32 to vector<16x128xf32>
    %364 = arith.mulf %363, %362 : vector<16x128xf32>
    %365 = math.tanh %364 : vector<16x128xf32>
    %cst_146 = arith.constant 5.000000e-01 : f32
    %366 = vector.broadcast %cst_146 : f32 to vector<16x128xf32>
    %367 = arith.mulf %366, %365 : vector<16x128xf32>
    %cst_147 = arith.constant 5.000000e-01 : f32
    %368 = vector.broadcast %cst_147 : f32 to vector<16x128xf32>
    %369 = arith.addf %367, %368 : vector<16x128xf32>
    %370 = vector.extract_strided_slice %361 {offsets = [0, 128], sizes = [16, 128], strides = [1, 1]} : vector<16x512xf32> to vector<16x128xf32>
    %cst_148 = arith.constant 5.000000e-01 : f32
    %371 = vector.broadcast %cst_148 : f32 to vector<16x128xf32>
    %372 = arith.mulf %371, %370 : vector<16x128xf32>
    %373 = math.tanh %372 : vector<16x128xf32>
    %cst_149 = arith.constant 5.000000e-01 : f32
    %374 = vector.broadcast %cst_149 : f32 to vector<16x128xf32>
    %375 = arith.mulf %374, %373 : vector<16x128xf32>
    %cst_150 = arith.constant 5.000000e-01 : f32
    %376 = vector.broadcast %cst_150 : f32 to vector<16x128xf32>
    %377 = arith.addf %375, %376 : vector<16x128xf32>
    %378 = vector.extract_strided_slice %361 {offsets = [0, 256], sizes = [16, 128], strides = [1, 1]} : vector<16x512xf32> to vector<16x128xf32>
    %379 = math.tanh %378 : vector<16x128xf32>
    %380 = vector.extract_strided_slice %361 {offsets = [0, 384], sizes = [16, 128], strides = [1, 1]} : vector<16x512xf32> to vector<16x128xf32>
    %cst_151 = arith.constant 5.000000e-01 : f32
    %381 = vector.broadcast %cst_151 : f32 to vector<16x128xf32>
    %382 = arith.mulf %381, %380 : vector<16x128xf32>
    %383 = math.tanh %382 : vector<16x128xf32>
    %cst_152 = arith.constant 5.000000e-01 : f32
    %384 = vector.broadcast %cst_152 : f32 to vector<16x128xf32>
    %385 = arith.mulf %384, %383 : vector<16x128xf32>
    %cst_153 = arith.constant 5.000000e-01 : f32
    %386 = vector.broadcast %cst_153 : f32 to vector<16x128xf32>
    %387 = arith.addf %385, %386 : vector<16x128xf32>
    %388 = arith.mulf %377, %353 : vector<16x128xf32>
    %389 = arith.mulf %369, %379 : vector<16x128xf32>
    %390 = arith.addf %388, %389 : vector<16x128xf32>
    %391 = math.tanh %390 : vector<16x128xf32>
    %392 = arith.mulf %387, %391 : vector<16x128xf32>
    %c1_i32_154 = arith.constant 1 : i32
    %c16_i32_155 = arith.constant 16 : i32
    %393 = arith.muli %c1_i32_154, %c16_i32_155 : i32
    %394 = tpu.assume_multiple %393, 16 : i32
    %395 = arith.index_cast %394 : i32 to index
    %c0_156 = arith.constant 0 : index
    %396 = vector.load %arg11[%395, %c0_156] : memref<128x512xf32, #tpu.memory_space<vmem>>, vector<16x512xf32>
    %397 = arith.truncf %392 : vector<16x128xf32> to vector<16x128xbf16>
    %c0_157 = arith.constant 0 : index
    %c0_158 = arith.constant 0 : index
    %398 = vector.load %arg6[%c0_157, %c0_158] : memref<128x512xbf16, #tpu.memory_space<vmem>>, vector<128x512xbf16>
    %cst_159 = arith.constant dense<0.000000e+00> : vector<16x512xf32>
    %399 = tpu.matmul %397, %398, %cst_159 {dimension_numbers = #tpu.dot_dimension_numbers<[1], [0], [0], [1], [0, 0, 1, 1], [], []>} : vector<16x128xbf16>, vector<128x512xbf16>, vector<16x512xf32> -> vector<16x512xf32>
    %400 = arith.addf %396, %399 : vector<16x512xf32>
    %401 = vector.extract_strided_slice %400 {offsets = [0, 0], sizes = [16, 128], strides = [1, 1]} : vector<16x512xf32> to vector<16x128xf32>
    %cst_160 = arith.constant 5.000000e-01 : f32
    %402 = vector.broadcast %cst_160 : f32 to vector<16x128xf32>
    %403 = arith.mulf %402, %401 : vector<16x128xf32>
    %404 = math.tanh %403 : vector<16x128xf32>
    %cst_161 = arith.constant 5.000000e-01 : f32
    %405 = vector.broadcast %cst_161 : f32 to vector<16x128xf32>
    %406 = arith.mulf %405, %404 : vector<16x128xf32>
    %cst_162 = arith.constant 5.000000e-01 : f32
    %407 = vector.broadcast %cst_162 : f32 to vector<16x128xf32>
    %408 = arith.addf %406, %407 : vector<16x128xf32>
    %409 = vector.extract_strided_slice %400 {offsets = [0, 128], sizes = [16, 128], strides = [1, 1]} : vector<16x512xf32> to vector<16x128xf32>
    %cst_163 = arith.constant 5.000000e-01 : f32
    %410 = vector.broadcast %cst_163 : f32 to vector<16x128xf32>
    %411 = arith.mulf %410, %409 : vector<16x128xf32>
    %412 = math.tanh %411 : vector<16x128xf32>
    %cst_164 = arith.constant 5.000000e-01 : f32
    %413 = vector.broadcast %cst_164 : f32 to vector<16x128xf32>
    %414 = arith.mulf %413, %412 : vector<16x128xf32>
    %cst_165 = arith.constant 5.000000e-01 : f32
    %415 = vector.broadcast %cst_165 : f32 to vector<16x128xf32>
    %416 = arith.addf %414, %415 : vector<16x128xf32>
    %417 = vector.extract_strided_slice %400 {offsets = [0, 256], sizes = [16, 128], strides = [1, 1]} : vector<16x512xf32> to vector<16x128xf32>
    %418 = math.tanh %417 : vector<16x128xf32>
    %419 = vector.extract_strided_slice %400 {offsets = [0, 384], sizes = [16, 128], strides = [1, 1]} : vector<16x512xf32> to vector<16x128xf32>
    %cst_166 = arith.constant 5.000000e-01 : f32
    %420 = vector.broadcast %cst_166 : f32 to vector<16x128xf32>
    %421 = arith.mulf %420, %419 : vector<16x128xf32>
    %422 = math.tanh %421 : vector<16x128xf32>
    %cst_167 = arith.constant 5.000000e-01 : f32
    %423 = vector.broadcast %cst_167 : f32 to vector<16x128xf32>
    %424 = arith.mulf %423, %422 : vector<16x128xf32>
    %cst_168 = arith.constant 5.000000e-01 : f32
    %425 = vector.broadcast %cst_168 : f32 to vector<16x128xf32>
    %426 = arith.addf %424, %425 : vector<16x128xf32>
    %427 = arith.mulf %416, %390 : vector<16x128xf32>
    %428 = arith.mulf %408, %418 : vector<16x128xf32>
    %429 = arith.addf %427, %428 : vector<16x128xf32>
    %430 = math.tanh %429 : vector<16x128xf32>
    %431 = arith.mulf %426, %430 : vector<16x128xf32>
    %c2_i32_169 = arith.constant 2 : i32
    %c16_i32_170 = arith.constant 16 : i32
    %432 = arith.muli %c2_i32_169, %c16_i32_170 : i32
    %433 = tpu.assume_multiple %432, 16 : i32
    %434 = arith.index_cast %433 : i32 to index
    %c0_171 = arith.constant 0 : index
    %435 = vector.load %arg11[%434, %c0_171] : memref<128x512xf32, #tpu.memory_space<vmem>>, vector<16x512xf32>
    %436 = arith.truncf %431 : vector<16x128xf32> to vector<16x128xbf16>
    %c0_172 = arith.constant 0 : index
    %c0_173 = arith.constant 0 : index
    %437 = vector.load %arg6[%c0_172, %c0_173] : memref<128x512xbf16, #tpu.memory_space<vmem>>, vector<128x512xbf16>
    %cst_174 = arith.constant dense<0.000000e+00> : vector<16x512xf32>
    %438 = tpu.matmul %436, %437, %cst_174 {dimension_numbers = #tpu.dot_dimension_numbers<[1], [0], [0], [1], [0, 0, 1, 1], [], []>} : vector<16x128xbf16>, vector<128x512xbf16>, vector<16x512xf32> -> vector<16x512xf32>
    %439 = arith.addf %435, %438 : vector<16x512xf32>
    %440 = vector.extract_strided_slice %439 {offsets = [0, 0], sizes = [16, 128], strides = [1, 1]} : vector<16x512xf32> to vector<16x128xf32>
    %cst_175 = arith.constant 5.000000e-01 : f32
    %441 = vector.broadcast %cst_175 : f32 to vector<16x128xf32>
    %442 = arith.mulf %441, %440 : vector<16x128xf32>
    %443 = math.tanh %442 : vector<16x128xf32>
    %cst_176 = arith.constant 5.000000e-01 : f32
    %444 = vector.broadcast %cst_176 : f32 to vector<16x128xf32>
    %445 = arith.mulf %444, %443 : vector<16x128xf32>
    %cst_177 = arith.constant 5.000000e-01 : f32
    %446 = vector.broadcast %cst_177 : f32 to vector<16x128xf32>
    %447 = arith.addf %445, %446 : vector<16x128xf32>
    %448 = vector.extract_strided_slice %439 {offsets = [0, 128], sizes = [16, 128], strides = [1, 1]} : vector<16x512xf32> to vector<16x128xf32>
    %cst_178 = arith.constant 5.000000e-01 : f32
    %449 = vector.broadcast %cst_178 : f32 to vector<16x128xf32>
    %450 = arith.mulf %449, %448 : vector<16x128xf32>
    %451 = math.tanh %450 : vector<16x128xf32>
    %cst_179 = arith.constant 5.000000e-01 : f32
    %452 = vector.broadcast %cst_179 : f32 to vector<16x128xf32>
    %453 = arith.mulf %452, %451 : vector<16x128xf32>
    %cst_180 = arith.constant 5.000000e-01 : f32
    %454 = vector.broadcast %cst_180 : f32 to vector<16x128xf32>
    %455 = arith.addf %453, %454 : vector<16x128xf32>
    %456 = vector.extract_strided_slice %439 {offsets = [0, 256], sizes = [16, 128], strides = [1, 1]} : vector<16x512xf32> to vector<16x128xf32>
    %457 = math.tanh %456 : vector<16x128xf32>
    %458 = vector.extract_strided_slice %439 {offsets = [0, 384], sizes = [16, 128], strides = [1, 1]} : vector<16x512xf32> to vector<16x128xf32>
    %cst_181 = arith.constant 5.000000e-01 : f32
    %459 = vector.broadcast %cst_181 : f32 to vector<16x128xf32>
    %460 = arith.mulf %459, %458 : vector<16x128xf32>
    %461 = math.tanh %460 : vector<16x128xf32>
    %cst_182 = arith.constant 5.000000e-01 : f32
    %462 = vector.broadcast %cst_182 : f32 to vector<16x128xf32>
    %463 = arith.mulf %462, %461 : vector<16x128xf32>
    %cst_183 = arith.constant 5.000000e-01 : f32
    %464 = vector.broadcast %cst_183 : f32 to vector<16x128xf32>
    %465 = arith.addf %463, %464 : vector<16x128xf32>
    %466 = arith.mulf %455, %429 : vector<16x128xf32>
    %467 = arith.mulf %447, %457 : vector<16x128xf32>
    %468 = arith.addf %466, %467 : vector<16x128xf32>
    %469 = math.tanh %468 : vector<16x128xf32>
    %470 = arith.mulf %465, %469 : vector<16x128xf32>
    %c3_i32_184 = arith.constant 3 : i32
    %c16_i32_185 = arith.constant 16 : i32
    %471 = arith.muli %c3_i32_184, %c16_i32_185 : i32
    %472 = tpu.assume_multiple %471, 16 : i32
    %473 = arith.index_cast %472 : i32 to index
    %c0_186 = arith.constant 0 : index
    %474 = vector.load %arg11[%473, %c0_186] : memref<128x512xf32, #tpu.memory_space<vmem>>, vector<16x512xf32>
    %475 = arith.truncf %470 : vector<16x128xf32> to vector<16x128xbf16>
    %c0_187 = arith.constant 0 : index
    %c0_188 = arith.constant 0 : index
    %476 = vector.load %arg6[%c0_187, %c0_188] : memref<128x512xbf16, #tpu.memory_space<vmem>>, vector<128x512xbf16>
    %cst_189 = arith.constant dense<0.000000e+00> : vector<16x512xf32>
    %477 = tpu.matmul %475, %476, %cst_189 {dimension_numbers = #tpu.dot_dimension_numbers<[1], [0], [0], [1], [0, 0, 1, 1], [], []>} : vector<16x128xbf16>, vector<128x512xbf16>, vector<16x512xf32> -> vector<16x512xf32>
    %478 = arith.addf %474, %477 : vector<16x512xf32>
    %479 = vector.extract_strided_slice %478 {offsets = [0, 0], sizes = [16, 128], strides = [1, 1]} : vector<16x512xf32> to vector<16x128xf32>
    %cst_190 = arith.constant 5.000000e-01 : f32
    %480 = vector.broadcast %cst_190 : f32 to vector<16x128xf32>
    %481 = arith.mulf %480, %479 : vector<16x128xf32>
    %482 = math.tanh %481 : vector<16x128xf32>
    %cst_191 = arith.constant 5.000000e-01 : f32
    %483 = vector.broadcast %cst_191 : f32 to vector<16x128xf32>
    %484 = arith.mulf %483, %482 : vector<16x128xf32>
    %cst_192 = arith.constant 5.000000e-01 : f32
    %485 = vector.broadcast %cst_192 : f32 to vector<16x128xf32>
    %486 = arith.addf %484, %485 : vector<16x128xf32>
    %487 = vector.extract_strided_slice %478 {offsets = [0, 128], sizes = [16, 128], strides = [1, 1]} : vector<16x512xf32> to vector<16x128xf32>
    %cst_193 = arith.constant 5.000000e-01 : f32
    %488 = vector.broadcast %cst_193 : f32 to vector<16x128xf32>
    %489 = arith.mulf %488, %487 : vector<16x128xf32>
    %490 = math.tanh %489 : vector<16x128xf32>
    %cst_194 = arith.constant 5.000000e-01 : f32
    %491 = vector.broadcast %cst_194 : f32 to vector<16x128xf32>
    %492 = arith.mulf %491, %490 : vector<16x128xf32>
    %cst_195 = arith.constant 5.000000e-01 : f32
    %493 = vector.broadcast %cst_195 : f32 to vector<16x128xf32>
    %494 = arith.addf %492, %493 : vector<16x128xf32>
    %495 = vector.extract_strided_slice %478 {offsets = [0, 256], sizes = [16, 128], strides = [1, 1]} : vector<16x512xf32> to vector<16x128xf32>
    %496 = math.tanh %495 : vector<16x128xf32>
    %497 = vector.extract_strided_slice %478 {offsets = [0, 384], sizes = [16, 128], strides = [1, 1]} : vector<16x512xf32> to vector<16x128xf32>
    %cst_196 = arith.constant 5.000000e-01 : f32
    %498 = vector.broadcast %cst_196 : f32 to vector<16x128xf32>
    %499 = arith.mulf %498, %497 : vector<16x128xf32>
    %500 = math.tanh %499 : vector<16x128xf32>
    %cst_197 = arith.constant 5.000000e-01 : f32
    %501 = vector.broadcast %cst_197 : f32 to vector<16x128xf32>
    %502 = arith.mulf %501, %500 : vector<16x128xf32>
    %cst_198 = arith.constant 5.000000e-01 : f32
    %503 = vector.broadcast %cst_198 : f32 to vector<16x128xf32>
    %504 = arith.addf %502, %503 : vector<16x128xf32>
    %505 = arith.mulf %494, %468 : vector<16x128xf32>
    %506 = arith.mulf %486, %496 : vector<16x128xf32>
    %507 = arith.addf %505, %506 : vector<16x128xf32>
    %508 = math.tanh %507 : vector<16x128xf32>
    %509 = arith.mulf %504, %508 : vector<16x128xf32>
    %c4_i32_199 = arith.constant 4 : i32
    %c16_i32_200 = arith.constant 16 : i32
    %510 = arith.muli %c4_i32_199, %c16_i32_200 : i32
    %511 = tpu.assume_multiple %510, 16 : i32
    %512 = arith.index_cast %511 : i32 to index
    %c0_201 = arith.constant 0 : index
    %513 = vector.load %arg11[%512, %c0_201] : memref<128x512xf32, #tpu.memory_space<vmem>>, vector<16x512xf32>
    %514 = arith.truncf %509 : vector<16x128xf32> to vector<16x128xbf16>
    %c0_202 = arith.constant 0 : index
    %c0_203 = arith.constant 0 : index
    %515 = vector.load %arg6[%c0_202, %c0_203] : memref<128x512xbf16, #tpu.memory_space<vmem>>, vector<128x512xbf16>
    %cst_204 = arith.constant dense<0.000000e+00> : vector<16x512xf32>
    %516 = tpu.matmul %514, %515, %cst_204 {dimension_numbers = #tpu.dot_dimension_numbers<[1], [0], [0], [1], [0, 0, 1, 1], [], []>} : vector<16x128xbf16>, vector<128x512xbf16>, vector<16x512xf32> -> vector<16x512xf32>
    %517 = arith.addf %513, %516 : vector<16x512xf32>
    %518 = vector.extract_strided_slice %517 {offsets = [0, 0], sizes = [16, 128], strides = [1, 1]} : vector<16x512xf32> to vector<16x128xf32>
    %cst_205 = arith.constant 5.000000e-01 : f32
    %519 = vector.broadcast %cst_205 : f32 to vector<16x128xf32>
    %520 = arith.mulf %519, %518 : vector<16x128xf32>
    %521 = math.tanh %520 : vector<16x128xf32>
    %cst_206 = arith.constant 5.000000e-01 : f32
    %522 = vector.broadcast %cst_206 : f32 to vector<16x128xf32>
    %523 = arith.mulf %522, %521 : vector<16x128xf32>
    %cst_207 = arith.constant 5.000000e-01 : f32
    %524 = vector.broadcast %cst_207 : f32 to vector<16x128xf32>
    %525 = arith.addf %523, %524 : vector<16x128xf32>
    %526 = vector.extract_strided_slice %517 {offsets = [0, 128], sizes = [16, 128], strides = [1, 1]} : vector<16x512xf32> to vector<16x128xf32>
    %cst_208 = arith.constant 5.000000e-01 : f32
    %527 = vector.broadcast %cst_208 : f32 to vector<16x128xf32>
    %528 = arith.mulf %527, %526 : vector<16x128xf32>
    %529 = math.tanh %528 : vector<16x128xf32>
    %cst_209 = arith.constant 5.000000e-01 : f32
    %530 = vector.broadcast %cst_209 : f32 to vector<16x128xf32>
    %531 = arith.mulf %530, %529 : vector<16x128xf32>
    %cst_210 = arith.constant 5.000000e-01 : f32
    %532 = vector.broadcast %cst_210 : f32 to vector<16x128xf32>
    %533 = arith.addf %531, %532 : vector<16x128xf32>
    %534 = vector.extract_strided_slice %517 {offsets = [0, 256], sizes = [16, 128], strides = [1, 1]} : vector<16x512xf32> to vector<16x128xf32>
    %535 = math.tanh %534 : vector<16x128xf32>
    %536 = vector.extract_strided_slice %517 {offsets = [0, 384], sizes = [16, 128], strides = [1, 1]} : vector<16x512xf32> to vector<16x128xf32>
    %cst_211 = arith.constant 5.000000e-01 : f32
    %537 = vector.broadcast %cst_211 : f32 to vector<16x128xf32>
    %538 = arith.mulf %537, %536 : vector<16x128xf32>
    %539 = math.tanh %538 : vector<16x128xf32>
    %cst_212 = arith.constant 5.000000e-01 : f32
    %540 = vector.broadcast %cst_212 : f32 to vector<16x128xf32>
    %541 = arith.mulf %540, %539 : vector<16x128xf32>
    %cst_213 = arith.constant 5.000000e-01 : f32
    %542 = vector.broadcast %cst_213 : f32 to vector<16x128xf32>
    %543 = arith.addf %541, %542 : vector<16x128xf32>
    %544 = arith.mulf %533, %507 : vector<16x128xf32>
    %545 = arith.mulf %525, %535 : vector<16x128xf32>
    %546 = arith.addf %544, %545 : vector<16x128xf32>
    %547 = math.tanh %546 : vector<16x128xf32>
    %548 = arith.mulf %543, %547 : vector<16x128xf32>
    %c5_i32_214 = arith.constant 5 : i32
    %c16_i32_215 = arith.constant 16 : i32
    %549 = arith.muli %c5_i32_214, %c16_i32_215 : i32
    %550 = tpu.assume_multiple %549, 16 : i32
    %551 = arith.index_cast %550 : i32 to index
    %c0_216 = arith.constant 0 : index
    %552 = vector.load %arg11[%551, %c0_216] : memref<128x512xf32, #tpu.memory_space<vmem>>, vector<16x512xf32>
    %553 = arith.truncf %548 : vector<16x128xf32> to vector<16x128xbf16>
    %c0_217 = arith.constant 0 : index
    %c0_218 = arith.constant 0 : index
    %554 = vector.load %arg6[%c0_217, %c0_218] : memref<128x512xbf16, #tpu.memory_space<vmem>>, vector<128x512xbf16>
    %cst_219 = arith.constant dense<0.000000e+00> : vector<16x512xf32>
    %555 = tpu.matmul %553, %554, %cst_219 {dimension_numbers = #tpu.dot_dimension_numbers<[1], [0], [0], [1], [0, 0, 1, 1], [], []>} : vector<16x128xbf16>, vector<128x512xbf16>, vector<16x512xf32> -> vector<16x512xf32>
    %556 = arith.addf %552, %555 : vector<16x512xf32>
    %557 = vector.extract_strided_slice %556 {offsets = [0, 0], sizes = [16, 128], strides = [1, 1]} : vector<16x512xf32> to vector<16x128xf32>
    %cst_220 = arith.constant 5.000000e-01 : f32
    %558 = vector.broadcast %cst_220 : f32 to vector<16x128xf32>
    %559 = arith.mulf %558, %557 : vector<16x128xf32>
    %560 = math.tanh %559 : vector<16x128xf32>
    %cst_221 = arith.constant 5.000000e-01 : f32
    %561 = vector.broadcast %cst_221 : f32 to vector<16x128xf32>
    %562 = arith.mulf %561, %560 : vector<16x128xf32>
    %cst_222 = arith.constant 5.000000e-01 : f32
    %563 = vector.broadcast %cst_222 : f32 to vector<16x128xf32>
    %564 = arith.addf %562, %563 : vector<16x128xf32>
    %565 = vector.extract_strided_slice %556 {offsets = [0, 128], sizes = [16, 128], strides = [1, 1]} : vector<16x512xf32> to vector<16x128xf32>
    %cst_223 = arith.constant 5.000000e-01 : f32
    %566 = vector.broadcast %cst_223 : f32 to vector<16x128xf32>
    %567 = arith.mulf %566, %565 : vector<16x128xf32>
    %568 = math.tanh %567 : vector<16x128xf32>
    %cst_224 = arith.constant 5.000000e-01 : f32
    %569 = vector.broadcast %cst_224 : f32 to vector<16x128xf32>
    %570 = arith.mulf %569, %568 : vector<16x128xf32>
    %cst_225 = arith.constant 5.000000e-01 : f32
    %571 = vector.broadcast %cst_225 : f32 to vector<16x128xf32>
    %572 = arith.addf %570, %571 : vector<16x128xf32>
    %573 = vector.extract_strided_slice %556 {offsets = [0, 256], sizes = [16, 128], strides = [1, 1]} : vector<16x512xf32> to vector<16x128xf32>
    %574 = math.tanh %573 : vector<16x128xf32>
    %575 = vector.extract_strided_slice %556 {offsets = [0, 384], sizes = [16, 128], strides = [1, 1]} : vector<16x512xf32> to vector<16x128xf32>
    %cst_226 = arith.constant 5.000000e-01 : f32
    %576 = vector.broadcast %cst_226 : f32 to vector<16x128xf32>
    %577 = arith.mulf %576, %575 : vector<16x128xf32>
    %578 = math.tanh %577 : vector<16x128xf32>
    %cst_227 = arith.constant 5.000000e-01 : f32
    %579 = vector.broadcast %cst_227 : f32 to vector<16x128xf32>
    %580 = arith.mulf %579, %578 : vector<16x128xf32>
    %cst_228 = arith.constant 5.000000e-01 : f32
    %581 = vector.broadcast %cst_228 : f32 to vector<16x128xf32>
    %582 = arith.addf %580, %581 : vector<16x128xf32>
    %583 = arith.mulf %572, %546 : vector<16x128xf32>
    %584 = arith.mulf %564, %574 : vector<16x128xf32>
    %585 = arith.addf %583, %584 : vector<16x128xf32>
    %586 = math.tanh %585 : vector<16x128xf32>
    %587 = arith.mulf %582, %586 : vector<16x128xf32>
    %c6_i32_229 = arith.constant 6 : i32
    %c16_i32_230 = arith.constant 16 : i32
    %588 = arith.muli %c6_i32_229, %c16_i32_230 : i32
    %589 = tpu.assume_multiple %588, 16 : i32
    %590 = arith.index_cast %589 : i32 to index
    %c0_231 = arith.constant 0 : index
    %591 = vector.load %arg11[%590, %c0_231] : memref<128x512xf32, #tpu.memory_space<vmem>>, vector<16x512xf32>
    %592 = arith.truncf %587 : vector<16x128xf32> to vector<16x128xbf16>
    %c0_232 = arith.constant 0 : index
    %c0_233 = arith.constant 0 : index
    %593 = vector.load %arg6[%c0_232, %c0_233] : memref<128x512xbf16, #tpu.memory_space<vmem>>, vector<128x512xbf16>
    %cst_234 = arith.constant dense<0.000000e+00> : vector<16x512xf32>
    %594 = tpu.matmul %592, %593, %cst_234 {dimension_numbers = #tpu.dot_dimension_numbers<[1], [0], [0], [1], [0, 0, 1, 1], [], []>} : vector<16x128xbf16>, vector<128x512xbf16>, vector<16x512xf32> -> vector<16x512xf32>
    %595 = arith.addf %591, %594 : vector<16x512xf32>
    %596 = vector.extract_strided_slice %595 {offsets = [0, 0], sizes = [16, 128], strides = [1, 1]} : vector<16x512xf32> to vector<16x128xf32>
    %cst_235 = arith.constant 5.000000e-01 : f32
    %597 = vector.broadcast %cst_235 : f32 to vector<16x128xf32>
    %598 = arith.mulf %597, %596 : vector<16x128xf32>
    %599 = math.tanh %598 : vector<16x128xf32>
    %cst_236 = arith.constant 5.000000e-01 : f32
    %600 = vector.broadcast %cst_236 : f32 to vector<16x128xf32>
    %601 = arith.mulf %600, %599 : vector<16x128xf32>
    %cst_237 = arith.constant 5.000000e-01 : f32
    %602 = vector.broadcast %cst_237 : f32 to vector<16x128xf32>
    %603 = arith.addf %601, %602 : vector<16x128xf32>
    %604 = vector.extract_strided_slice %595 {offsets = [0, 128], sizes = [16, 128], strides = [1, 1]} : vector<16x512xf32> to vector<16x128xf32>
    %cst_238 = arith.constant 5.000000e-01 : f32
    %605 = vector.broadcast %cst_238 : f32 to vector<16x128xf32>
    %606 = arith.mulf %605, %604 : vector<16x128xf32>
    %607 = math.tanh %606 : vector<16x128xf32>
    %cst_239 = arith.constant 5.000000e-01 : f32
    %608 = vector.broadcast %cst_239 : f32 to vector<16x128xf32>
    %609 = arith.mulf %608, %607 : vector<16x128xf32>
    %cst_240 = arith.constant 5.000000e-01 : f32
    %610 = vector.broadcast %cst_240 : f32 to vector<16x128xf32>
    %611 = arith.addf %609, %610 : vector<16x128xf32>
    %612 = vector.extract_strided_slice %595 {offsets = [0, 256], sizes = [16, 128], strides = [1, 1]} : vector<16x512xf32> to vector<16x128xf32>
    %613 = math.tanh %612 : vector<16x128xf32>
    %614 = vector.extract_strided_slice %595 {offsets = [0, 384], sizes = [16, 128], strides = [1, 1]} : vector<16x512xf32> to vector<16x128xf32>
    %cst_241 = arith.constant 5.000000e-01 : f32
    %615 = vector.broadcast %cst_241 : f32 to vector<16x128xf32>
    %616 = arith.mulf %615, %614 : vector<16x128xf32>
    %617 = math.tanh %616 : vector<16x128xf32>
    %cst_242 = arith.constant 5.000000e-01 : f32
    %618 = vector.broadcast %cst_242 : f32 to vector<16x128xf32>
    %619 = arith.mulf %618, %617 : vector<16x128xf32>
    %cst_243 = arith.constant 5.000000e-01 : f32
    %620 = vector.broadcast %cst_243 : f32 to vector<16x128xf32>
    %621 = arith.addf %619, %620 : vector<16x128xf32>
    %622 = arith.mulf %611, %585 : vector<16x128xf32>
    %623 = arith.mulf %603, %613 : vector<16x128xf32>
    %624 = arith.addf %622, %623 : vector<16x128xf32>
    %625 = math.tanh %624 : vector<16x128xf32>
    %626 = arith.mulf %621, %625 : vector<16x128xf32>
    %c7_i32_244 = arith.constant 7 : i32
    %c16_i32_245 = arith.constant 16 : i32
    %627 = arith.muli %c7_i32_244, %c16_i32_245 : i32
    %628 = tpu.assume_multiple %627, 16 : i32
    %629 = arith.index_cast %628 : i32 to index
    %c0_246 = arith.constant 0 : index
    %630 = vector.load %arg11[%629, %c0_246] : memref<128x512xf32, #tpu.memory_space<vmem>>, vector<16x512xf32>
    %631 = arith.truncf %626 : vector<16x128xf32> to vector<16x128xbf16>
    %c0_247 = arith.constant 0 : index
    %c0_248 = arith.constant 0 : index
    %632 = vector.load %arg6[%c0_247, %c0_248] : memref<128x512xbf16, #tpu.memory_space<vmem>>, vector<128x512xbf16>
    %cst_249 = arith.constant dense<0.000000e+00> : vector<16x512xf32>
    %633 = tpu.matmul %631, %632, %cst_249 {dimension_numbers = #tpu.dot_dimension_numbers<[1], [0], [0], [1], [0, 0, 1, 1], [], []>} : vector<16x128xbf16>, vector<128x512xbf16>, vector<16x512xf32> -> vector<16x512xf32>
    %634 = arith.addf %630, %633 : vector<16x512xf32>
    %635 = vector.extract_strided_slice %634 {offsets = [0, 0], sizes = [16, 128], strides = [1, 1]} : vector<16x512xf32> to vector<16x128xf32>
    %cst_250 = arith.constant 5.000000e-01 : f32
    %636 = vector.broadcast %cst_250 : f32 to vector<16x128xf32>
    %637 = arith.mulf %636, %635 : vector<16x128xf32>
    %638 = math.tanh %637 : vector<16x128xf32>
    %cst_251 = arith.constant 5.000000e-01 : f32
    %639 = vector.broadcast %cst_251 : f32 to vector<16x128xf32>
    %640 = arith.mulf %639, %638 : vector<16x128xf32>
    %cst_252 = arith.constant 5.000000e-01 : f32
    %641 = vector.broadcast %cst_252 : f32 to vector<16x128xf32>
    %642 = arith.addf %640, %641 : vector<16x128xf32>
    %643 = vector.extract_strided_slice %634 {offsets = [0, 128], sizes = [16, 128], strides = [1, 1]} : vector<16x512xf32> to vector<16x128xf32>
    %cst_253 = arith.constant 5.000000e-01 : f32
    %644 = vector.broadcast %cst_253 : f32 to vector<16x128xf32>
    %645 = arith.mulf %644, %643 : vector<16x128xf32>
    %646 = math.tanh %645 : vector<16x128xf32>
    %cst_254 = arith.constant 5.000000e-01 : f32
    %647 = vector.broadcast %cst_254 : f32 to vector<16x128xf32>
    %648 = arith.mulf %647, %646 : vector<16x128xf32>
    %cst_255 = arith.constant 5.000000e-01 : f32
    %649 = vector.broadcast %cst_255 : f32 to vector<16x128xf32>
    %650 = arith.addf %648, %649 : vector<16x128xf32>
    %651 = vector.extract_strided_slice %634 {offsets = [0, 256], sizes = [16, 128], strides = [1, 1]} : vector<16x512xf32> to vector<16x128xf32>
    %652 = math.tanh %651 : vector<16x128xf32>
    %653 = vector.extract_strided_slice %634 {offsets = [0, 384], sizes = [16, 128], strides = [1, 1]} : vector<16x512xf32> to vector<16x128xf32>
    %cst_256 = arith.constant 5.000000e-01 : f32
    %654 = vector.broadcast %cst_256 : f32 to vector<16x128xf32>
    %655 = arith.mulf %654, %653 : vector<16x128xf32>
    %656 = math.tanh %655 : vector<16x128xf32>
    %cst_257 = arith.constant 5.000000e-01 : f32
    %657 = vector.broadcast %cst_257 : f32 to vector<16x128xf32>
    %658 = arith.mulf %657, %656 : vector<16x128xf32>
    %cst_258 = arith.constant 5.000000e-01 : f32
    %659 = vector.broadcast %cst_258 : f32 to vector<16x128xf32>
    %660 = arith.addf %658, %659 : vector<16x128xf32>
    %661 = arith.mulf %650, %624 : vector<16x128xf32>
    %662 = arith.mulf %642, %652 : vector<16x128xf32>
    %663 = arith.addf %661, %662 : vector<16x128xf32>
    %664 = math.tanh %663 : vector<16x128xf32>
    %665 = arith.mulf %660, %664 : vector<16x128xf32>
    %c8_i32_259 = arith.constant 8 : i32
    %666 = arith.truncf %665 : vector<16x128xf32> to vector<16x128xbf16>
    %c0_260 = arith.constant 0 : index
    %c0_261 = arith.constant 0 : index
    %667 = vector.load %arg8[%c0_260, %c0_261] : memref<128x128xbf16, #tpu.memory_space<vmem>>, vector<128x128xbf16>
    %cst_262 = arith.constant dense<0.000000e+00> : vector<16x128xf32>
    %668 = tpu.matmul %666, %667, %cst_262 {dimension_numbers = #tpu.dot_dimension_numbers<[1], [0], [0], [1], [0, 0, 1, 1], [], []>} : vector<16x128xbf16>, vector<128x128xbf16>, vector<16x128xf32> -> vector<16x128xf32>
    %c0_263 = arith.constant 0 : index
    %c0_264 = arith.constant 0 : index
    %669 = vector.load %arg9[%c0_263, %c0_264] : memref<1x128xf32, #tpu.memory_space<vmem>>, vector<1x128xf32>
    %670 = vector.broadcast %669 : vector<1x128xf32> to vector<16x128xf32>
    %671 = arith.addf %668, %670 : vector<16x128xf32>
    %cst_265 = arith.constant dense<0xFF800000> : vector<16xf32>
    %672 = vector.multi_reduction <maximumf>, %671, %cst_265 [1] : vector<16x128xf32> to vector<16xf32>
    %673 = vector.shape_cast %672 : vector<16xf32> to vector<16x1xf32>
    %674 = vector.broadcast %673 : vector<16x1xf32> to vector<16x128xf32>
    %675 = arith.subf %671, %674 : vector<16x128xf32>
    %676 = math.exp %675 : vector<16x128xf32>
    %cst_266 = arith.constant dense<0.000000e+00> : vector<16xf32>
    %677 = vector.multi_reduction <add>, %676, %cst_266 [1] : vector<16x128xf32> to vector<16xf32>
    %678 = vector.shape_cast %677 : vector<16xf32> to vector<16x1xf32>
    %679 = tpu.reciprocal %678 {approx = true} : vector<16x1xf32> -> vector<16x1xf32>
    %680 = vector.broadcast %679 : vector<16x1xf32> to vector<16x128xf32>
    %681 = arith.mulf %676, %680 : vector<16x128xf32>
    %c0_267 = arith.constant 0 : index
    %c0_268 = arith.constant 0 : index
    %682 = vector.load %arg10[%c0_267, %c0_268] : memref<16x128xf32, #tpu.memory_space<vmem>>, vector<16x128xf32>
    tpu.vector_store %arg10[%c0_267, %c0_268], %681 {strides = array<i32>} : memref<16x128xf32, #tpu.memory_space<vmem>>, vector<16x128xf32>,
    return
  }
  func.func @transform_0(%arg0: i32) -> (i32, i32) {
    %c0_i32 = arith.constant 0 : i32
    %c0_i32_0 = arith.constant 0 : i32
    return %arg0, %c0_i32 : i32, i32
  }
  func.func @transform_1(%arg0: i32) -> (i32, i32) {
    %c0_i32 = arith.constant 0 : i32
    %c0_i32_0 = arith.constant 0 : i32
    %c0_i32_1 = arith.constant 0 : i32
    return %c0_i32, %c0_i32_0 : i32, i32
  }
  func.func @transform_2(%arg0: i32) -> (i32, i32) {
    %c0_i32 = arith.constant 0 : i32
    %c0_i32_0 = arith.constant 0 : i32
    %c0_i32_1 = arith.constant 0 : i32
    return %c0_i32, %c0_i32_0 : i32, i32
  }
  func.func @transform_3(%arg0: i32) -> (i32, i32) {
    %c0_i32 = arith.constant 0 : i32
    %c0_i32_0 = arith.constant 0 : i32
    %c0_i32_1 = arith.constant 0 : i32
    return %c0_i32, %c0_i32_0 : i32, i32
  }
  func.func @transform_4(%arg0: i32) -> (i32, i32) {
    %c0_i32 = arith.constant 0 : i32
    %c0_i32_0 = arith.constant 0 : i32
    %c0_i32_1 = arith.constant 0 : i32
    return %c0_i32, %c0_i32_0 : i32, i32
  }
  func.func @transform_5(%arg0: i32) -> (i32, i32) {
    %c0_i32 = arith.constant 0 : i32
    %c0_i32_0 = arith.constant 0 : i32
    %c0_i32_1 = arith.constant 0 : i32
    return %c0_i32, %c0_i32_0 : i32, i32
  }
  func.func @transform_6(%arg0: i32) -> (i32, i32) {
    %c0_i32 = arith.constant 0 : i32
    %c0_i32_0 = arith.constant 0 : i32
    %c0_i32_1 = arith.constant 0 : i32
    return %c0_i32, %c0_i32_0 : i32, i32
  }
  func.func @transform_7(%arg0: i32) -> (i32, i32) {
    %c0_i32 = arith.constant 0 : i32
    %c0_i32_0 = arith.constant 0 : i32
    %c0_i32_1 = arith.constant 0 : i32
    return %c0_i32, %c0_i32_0 : i32, i32
  }
  func.func @transform_8(%arg0: i32) -> (i32, i32) {
    %c0_i32 = arith.constant 0 : i32
    %c0_i32_0 = arith.constant 0 : i32
    %c0_i32_1 = arith.constant 0 : i32
    return %c0_i32, %c0_i32_0 : i32, i32
  }
  func.func @transform_9(%arg0: i32) -> (i32, i32) {
    %c0_i32 = arith.constant 0 : i32
    %c0_i32_0 = arith.constant 0 : i32
    return %arg0, %c0_i32 : i32, i32
  }
}

</mosaic_0001>

<llo_original>
// kernel: lstm_contempt_net_forward.1
$region0: #{lstm_contempt_net_forward.1}
  #allocation0 [shape = 'u32[]', space=smem, size = 0x4, offset = 0x4, fixed_abs, tag = 'smem constant byte address 0x4 - core index']
  #allocation1 [shape = 'u32[72,128]{1,0:T(1,128)}', space=vmem, size = 0x9000, scoped, tag = 'internal scratch']
  #allocation2 [shape = 'f32[128,512]{1,0:T(8,128)}', space=vmem, size = 0x40000, scoped, tag = 'scratch operand']
  #allocation3 [shape = 'bf16[128,128]{1,0:T(8,128)(2,1)}', space=vmem, size = 0x8000, scoped, tag = 'scratch operand']
  %s0 = inlined_call_operand.vmem [shape: bf16[128,128], index: 0, kind: input, shape index: {}]
  %s1 = inlined_call_operand.vmem [shape: bf16[128,512], index: 1, kind: input, shape index: {}]
  %s2 = inlined_call_operand.vmem [shape: bf16[128,512], index: 2, kind: input, shape index: {}]
  %s3 = inlined_call_operand.vmem [shape: f32[1,512], index: 3, kind: input, shape index: {}]
  %s4 = inlined_call_operand.vmem [shape: bf16[128,512], index: 4, kind: input, shape index: {}]
  %s5 = inlined_call_operand.vmem [shape: bf16[128,512], index: 5, kind: input, shape index: {}]
  %s6 = inlined_call_operand.vmem [shape: f32[1,512], index: 6, kind: input, shape index: {}]
  %s7 = inlined_call_operand.vmem [shape: bf16[128,128], index: 7, kind: input, shape index: {}]
  %s8 = inlined_call_operand.vmem [shape: f32[1,128], index: 8, kind: input, shape index: {}]
  %s9 = inlined_call_operand.vmem [shape: f32[16,128], index: 9, kind: output, shape index: {}]
  %s10 = sld [smem:[#allocation0]]
  $region46: #{lstm_contempt_net_forward.1} parent=0
    _
  %s12 = ssub.s32 1, %s10
  %s13 = scalar_select 0, %s12, %s10
  // Predicated region
  $region2: #{lstm_contempt_net_forward.1} parent=0 // pred_check
    _
  $region3: #{lstm_contempt_net_forward.1} parent=0 // pred_check_branch
    %15 = sbr.rel (0) target = $region5
  $region4: #{lstm_contempt_net_forward.1} parent=0 // pred_region
    _
  $region5: #{lstm_contempt_net_forward.1} parent=0 // pred_fallthru
    _
  // Predicated region
  $region6: #{lstm_contempt_net_forward.1} parent=0 // pred_check
    _
  $region7: #{lstm_contempt_net_forward.1} parent=0 // pred_check_branch
    %17 = sbr.rel (0) target = $region9
  $region8: #{lstm_contempt_net_forward.1} parent=0 // pred_region
    _
  $region9: #{lstm_contempt_net_forward.1} parent=0 // pred_fallthru
    _
  // Predicated region
  $region10: #{lstm_contempt_net_forward.1} parent=0 // pred_check
    _
  $region11: #{lstm_contempt_net_forward.1} parent=0 // pred_check_branch
    %19 = sbr.rel (0) target = $region13
  $region12: #{lstm_contempt_net_forward.1} parent=0 // pred_region
    _
  $region13: #{lstm_contempt_net_forward.1} parent=0 // pred_fallthru
    _
  // Predicated region
  $region14: #{lstm_contempt_net_forward.1} parent=0 // pred_check
    _
  $region15: #{lstm_contempt_net_forward.1} parent=0 // pred_check_branch
    %21 = sbr.rel (0) target = $region17
  $region16: #{lstm_contempt_net_forward.1} parent=0 // pred_region
    _
  $region17: #{lstm_contempt_net_forward.1} parent=0 // pred_fallthru
    _
  // Predicated region
  $region18: #{lstm_contempt_net_forward.1} parent=0 // pred_check
    _
  $region19: #{lstm_contempt_net_forward.1} parent=0 // pred_check_branch
    %23 = sbr.rel (0) target = $region21
  $region20: #{lstm_contempt_net_forward.1} parent=0 // pred_region
    _
  $region21: #{lstm_contempt_net_forward.1} parent=0 // pred_fallthru
    _
  // Predicated region
  $region22: #{lstm_contempt_net_forward.1} parent=0 // pred_check
    _
  $region23: #{lstm_contempt_net_forward.1} parent=0 // pred_check_branch
    %25 = sbr.rel (0) target = $region25
  $region24: #{lstm_contempt_net_forward.1} parent=0 // pred_region
    _
  $region25: #{lstm_contempt_net_forward.1} parent=0 // pred_fallthru
    _
  // Predicated region
  $region26: #{lstm_contempt_net_forward.1} parent=0 // pred_check
    _
  $region27: #{lstm_contempt_net_forward.1} parent=0 // pred_check_branch
    %27 = sbr.rel (0) target = $region29
  $region28: #{lstm_contempt_net_forward.1} parent=0 // pred_region
    _
  $region29: #{lstm_contempt_net_forward.1} parent=0 // pred_fallthru
    _
  // Predicated region
  $region30: #{lstm_contempt_net_forward.1} parent=0 // pred_check
    _
  $region31: #{lstm_contempt_net_forward.1} parent=0 // pred_check_branch
    %29 = sbr.rel (0) target = $region33
  $region32: #{lstm_contempt_net_forward.1} parent=0 // pred_region
    _
  $region33: #{lstm_contempt_net_forward.1} parent=0 // pred_fallthru
    _
  // Predicated region
  $region34: #{lstm_contempt_net_forward.1} parent=0 // pred_check
    _
  $region35: #{lstm_contempt_net_forward.1} parent=0 // pred_check_branch
    %31 = sbr.rel (0) target = $region37
  $region36: #{lstm_contempt_net_forward.1} parent=0 // pred_region
    _
  $region37: #{lstm_contempt_net_forward.1} parent=0 // pred_fallthru
    _
  %v33 = vld [vmem:[%s0] sm:$0xf]
  %v34 = vld [vmem:[%s0 + $0x4] sm:$0xf]
  %v35 = vld [vmem:[%s0 + $0x8] sm:$0xf]
  %v36 = vld [vmem:[%s0 + $0xc] sm:$0xf]
  %v37 = vld [vmem:[%s0 + $0x10] sm:$0xf]
  %v38 = vld [vmem:[%s0 + $0x14] sm:$0xf]
  %v39 = vld [vmem:[%s0 + $0x18] sm:$0xf]
  %v40 = vld [vmem:[%s0 + $0x1c] sm:$0xf]
  %v41 = vld [vmem:[%s0 + $0x20] sm:$0xf]
  %v42 = vld [vmem:[%s0 + $0x24] sm:$0xf]
  %v43 = vld [vmem:[%s0 + $0x28] sm:$0xf]
  %v44 = vld [vmem:[%s0 + $0x2c] sm:$0xf]
  %v45 = vld [vmem:[%s0 + $0x30] sm:$0xf]
  %v46 = vld [vmem:[%s0 + $0x34] sm:$0xf]
  %v47 = vld [vmem:[%s0 + $0x38] sm:$0xf]
  %v48 = vld [vmem:[%s0 + $0x3c] sm:$0xf]
  %v49 = vld [vmem:[%s1] sm:$0xff]
  %v50 = vld [vmem:[%s1 + $0x8] sm:$0xff]
  %v51 = vld [vmem:[%s1 + $0x10] sm:$0xff]
  %v52 = vld [vmem:[%s1 + $0x18] sm:$0xff]
  %v53 = vld [vmem:[%s1 + $0x20] sm:$0xff]
  %v54 = vld [vmem:[%s1 + $0x28] sm:$0xff]
  %v55 = vld [vmem:[%s1 + $0x30] sm:$0xff]
  %v56 = vld [vmem:[%s1 + $0x38] sm:$0xff]
  %v57 = vld [vmem:[%s1 + $0x40] sm:$0xff]
  %v58 = vld [vmem:[%s1 + $0x48] sm:$0xff]
  %v59 = vld [vmem:[%s1 + $0x50] sm:$0xff]
  %v60 = vld [vmem:[%s1 + $0x58] sm:$0xff]
  %v61 = vld [vmem:[%s1 + $0x60] sm:$0xff]
  %v62 = vld [vmem:[%s1 + $0x68] sm:$0xff]
  %v63 = vld [vmem:[%s1 + $0x70] sm:$0xff]
  %v64 = vld [vmem:[%s1 + $0x78] sm:$0xff]
  %v65 = vld [vmem:[%s1 + $0x80] sm:$0xff]
  %v66 = vld [vmem:[%s1 + $0x88] sm:$0xff]
  %v67 = vld [vmem:[%s1 + $0x90] sm:$0xff]
  %v68 = vld [vmem:[%s1 + $0x98] sm:$0xff]
  %v69 = vld [vmem:[%s1 + $0xa0] sm:$0xff]
  %v70 = vld [vmem:[%s1 + $0xa8] sm:$0xff]
  %v71 = vld [vmem:[%s1 + $0xb0] sm:$0xff]
  %v72 = vld [vmem:[%s1 + $0xb8] sm:$0xff]
  %v73 = vld [vmem:[%s1 + $0xc0] sm:$0xff]
  %v74 = vld [vmem:[%s1 + $0xc8] sm:$0xff]
  %v75 = vld [vmem:[%s1 + $0xd0] sm:$0xff]
  %v76 = vld [vmem:[%s1 + $0xd8] sm:$0xff]
  %v77 = vld [vmem:[%s1 + $0xe0] sm:$0xff]
  %v78 = vld [vmem:[%s1 + $0xe8] sm:$0xff]
  %v79 = vld [vmem:[%s1 + $0xf0] sm:$0xff]
  %v80 = vld [vmem:[%s1 + $0xf8] sm:$0xff]
  %v81 = vld [vmem:[%s3] sm:$0xf]
  %v83 = vperm.slane %v81, 0
  %v84 = vperm.slane %v81, 1
  %v85 = vperm.slane %v81, 2
  %v86 = vperm.slane %v81, 3
  %v107 = vunpack.c.l.b16 %v33
  %v108 = vunpack.c.l.b16 %v34
  %v109 = vunpack.c.l.b16 %v35
  %v110 = vunpack.c.l.b16 %v36
  %v111 = vunpack.c.l.b16 %v37
  %v112 = vunpack.c.l.b16 %v38
  %v113 = vunpack.c.l.b16 %v39
  %v114 = vunpack.c.l.b16 %v40
  %v115 = vunpack.c.l.b16 %v41
  %v116 = vunpack.c.l.b16 %v42
  %v117 = vunpack.c.l.b16 %v43
  %v118 = vunpack.c.l.b16 %v44
  %v119 = vunpack.c.l.b16 %v45
  %v120 = vunpack.c.l.b16 %v46
  %v121 = vunpack.c.l.b16 %v47
  %v122 = vunpack.c.l.b16 %v48
  %v123 = vpack.c.b16 %v108, %v107
  %v124 = vpack.c.b16 %v110, %v109
  %v125 = vpack.c.b16 %v112, %v111
  %v126 = vpack.c.b16 %v114, %v113
  %v127 = vpack.c.b16 %v116, %v115
  %v128 = vpack.c.b16 %v118, %v117
  %v129 = vpack.c.b16 %v120, %v119
  %v130 = vpack.c.b16 %v122, %v121
  %v171 = vunpack.c.l.b16 %v49
  %v172 = vunpack.c.h.b16 %v49
  %v173 = vunpack.c.l.b16 %v50
  %v174 = vunpack.c.h.b16 %v50
  %v175 = vunpack.c.l.b16 %v51
  %v176 = vunpack.c.h.b16 %v51
  %v177 = vunpack.c.l.b16 %v52
  %v178 = vunpack.c.h.b16 %v52
  %v179 = vunpack.c.l.b16 %v53
  %v180 = vunpack.c.h.b16 %v53
  %v181 = vunpack.c.l.b16 %v54
  %v182 = vunpack.c.h.b16 %v54
  %v183 = vunpack.c.l.b16 %v55
  %v184 = vunpack.c.h.b16 %v55
  %v185 = vunpack.c.l.b16 %v56
  %v186 = vunpack.c.h.b16 %v56
  %v187 = vunpack.c.l.b16 %v57
  %v188 = vunpack.c.h.b16 %v57
  %v189 = vunpack.c.l.b16 %v58
  %v190 = vunpack.c.h.b16 %v58
  %v191 = vunpack.c.l.b16 %v59
  %v192 = vunpack.c.h.b16 %v59
  %v193 = vunpack.c.l.b16 %v60
  %v194 = vunpack.c.h.b16 %v60
  %v195 = vunpack.c.l.b16 %v61
  %v196 = vunpack.c.h.b16 %v61
  %v197 = vunpack.c.l.b16 %v62
  %v198 = vunpack.c.h.b16 %v62
  %v199 = vunpack.c.l.b16 %v63
  %v200 = vunpack.c.h.b16 %v63
  %v201 = vunpack.c.l.b16 %v64
  %v202 = vunpack.c.h.b16 %v64
  %v203 = vunpack.c.l.b16 %v65
  %v204 = vunpack.c.h.b16 %v65
  %v205 = vunpack.c.l.b16 %v66
  %v206 = vunpack.c.h.b16 %v66
  %v207 = vunpack.c.l.b16 %v67
  %v208 = vunpack.c.h.b16 %v67
  %v209 = vunpack.c.l.b16 %v68
  %v210 = vunpack.c.h.b16 %v68
  %v211 = vunpack.c.l.b16 %v69
  %v212 = vunpack.c.h.b16 %v69
  %v213 = vunpack.c.l.b16 %v70
  %v214 = vunpack.c.h.b16 %v70
  %v215 = vunpack.c.l.b16 %v71
  %v216 = vunpack.c.h.b16 %v71
  %v217 = vunpack.c.l.b16 %v72
  %v218 = vunpack.c.h.b16 %v72
  %v219 = vunpack.c.l.b16 %v73
  %v220 = vunpack.c.h.b16 %v73
  %v221 = vunpack.c.l.b16 %v74
  %v222 = vunpack.c.h.b16 %v74
  %v223 = vunpack.c.l.b16 %v75
  %v224 = vunpack.c.h.b16 %v75
  %v225 = vunpack.c.l.b16 %v76
  %v226 = vunpack.c.h.b16 %v76
  %v227 = vunpack.c.l.b16 %v77
  %v228 = vunpack.c.h.b16 %v77
  %v229 = vunpack.c.l.b16 %v78
  %v230 = vunpack.c.h.b16 %v78
  %v231 = vunpack.c.l.b16 %v79
  %v232 = vunpack.c.h.b16 %v79
  %v233 = vunpack.c.l.b16 %v80
  %v234 = vunpack.c.h.b16 %v80
  %v235 = vpack.c.b16 %v175, %v171
  %v236 = vpack.c.b16 %v176, %v172
  %v237 = vpack.c.b16 %v177, %v173
  %v238 = vpack.c.b16 %v178, %v174
  %v239 = vpack.c.b16 %v183, %v179
  %v240 = vpack.c.b16 %v184, %v180
  %v241 = vpack.c.b16 %v185, %v181
  %v242 = vpack.c.b16 %v186, %v182
  %v243 = vpack.c.b16 %v191, %v187
  %v244 = vpack.c.b16 %v192, %v188
  %v245 = vpack.c.b16 %v193, %v189
  %v246 = vpack.c.b16 %v194, %v190
  %v247 = vpack.c.b16 %v199, %v195
  %v248 = vpack.c.b16 %v200, %v196
  %v249 = vpack.c.b16 %v201, %v197
  %v250 = vpack.c.b16 %v202, %v198
  %v251 = vpack.c.b16 %v207, %v203
  %v252 = vpack.c.b16 %v208, %v204
  %v253 = vpack.c.b16 %v209, %v205
  %v254 = vpack.c.b16 %v210, %v206
  %v255 = vpack.c.b16 %v215, %v211
  %v256 = vpack.c.b16 %v216, %v212
  %v257 = vpack.c.b16 %v217, %v213
  %v258 = vpack.c.b16 %v218, %v214
  %v259 = vpack.c.b16 %v223, %v219
  %v260 = vpack.c.b16 %v224, %v220
  %v261 = vpack.c.b16 %v225, %v221
  %v262 = vpack.c.b16 %v226, %v222
  %v263 = vpack.c.b16 %v231, %v227
  %v264 = vpack.c.b16 %v232, %v228
  %v265 = vpack.c.b16 %v233, %v229
  %v266 = vpack.c.b16 %v234, %v230
  %299 = vmatpush.bf16.msra.mxu0 %v263
  %300 = vmatpush.bf16.msra.mxu0 %v259
  %301 = vmatpush.bf16.msra.mxu0 %v255
  %302 = vmatpush.bf16.msra.mxu0 %v251
  %303 = vmatpush.bf16.msra.mxu0 %v247
  %304 = vmatpush.bf16.msra.mxu0 %v243
  %305 = vmatpush.bf16.msra.mxu0 %v239
  %306 = vmatpush.bf16.msra.mxu0 %v235
  %307 = vmatmul.bf16.gmra.mxu0 %v123
  %v308 = vpop.f32.mrf.mxu0
  %v309 = vadd.f32 %v83, %v308
  %v310 = vpop.f32.mrf.mxu0
  %v311 = vadd.f32 %v83, %v310
  %312 = vmatmul.bf16.gmra.mxu0 %v124
  %v313 = vpop.f32.mrf.mxu0
  %v314 = vadd.f32 %v83, %v313
  %v315 = vpop.f32.mrf.mxu0
  %v316 = vadd.f32 %v83, %v315
  %317 = vmatmul.bf16.gmra.mxu0 %v125
  %v318 = vpop.f32.mrf.mxu0
  %v319 = vadd.f32 %v83, %v318
  %v320 = vpop.f32.mrf.mxu0
  %v321 = vadd.f32 %v83, %v320
  %322 = vmatmul.bf16.gmra.mxu0 %v126
  %v323 = vpop.f32.mrf.mxu0
  %v324 = vadd.f32 %v83, %v323
  %v325 = vpop.f32.mrf.mxu0
  %v326 = vadd.f32 %v83, %v325
  %327 = vmatmul.bf16.gmra.mxu0 %v127
  %v328 = vpop.f32.mrf.mxu0
  %v329 = vadd.f32 %v83, %v328
  %v330 = vpop.f32.mrf.mxu0
  %v331 = vadd.f32 %v83, %v330
  %332 = vmatmul.bf16.gmra.mxu0 %v128
  %v333 = vpop.f32.mrf.mxu0
  %v334 = vadd.f32 %v83, %v333
  %v335 = vpop.f32.mrf.mxu0
  %v336 = vadd.f32 %v83, %v335
  %337 = vmatmul.bf16.gmra.mxu0 %v129
  %v338 = vpop.f32.mrf.mxu0
  %v339 = vadd.f32 %v83, %v338
  %v340 = vpop.f32.mrf.mxu0
  %v341 = vadd.f32 %v83, %v340
  %342 = vmatmul.bf16.gmra.mxu0 %v130
  %v343 = vpop.f32.mrf.mxu0
  %v344 = vadd.f32 %v83, %v343
  %v345 = vpop.f32.mrf.mxu0
  %v346 = vadd.f32 %v83, %v345
  %347 = vdwg.mxu0
  %348 = vmatpush.bf16.msra.mxu0 %v264
  %349 = vmatpush.bf16.msra.mxu0 %v260
  %350 = vmatpush.bf16.msra.mxu0 %v256
  %351 = vmatpush.bf16.msra.mxu0 %v252
  %352 = vmatpush.bf16.msra.mxu0 %v248
  %353 = vmatpush.bf16.msra.mxu0 %v244
  %354 = vmatpush.bf16.msra.mxu0 %v240
  %355 = vmatpush.bf16.msra.mxu0 %v236
  %356 = vmatmul.bf16.gmra.mxu0 %v123
  %v357 = vpop.f32.mrf.mxu0
  %v358 = vadd.f32 %v84, %v357
  %v359 = vpop.f32.mrf.mxu0
  %v360 = vadd.f32 %v84, %v359
  %361 = vmatmul.bf16.gmra.mxu0 %v124
  %v362 = vpop.f32.mrf.mxu0
  %v363 = vadd.f32 %v84, %v362
  %v364 = vpop.f32.mrf.mxu0
  %v365 = vadd.f32 %v84, %v364
  %366 = vmatmul.bf16.gmra.mxu0 %v125
  %v367 = vpop.f32.mrf.mxu0
  %v368 = vadd.f32 %v84, %v367
  %v369 = vpop.f32.mrf.mxu0
  %v370 = vadd.f32 %v84, %v369
  %371 = vmatmul.bf16.gmra.mxu0 %v126
  %v372 = vpop.f32.mrf.mxu0
  %v373 = vadd.f32 %v84, %v372
  %v374 = vpop.f32.mrf.mxu0
  %v375 = vadd.f32 %v84, %v374
  %376 = vmatmul.bf16.gmra.mxu0 %v127
  %v377 = vpop.f32.mrf.mxu0
  %v378 = vadd.f32 %v84, %v377
  %v379 = vpop.f32.mrf.mxu0
  %v380 = vadd.f32 %v84, %v379
  %381 = vmatmul.bf16.gmra.mxu0 %v128
  %v382 = vpop.f32.mrf.mxu0
  %v383 = vadd.f32 %v84, %v382
  %v384 = vpop.f32.mrf.mxu0
  %v385 = vadd.f32 %v84, %v384
  %386 = vmatmul.bf16.gmra.mxu0 %v129
  %v387 = vpop.f32.mrf.mxu0
  %v388 = vadd.f32 %v84, %v387
  %v389 = vpop.f32.mrf.mxu0
  %v390 = vadd.f32 %v84, %v389
  %391 = vmatmul.bf16.gmra.mxu0 %v130
  %v392 = vpop.f32.mrf.mxu0
  %v393 = vadd.f32 %v84, %v392
  %v394 = vpop.f32.mrf.mxu0
  %v395 = vadd.f32 %v84, %v394
  %396 = vdwg.mxu0
  %397 = vmatpush.bf16.msra.mxu0 %v265
  %398 = vmatpush.bf16.msra.mxu0 %v261
  %399 = vmatpush.bf16.msra.mxu0 %v257
  %400 = vmatpush.bf16.msra.mxu0 %v253
  %401 = vmatpush.bf16.msra.mxu0 %v249
  %402 = vmatpush.bf16.msra.mxu0 %v245
  %403 = vmatpush.bf16.msra.mxu0 %v241
  %404 = vmatpush.bf16.msra.mxu0 %v237
  %405 = vmatmul.bf16.gmra.mxu0 %v123
  %v406 = vpop.f32.mrf.mxu0
  %v407 = vadd.f32 %v85, %v406
  %v408 = vpop.f32.mrf.mxu0
  %v409 = vadd.f32 %v85, %v408
  %410 = vmatmul.bf16.gmra.mxu0 %v124
  %v411 = vpop.f32.mrf.mxu0
  %v412 = vadd.f32 %v85, %v411
  %v413 = vpop.f32.mrf.mxu0
  %v414 = vadd.f32 %v85, %v413
  %415 = vmatmul.bf16.gmra.mxu0 %v125
  %v416 = vpop.f32.mrf.mxu0
  %v417 = vadd.f32 %v85, %v416
  %v418 = vpop.f32.mrf.mxu0
  %v419 = vadd.f32 %v85, %v418
  %420 = vmatmul.bf16.gmra.mxu0 %v126
  %v421 = vpop.f32.mrf.mxu0
  %v422 = vadd.f32 %v85, %v421
  %v423 = vpop.f32.mrf.mxu0
  %v424 = vadd.f32 %v85, %v423
  %425 = vmatmul.bf16.gmra.mxu0 %v127
  %v426 = vpop.f32.mrf.mxu0
  %v427 = vadd.f32 %v85, %v426
  %v428 = vpop.f32.mrf.mxu0
  %v429 = vadd.f32 %v85, %v428
  %430 = vmatmul.bf16.gmra.mxu0 %v128
  %v431 = vpop.f32.mrf.mxu0
  %v432 = vadd.f32 %v85, %v431
  %v433 = vpop.f32.mrf.mxu0
  %v434 = vadd.f32 %v85, %v433
  %435 = vmatmul.bf16.gmra.mxu0 %v129
  %v436 = vpop.f32.mrf.mxu0
  %v437 = vadd.f32 %v85, %v436
  %v438 = vpop.f32.mrf.mxu0
  %v439 = vadd.f32 %v85, %v438
  %440 = vmatmul.bf16.gmra.mxu0 %v130
  %v441 = vpop.f32.mrf.mxu0
  %v442 = vadd.f32 %v85, %v441
  %v443 = vpop.f32.mrf.mxu0
  %v444 = vadd.f32 %v85, %v443
  %445 = vdwg.mxu0
  %446 = vmatpush.bf16.msra.mxu0 %v266
  %447 = vmatpush.bf16.msra.mxu0 %v262
  %448 = vmatpush.bf16.msra.mxu0 %v258
  %449 = vmatpush.bf16.msra.mxu0 %v254
  %450 = vmatpush.bf16.msra.mxu0 %v250
  %451 = vmatpush.bf16.msra.mxu0 %v246
  %452 = vmatpush.bf16.msra.mxu0 %v242
  %453 = vmatpush.bf16.msra.mxu0 %v238
  %454 = vmatmul.bf16.gmra.mxu0 %v123
  %v455 = vpop.f32.mrf.mxu0
  %v456 = vadd.f32 %v86, %v455
  %v457 = vpop.f32.mrf.mxu0
  %v458 = vadd.f32 %v86, %v457
  %459 = vmatmul.bf16.gmra.mxu0 %v124
  %v460 = vpop.f32.mrf.mxu0
  %v461 = vadd.f32 %v86, %v460
  %v462 = vpop.f32.mrf.mxu0
  %v463 = vadd.f32 %v86, %v462
  %464 = vmatmul.bf16.gmra.mxu0 %v125
  %v465 = vpop.f32.mrf.mxu0
  %v466 = vadd.f32 %v86, %v465
  %v467 = vpop.f32.mrf.mxu0
  %v468 = vadd.f32 %v86, %v467
  %469 = vmatmul.bf16.gmra.mxu0 %v126
  %v470 = vpop.f32.mrf.mxu0
  %v471 = vadd.f32 %v86, %v470
  %v472 = vpop.f32.mrf.mxu0
  %v473 = vadd.f32 %v86, %v472
  %474 = vmatmul.bf16.gmra.mxu0 %v127
  %v475 = vpop.f32.mrf.mxu0
  %v476 = vadd.f32 %v86, %v475
  %v477 = vpop.f32.mrf.mxu0
  %v478 = vadd.f32 %v86, %v477
  %479 = vmatmul.bf16.gmra.mxu0 %v128
  %v480 = vpop.f32.mrf.mxu0
  %v481 = vadd.f32 %v86, %v480
  %v482 = vpop.f32.mrf.mxu0
  %v483 = vadd.f32 %v86, %v482
  %484 = vmatmul.bf16.gmra.mxu0 %v129
  %v485 = vpop.f32.mrf.mxu0
  %v486 = vadd.f32 %v86, %v485
  %v487 = vpop.f32.mrf.mxu0
  %v488 = vadd.f32 %v86, %v487
  %489 = vmatmul.bf16.gmra.mxu0 %v130
  %v490 = vpop.f32.mrf.mxu0
  %v491 = vadd.f32 %v86, %v490
  %v492 = vpop.f32.mrf.mxu0
  %v493 = vadd.f32 %v86, %v492
  %494 = vdwg.mxu0
  %495 = vst [vmem:[#allocation2] sm:$0xff] %v309
  %496 = vst [vmem:[#allocation2 + $0x8] sm:$0xff] %v358
  %497 = vst [vmem:[#allocation2 + $0x10] sm:$0xff] %v407
  %498 = vst [vmem:[#allocation2 + $0x18] sm:$0xff] %v456
  %499 = vst [vmem:[#allocation2 + $0x20] sm:$0xff] %v311
  %500 = vst [vmem:[#allocation2 + $0x28] sm:$0xff] %v360
  %501 = vst [vmem:[#allocation2 + $0x30] sm:$0xff] %v409
  %502 = vst [vmem:[#allocation2 + $0x38] sm:$0xff] %v458
  %503 = vst [vmem:[#allocation2 + $0x40] sm:$0xff] %v314
  %504 = vst [vmem:[#allocation2 + $0x48] sm:$0xff] %v363
  %505 = vst [vmem:[#allocation2 + $0x50] sm:$0xff] %v412
  %506 = vst [vmem:[#allocation2 + $0x58] sm:$0xff] %v461
  %507 = vst [vmem:[#allocation2 + $0x60] sm:$0xff] %v316
  %508 = vst [vmem:[#allocation2 + $0x68] sm:$0xff] %v365
  %509 = vst [vmem:[#allocation2 + $0x70] sm:$0xff] %v414
  %510 = vst [vmem:[#allocation2 + $0x78] sm:$0xff] %v463
  %511 = vst [vmem:[#allocation2 + $0x80] sm:$0xff] %v319
  %512 = vst [vmem:[#allocation2 + $0x88] sm:$0xff] %v368
  %513 = vst [vmem:[#allocation2 + $0x90] sm:$0xff] %v417
  %514 = vst [vmem:[#allocation2 + $0x98] sm:$0xff] %v466
  %515 = vst [vmem:[#allocation2 + $0xa0] sm:$0xff] %v321
  %516 = vst [vmem:[#allocation2 + $0xa8] sm:$0xff] %v370
  %517 = vst [vmem:[#allocation2 + $0xb0] sm:$0xff] %v419
  %518 = vst [vmem:[#allocation2 + $0xb8] sm:$0xff] %v468
  %519 = vst [vmem:[#allocation2 + $0xc0] sm:$0xff] %v324
  %520 = vst [vmem:[#allocation2 + $0xc8] sm:$0xff] %v373
  %521 = vst [vmem:[#allocation2 + $0xd0] sm:$0xff] %v422
  %522 = vst [vmem:[#allocation2 + $0xd8] sm:$0xff] %v471
  %523 = vst [vmem:[#allocation2 + $0xe0] sm:$0xff] %v326
  %524 = vst [vmem:[#allocation2 + $0xe8] sm:$0xff] %v375
  %525 = vst [vmem:[#allocation2 + $0xf0] sm:$0xff] %v424
  %526 = vst [vmem:[#allocation2 + $0xf8] sm:$0xff] %v473
  %527 = vst [vmem:[#allocation2 + $0x100] sm:$0xff] %v329
  %528 = vst [vmem:[#allocation2 + $0x108] sm:$0xff] %v378
  %529 = vst [vmem:[#allocation2 + $0x110] sm:$0xff] %v427
  %530 = vst [vmem:[#allocation2 + $0x118] sm:$0xff] %v476
  %531 = vst [vmem:[#allocation2 + $0x120] sm:$0xff] %v331
  %532 = vst [vmem:[#allocation2 + $0x128] sm:$0xff] %v380
  %533 = vst [vmem:[#allocation2 + $0x130] sm:$0xff] %v429
  %534 = vst [vmem:[#allocation2 + $0x138] sm:$0xff] %v478
  %535 = vst [vmem:[#allocation2 + $0x140] sm:$0xff] %v334
  %536 = vst [vmem:[#allocation2 + $0x148] sm:$0xff] %v383
  %537 = vst [vmem:[#allocation2 + $0x150] sm:$0xff] %v432
  %538 = vst [vmem:[#allocation2 + $0x158] sm:$0xff] %v481
  %539 = vst [vmem:[#allocation2 + $0x160] sm:$0xff] %v336
  %540 = vst [vmem:[#allocation2 + $0x168] sm:$0xff] %v385
  %541 = vst [vmem:[#allocation2 + $0x170] sm:$0xff] %v434
  %542 = vst [vmem:[#allocation2 + $0x178] sm:$0xff] %v483
  %543 = vst [vmem:[#allocation2 + $0x180] sm:$0xff] %v339
  %544 = vst [vmem:[#allocation2 + $0x188] sm:$0xff] %v388
  %545 = vst [vmem:[#allocation2 + $0x190] sm:$0xff] %v437
  %546 = vst [vmem:[#allocation2 + $0x198] sm:$0xff] %v486
  %547 = vst [vmem:[#allocation2 + $0x1a0] sm:$0xff] %v341
  %548 = vst [vmem:[#allocation2 + $0x1a8] sm:$0xff] %v390
  %549 = vst [vmem:[#allocation2 + $0x1b0] sm:$0xff] %v439
  %550 = vst [vmem:[#allocation2 + $0x1b8] sm:$0xff] %v488
  %551 = vst [vmem:[#allocation2 + $0x1c0] sm:$0xff] %v344
  %552 = vst [vmem:[#allocation2 + $0x1c8] sm:$0xff] %v393
  %553 = vst [vmem:[#allocation2 + $0x1d0] sm:$0xff] %v442
  %554 = vst [vmem:[#allocation2 + $0x1d8] sm:$0xff] %v491
  %555 = vst [vmem:[#allocation2 + $0x1e0] sm:$0xff] %v346
  %556 = vst [vmem:[#allocation2 + $0x1e8] sm:$0xff] %v395
  %557 = vst [vmem:[#allocation2 + $0x1f0] sm:$0xff] %v444
  %558 = vst [vmem:[#allocation2 + $0x1f8] sm:$0xff] %v493
  %s559 = smul.u32 0, 4
  %s560 = smul.addr %s559, 8
  %s561 = scalar_lea.vmem [#allocation2], %s560
  %v562 = vld [vmem:[%s561] sm:$0xff]
  %v563 = vld [vmem:[%s561 + $0x8] sm:$0xff]
  %v564 = vld [vmem:[%s561 + $0x10] sm:$0xff]
  %v565 = vld [vmem:[%s561 + $0x18] sm:$0xff]
  %v566 = vld [vmem:[%s561 + $0x20] sm:$0xff]
  %v567 = vld [vmem:[%s561 + $0x28] sm:$0xff]
  %v568 = vld [vmem:[%s561 + $0x30] sm:$0xff]
  %v569 = vld [vmem:[%s561 + $0x38] sm:$0xff]
  %v570 = vld [vmem:[%s2] sm:$0xff]
  %v571 = vld [vmem:[%s2 + $0x8] sm:$0xff]
  %v572 = vld [vmem:[%s2 + $0x10] sm:$0xff]
  %v573 = vld [vmem:[%s2 + $0x18] sm:$0xff]
  %v574 = vld [vmem:[%s2 + $0x20] sm:$0xff]
  %v575 = vld [vmem:[%s2 + $0x28] sm:$0xff]
  %v576 = vld [vmem:[%s2 + $0x30] sm:$0xff]
  %v577 = vld [vmem:[%s2 + $0x38] sm:$0xff]
  %v578 = vld [vmem:[%s2 + $0x40] sm:$0xff]
  %v579 = vld [vmem:[%s2 + $0x48] sm:$0xff]
  %v580 = vld [vmem:[%s2 + $0x50] sm:$0xff]
  %v581 = vld [vmem:[%s2 + $0x58] sm:$0xff]
  %v582 = vld [vmem:[%s2 + $0x60] sm:$0xff]
  %v583 = vld [vmem:[%s2 + $0x68] sm:$0xff]
  %v584 = vld [vmem:[%s2 + $0x70] sm:$0xff]
  %v585 = vld [vmem:[%s2 + $0x78] sm:$0xff]
  %v586 = vld [vmem:[%s2 + $0x80] sm:$0xff]
  %v587 = vld [vmem:[%s2 + $0x88] sm:$0xff]
  %v588 = vld [vmem:[%s2 + $0x90] sm:$0xff]
  %v589 = vld [vmem:[%s2 + $0x98] sm:$0xff]
  %v590 = vld [vmem:[%s2 + $0xa0] sm:$0xff]
  %v591 = vld [vmem:[%s2 + $0xa8] sm:$0xff]
  %v592 = vld [vmem:[%s2 + $0xb0] sm:$0xff]
  %v593 = vld [vmem:[%s2 + $0xb8] sm:$0xff]
  %v594 = vld [vmem:[%s2 + $0xc0] sm:$0xff]
  %v595 = vld [vmem:[%s2 + $0xc8] sm:$0xff]
  %v596 = vld [vmem:[%s2 + $0xd0] sm:$0xff]
  %v597 = vld [vmem:[%s2 + $0xd8] sm:$0xff]
  %v598 = vld [vmem:[%s2 + $0xe0] sm:$0xff]
  %v599 = vld [vmem:[%s2 + $0xe8] sm:$0xff]
  %v600 = vld [vmem:[%s2 + $0xf0] sm:$0xff]
  %v601 = vld [vmem:[%s2 + $0xf8] sm:$0xff]
  %v634 = vunpack.c.l.b16 %v570
  %v635 = vunpack.c.h.b16 %v570
  %v636 = vunpack.c.l.b16 %v571
  %v637 = vunpack.c.h.b16 %v571
  %v638 = vunpack.c.l.b16 %v572
  %v639 = vunpack.c.h.b16 %v572
  %v640 = vunpack.c.l.b16 %v573
  %v641 = vunpack.c.h.b16 %v573
  %v642 = vunpack.c.l.b16 %v574
  %v643 = vunpack.c.h.b16 %v574
  %v644 = vunpack.c.l.b16 %v575
  %v645 = vunpack.c.h.b16 %v575
  %v646 = vunpack.c.l.b16 %v576
  %v647 = vunpack.c.h.b16 %v576
  %v648 = vunpack.c.l.b16 %v577
  %v649 = vunpack.c.h.b16 %v577
  %v650 = vunpack.c.l.b16 %v578
  %v651 = vunpack.c.h.b16 %v578
  %v652 = vunpack.c.l.b16 %v579
  %v653 = vunpack.c.h.b16 %v579
  %v654 = vunpack.c.l.b16 %v580
  %v655 = vunpack.c.h.b16 %v580
  %v656 = vunpack.c.l.b16 %v581
  %v657 = vunpack.c.h.b16 %v581
  %v658 = vunpack.c.l.b16 %v582
  %v659 = vunpack.c.h.b16 %v582
  %v660 = vunpack.c.l.b16 %v583
  %v661 = vunpack.c.h.b16 %v583
  %v662 = vunpack.c.l.b16 %v584
  %v663 = vunpack.c.h.b16 %v584
  %v664 = vunpack.c.l.b16 %v585
  %v665 = vunpack.c.h.b16 %v585
  %v666 = vunpack.c.l.b16 %v586
  %v667 = vunpack.c.h.b16 %v586
  %v668 = vunpack.c.l.b16 %v587
  %v669 = vunpack.c.h.b16 %v587
  %v670 = vunpack.c.l.b16 %v588
  %v671 = vunpack.c.h.b16 %v588
  %v672 = vunpack.c.l.b16 %v589
  %v673 = vunpack.c.h.b16 %v589
  %v674 = vunpack.c.l.b16 %v590
  %v675 = vunpack.c.h.b16 %v590
  %v676 = vunpack.c.l.b16 %v591
  %v677 = vunpack.c.h.b16 %v591
  %v678 = vunpack.c.l.b16 %v592
  %v679 = vunpack.c.h.b16 %v592
  %v680 = vunpack.c.l.b16 %v593
  %v681 = vunpack.c.h.b16 %v593
  %v682 = vunpack.c.l.b16 %v594
  %v683 = vunpack.c.h.b16 %v594
  %v684 = vunpack.c.l.b16 %v595
  %v685 = vunpack.c.h.b16 %v595
  %v686 = vunpack.c.l.b16 %v596
  %v687 = vunpack.c.h.b16 %v596
  %v688 = vunpack.c.l.b16 %v597
  %v689 = vunpack.c.h.b16 %v597
  %v690 = vunpack.c.l.b16 %v598
  %v691 = vunpack.c.h.b16 %v598
  %v692 = vunpack.c.l.b16 %v599
  %v693 = vunpack.c.h.b16 %v599
  %v694 = vunpack.c.l.b16 %v600
  %v695 = vunpack.c.h.b16 %v600
  %v696 = vunpack.c.l.b16 %v601
  %v697 = vunpack.c.h.b16 %v601
  %v698 = vpack.c.b16 %v638, %v634
  %v699 = vpack.c.b16 %v639, %v635
  %v700 = vpack.c.b16 %v640, %v636
  %v701 = vpack.c.b16 %v641, %v637
  %v702 = vpack.c.b16 %v646, %v642
  %v703 = vpack.c.b16 %v647, %v643
  %v704 = vpack.c.b16 %v648, %v644
  %v705 = vpack.c.b16 %v649, %v645
  %v706 = vpack.c.b16 %v654, %v650
  %v707 = vpack.c.b16 %v655, %v651
  %v708 = vpack.c.b16 %v656, %v652
  %v709 = vpack.c.b16 %v657, %v653
  %v710 = vpack.c.b16 %v662, %v658
  %v711 = vpack.c.b16 %v663, %v659
  %v712 = vpack.c.b16 %v664, %v660
  %v713 = vpack.c.b16 %v665, %v661
  %v714 = vpack.c.b16 %v670, %v666
  %v715 = vpack.c.b16 %v671, %v667
  %v716 = vpack.c.b16 %v672, %v668
  %v717 = vpack.c.b16 %v673, %v669
  %v718 = vpack.c.b16 %v678, %v674
  %v719 = vpack.c.b16 %v679, %v675
  %v720 = vpack.c.b16 %v680, %v676
  %v721 = vpack.c.b16 %v681, %v677
  %v722 = vpack.c.b16 %v686, %v682
  %v723 = vpack.c.b16 %v687, %v683
  %v724 = vpack.c.b16 %v688, %v684
  %v725 = vpack.c.b16 %v689, %v685
  %v726 = vpack.c.b16 %v694, %v690
  %v727 = vpack.c.b16 %v695, %v691
  %v728 = vpack.c.b16 %v696, %v692
  %v729 = vpack.c.b16 %v697, %v693
  %762 = vmatpush.bf16.msra.mxu0 %v726
  %763 = vmatpush.bf16.msra.mxu0 %v722
  %764 = vmatpush.bf16.msra.mxu0 %v718
  %765 = vmatpush.bf16.msra.mxu0 %v714
  %766 = vmatpush.bf16.msra.mxu0 %v710
  %767 = vmatpush.bf16.msra.mxu0 %v706
  %768 = vmatpush.bf16.msra.mxu0 %v702
  %769 = vmatpush.bf16.msra.mxu0 %v698
  %770 = vmatmul.bf16.gmra.mxu0 0
  %v771 = vpop.f32.mrf.mxu0
  %v772 = vadd.f32 0.0, %v771
  %v773 = vpop.f32.mrf.mxu0
  %v774 = vadd.f32 0.0, %v773
  %775 = vdwg.mxu0
  %776 = vmatpush.bf16.msra.mxu0 %v727
  %777 = vmatpush.bf16.msra.mxu0 %v723
  %778 = vmatpush.bf16.msra.mxu0 %v719
  %779 = vmatpush.bf16.msra.mxu0 %v715
  %780 = vmatpush.bf16.msra.mxu0 %v711
  %781 = vmatpush.bf16.msra.mxu0 %v707
  %782 = vmatpush.bf16.msra.mxu0 %v703
  %783 = vmatpush.bf16.msra.mxu0 %v699
  %784 = vmatmul.bf16.gmra.mxu0 0
  %v785 = vpop.f32.mrf.mxu0
  %v786 = vadd.f32 0.0, %v785
  %v787 = vpop.f32.mrf.mxu0
  %v788 = vadd.f32 0.0, %v787
  %789 = vdwg.mxu0
  %790 = vmatpush.bf16.msra.mxu0 %v728
  %791 = vmatpush.bf16.msra.mxu0 %v724
  %792 = vmatpush.bf16.msra.mxu0 %v720
  %793 = vmatpush.bf16.msra.mxu0 %v716
  %794 = vmatpush.bf16.msra.mxu0 %v712
  %795 = vmatpush.bf16.msra.mxu0 %v708
  %796 = vmatpush.bf16.msra.mxu0 %v704
  %797 = vmatpush.bf16.msra.mxu0 %v700
  %798 = vmatmul.bf16.gmra.mxu0 0
  %v799 = vpop.f32.mrf.mxu0
  %v800 = vadd.f32 0.0, %v799
  %v801 = vpop.f32.mrf.mxu0
  %v802 = vadd.f32 0.0, %v801
  %803 = vdwg.mxu0
  %804 = vmatpush.bf16.msra.mxu0 %v729
  %805 = vmatpush.bf16.msra.mxu0 %v725
  %806 = vmatpush.bf16.msra.mxu0 %v721
  %807 = vmatpush.bf16.msra.mxu0 %v717
  %808 = vmatpush.bf16.msra.mxu0 %v713
  %809 = vmatpush.bf16.msra.mxu0 %v709
  %810 = vmatpush.bf16.msra.mxu0 %v705
  %811 = vmatpush.bf16.msra.mxu0 %v701
  %812 = vmatmul.bf16.gmra.mxu0 0
  %v813 = vpop.f32.mrf.mxu0
  %v814 = vadd.f32 0.0, %v813
  %v815 = vpop.f32.mrf.mxu0
  %v816 = vadd.f32 0.0, %v815
  %817 = vdwg.mxu0
  %v818 = vadd.f32 %v562, %v772
  %v819 = vadd.f32 %v563, %v786
  %v820 = vadd.f32 %v564, %v800
  %v821 = vadd.f32 %v565, %v814
  %v822 = vadd.f32 %v566, %v774
  %v823 = vadd.f32 %v567, %v788
  %v824 = vadd.f32 %v568, %v802
  %v825 = vadd.f32 %v569, %v816
  %v826 = vmul.f32 %v818, 0.5
  %v827 = vmul.f32 %v822, 0.5
  %v828 = vtanh.pop %v826
  %v829 = vtanh.pop %v827
  %v830 = vmul.f32 %v828, 0.5
  %v831 = vmul.f32 %v829, 0.5
  %v832 = vadd.f32 %v830, 0.5
  %v833 = vadd.f32 %v831, 0.5
  %v834 = vmul.f32 %v819, 0.5
  %v835 = vmul.f32 %v823, 0.5
  %v836 = vtanh.pop %v834
  %v837 = vtanh.pop %v835
  %v838 = vmul.f32 %v836, 0.5
  %v839 = vmul.f32 %v837, 0.5
  %v840 = vadd.f32 %v838, 0.5
  %v841 = vadd.f32 %v839, 0.5
  %v842 = vtanh.pop %v820
  %v843 = vtanh.pop %v824
  %v844 = vmul.f32 %v821, 0.5
  %v845 = vmul.f32 %v825, 0.5
  %v846 = vtanh.pop %v844
  %v847 = vtanh.pop %v845
  %v848 = vmul.f32 %v846, 0.5
  %v849 = vmul.f32 %v847, 0.5
  %v850 = vadd.f32 %v848, 0.5
  %v851 = vadd.f32 %v849, 0.5
  %v852 = vmul.f32 %v840, 0.0
  %v853 = vmul.f32 %v841, 0.0
  %v854 = vmul.f32 %v832, %v842
  %v855 = vmul.f32 %v833, %v843
  %v856 = vadd.f32 %v852, %v854
  %v857 = vadd.f32 %v853, %v855
  %v858 = vtanh.pop %v856
  %v859 = vtanh.pop %v857
  %v860 = vmul.f32 %v850, %v858
  %v861 = vmul.f32 %v851, %v859
  %v862 = vpack.c.bf16 %v860, %v860
  %v863 = vpack.c.bf16 %v861, %v861
  %864 = vst [vmem:[#allocation3] sm:$0xf] %v862
  %865 = vst [vmem:[#allocation3 + $0x4] sm:$0xf] %v863
  %s866 = smul.u32 2, 4
  %s867 = smul.addr %s866, 8
  %s868 = scalar_lea.vmem [#allocation2], %s867
  %v869 = vld [vmem:[%s868] sm:$0xff]
  %v870 = vld [vmem:[%s868 + $0x8] sm:$0xff]
  %v871 = vld [vmem:[%s868 + $0x10] sm:$0xff]
  %v872 = vld [vmem:[%s868 + $0x18] sm:$0xff]
  %v873 = vld [vmem:[%s868 + $0x20] sm:$0xff]
  %v874 = vld [vmem:[%s868 + $0x28] sm:$0xff]
  %v875 = vld [vmem:[%s868 + $0x30] sm:$0xff]
  %v876 = vld [vmem:[%s868 + $0x38] sm:$0xff]
  %v877 = vld [vmem:[%s2] sm:$0xff]
  %v878 = vld [vmem:[%s2 + $0x8] sm:$0xff]
  %v879 = vld [vmem:[%s2 + $0x10] sm:$0xff]
  %v880 = vld [vmem:[%s2 + $0x18] sm:$0xff]
  %v881 = vld [vmem:[%s2 + $0x20] sm:$0xff]
  %v882 = vld [vmem:[%s2 + $0x28] sm:$0xff]
  %v883 = vld [vmem:[%s2 + $0x30] sm:$0xff]
  %v884 = vld [vmem:[%s2 + $0x38] sm:$0xff]
  %v885 = vld [vmem:[%s2 + $0x40] sm:$0xff]
  %v886 = vld [vmem:[%s2 + $0x48] sm:$0xff]
  %v887 = vld [vmem:[%s2 + $0x50] sm:$0xff]
  %v888 = vld [vmem:[%s2 + $0x58] sm:$0xff]
  %v889 = vld [vmem:[%s2 + $0x60] sm:$0xff]
  %v890 = vld [vmem:[%s2 + $0x68] sm:$0xff]
  %v891 = vld [vmem:[%s2 + $0x70] sm:$0xff]
  %v892 = vld [vmem:[%s2 + $0x78] sm:$0xff]
  %v893 = vld [vmem:[%s2 + $0x80] sm:$0xff]
  %v894 = vld [vmem:[%s2 + $0x88] sm:$0xff]
  %v895 = vld [vmem:[%s2 + $0x90] sm:$0xff]
  %v896 = vld [vmem:[%s2 + $0x98] sm:$0xff]
  %v897 = vld [vmem:[%s2 + $0xa0] sm:$0xff]
  %v898 = vld [vmem:[%s2 + $0xa8] sm:$0xff]
  %v899 = vld [vmem:[%s2 + $0xb0] sm:$0xff]
  %v900 = vld [vmem:[%s2 + $0xb8] sm:$0xff]
  %v901 = vld [vmem:[%s2 + $0xc0] sm:$0xff]
  %v902 = vld [vmem:[%s2 + $0xc8] sm:$0xff]
  %v903 = vld [vmem:[%s2 + $0xd0] sm:$0xff]
  %v904 = vld [vmem:[%s2 + $0xd8] sm:$0xff]
  %v905 = vld [vmem:[%s2 + $0xe0] sm:$0xff]
  %v906 = vld [vmem:[%s2 + $0xe8] sm:$0xff]
  %v907 = vld [vmem:[%s2 + $0xf0] sm:$0xff]
  %v908 = vld [vmem:[%s2 + $0xf8] sm:$0xff]
  %v911 = vunpack.c.l.b16 %v862
  %v912 = vunpack.c.l.b16 %v863
  %v913 = vpack.c.b16 %v912, %v911
  %v947 = vunpack.c.l.b16 %v877
  %v948 = vunpack.c.h.b16 %v877
  %v949 = vunpack.c.l.b16 %v878
  %v950 = vunpack.c.h.b16 %v878
  %v951 = vunpack.c.l.b16 %v879
  %v952 = vunpack.c.h.b16 %v879
  %v953 = vunpack.c.l.b16 %v880
  %v954 = vunpack.c.h.b16 %v880
  %v955 = vunpack.c.l.b16 %v881
  %v956 = vunpack.c.h.b16 %v881
  %v957 = vunpack.c.l.b16 %v882
  %v958 = vunpack.c.h.b16 %v882
  %v959 = vunpack.c.l.b16 %v883
  %v960 = vunpack.c.h.b16 %v883
  %v961 = vunpack.c.l.b16 %v884
  %v962 = vunpack.c.h.b16 %v884
  %v963 = vunpack.c.l.b16 %v885
  %v964 = vunpack.c.h.b16 %v885
  %v965 = vunpack.c.l.b16 %v886
  %v966 = vunpack.c.h.b16 %v886
  %v967 = vunpack.c.l.b16 %v887
  %v968 = vunpack.c.h.b16 %v887
  %v969 = vunpack.c.l.b16 %v888
  %v970 = vunpack.c.h.b16 %v888
  %v971 = vunpack.c.l.b16 %v889
  %v972 = vunpack.c.h.b16 %v889
  %v973 = vunpack.c.l.b16 %v890
  %v974 = vunpack.c.h.b16 %v890
  %v975 = vunpack.c.l.b16 %v891
  %v976 = vunpack.c.h.b16 %v891
  %v977 = vunpack.c.l.b16 %v892
  %v978 = vunpack.c.h.b16 %v892
  %v979 = vunpack.c.l.b16 %v893
  %v980 = vunpack.c.h.b16 %v893
  %v981 = vunpack.c.l.b16 %v894
  %v982 = vunpack.c.h.b16 %v894
  %v983 = vunpack.c.l.b16 %v895
  %v984 = vunpack.c.h.b16 %v895
  %v985 = vunpack.c.l.b16 %v896
  %v986 = vunpack.c.h.b16 %v896
  %v987 = vunpack.c.l.b16 %v897
  %v988 = vunpack.c.h.b16 %v897
  %v989 = vunpack.c.l.b16 %v898
  %v990 = vunpack.c.h.b16 %v898
  %v991 = vunpack.c.l.b16 %v899
  %v992 = vunpack.c.h.b16 %v899
  %v993 = vunpack.c.l.b16 %v900
  %v994 = vunpack.c.h.b16 %v900
  %v995 = vunpack.c.l.b16 %v901
  %v996 = vunpack.c.h.b16 %v901
  %v997 = vunpack.c.l.b16 %v902
  %v998 = vunpack.c.h.b16 %v902
  %v999 = vunpack.c.l.b16 %v903
  %v1000 = vunpack.c.h.b16 %v903
  %v1001 = vunpack.c.l.b16 %v904
  %v1002 = vunpack.c.h.b16 %v904
  %v1003 = vunpack.c.l.b16 %v905
  %v1004 = vunpack.c.h.b16 %v905
  %v1005 = vunpack.c.l.b16 %v906
  %v1006 = vunpack.c.h.b16 %v906
  %v1007 = vunpack.c.l.b16 %v907
  %v1008 = vunpack.c.h.b16 %v907
  %v1009 = vunpack.c.l.b16 %v908
  %v1010 = vunpack.c.h.b16 %v908
  %v1011 = vpack.c.b16 %v951, %v947
  %v1012 = vpack.c.b16 %v952, %v948
  %v1013 = vpack.c.b16 %v953, %v949
  %v1014 = vpack.c.b16 %v954, %v950
  %v1015 = vpack.c.b16 %v959, %v955
  %v1016 = vpack.c.b16 %v960, %v956
  %v1017 = vpack.c.b16 %v961, %v957
  %v1018 = vpack.c.b16 %v962, %v958
  %v1019 = vpack.c.b16 %v967, %v963
  %v1020 = vpack.c.b16 %v968, %v964
  %v1021 = vpack.c.b16 %v969, %v965
  %v1022 = vpack.c.b16 %v970, %v966
  %v1023 = vpack.c.b16 %v975, %v971
  %v1024 = vpack.c.b16 %v976, %v972
  %v1025 = vpack.c.b16 %v977, %v973
  %v1026 = vpack.c.b16 %v978, %v974
  %v1027 = vpack.c.b16 %v983, %v979
  %v1028 = vpack.c.b16 %v984, %v980
  %v1029 = vpack.c.b16 %v985, %v981
  %v1030 = vpack.c.b16 %v986, %v982
  %v1031 = vpack.c.b16 %v991, %v987
  %v1032 = vpack.c.b16 %v992, %v988
  %v1033 = vpack.c.b16 %v993, %v989
  %v1034 = vpack.c.b16 %v994, %v990
  %v1035 = vpack.c.b16 %v999, %v995
  %v1036 = vpack.c.b16 %v1000, %v996
  %v1037 = vpack.c.b16 %v1001, %v997
  %v1038 = vpack.c.b16 %v1002, %v998
  %v1039 = vpack.c.b16 %v1007, %v1003
  %v1040 = vpack.c.b16 %v1008, %v1004
  %v1041 = vpack.c.b16 %v1009, %v1005
  %v1042 = vpack.c.b16 %v1010, %v1006
  %1075 = vmatpush.bf16.msra.mxu0 %v1039
  %1076 = vmatpush.bf16.msra.mxu0 %v1035
  %1077 = vmatpush.bf16.msra.mxu0 %v1031
  %1078 = vmatpush.bf16.msra.mxu0 %v1027
  %1079 = vmatpush.bf16.msra.mxu0 %v1023
  %1080 = vmatpush.bf16.msra.mxu0 %v1019
  %1081 = vmatpush.bf16.msra.mxu0 %v1015
  %1082 = vmatpush.bf16.msra.mxu0 %v1011
  %1083 = vmatmul.bf16.gmra.mxu0 %v913
  %v1084 = vpop.f32.mrf.mxu0
  %v1085 = vadd.f32 0.0, %v1084
  %v1086 = vpop.f32.mrf.mxu0
  %v1087 = vadd.f32 0.0, %v1086
  %1088 = vdwg.mxu0
  %1089 = vmatpush.bf16.msra.mxu0 %v1040
  %1090 = vmatpush.bf16.msra.mxu0 %v1036
  %1091 = vmatpush.bf16.msra.mxu0 %v1032
  %1092 = vmatpush.bf16.msra.mxu0 %v1028
  %1093 = vmatpush.bf16.msra.mxu0 %v1024
  %1094 = vmatpush.bf16.msra.mxu0 %v1020
  %1095 = vmatpush.bf16.msra.mxu0 %v1016
  %1096 = vmatpush.bf16.msra.mxu0 %v1012
  %1097 = vmatmul.bf16.gmra.mxu0 %v913
  %v1098 = vpop.f32.mrf.mxu0
  %v1099 = vadd.f32 0.0, %v1098
  %v1100 = vpop.f32.mrf.mxu0
  %v1101 = vadd.f32 0.0, %v1100
  %1102 = vdwg.mxu0
  %1103 = vmatpush.bf16.msra.mxu0 %v1041
  %1104 = vmatpush.bf16.msra.mxu0 %v1037
  %1105 = vmatpush.bf16.msra.mxu0 %v1033
  %1106 = vmatpush.bf16.msra.mxu0 %v1029
  %1107 = vmatpush.bf16.msra.mxu0 %v1025
  %1108 = vmatpush.bf16.msra.mxu0 %v1021
  %1109 = vmatpush.bf16.msra.mxu0 %v1017
  %1110 = vmatpush.bf16.msra.mxu0 %v1013
  %1111 = vmatmul.bf16.gmra.mxu0 %v913
  %v1112 = vpop.f32.mrf.mxu0
  %v1113 = vadd.f32 0.0, %v1112
  %v1114 = vpop.f32.mrf.mxu0
  %v1115 = vadd.f32 0.0, %v1114
  %1116 = vdwg.mxu0
  %1117 = vmatpush.bf16.msra.mxu0 %v1042
  %1118 = vmatpush.bf16.msra.mxu0 %v1038
  %1119 = vmatpush.bf16.msra.mxu0 %v1034
  %1120 = vmatpush.bf16.msra.mxu0 %v1030
  %1121 = vmatpush.bf16.msra.mxu0 %v1026
  %1122 = vmatpush.bf16.msra.mxu0 %v1022
  %1123 = vmatpush.bf16.msra.mxu0 %v1018
  %1124 = vmatpush.bf16.msra.mxu0 %v1014
  %1125 = vmatmul.bf16.gmra.mxu0 %v913
  %v1126 = vpop.f32.mrf.mxu0
  %v1127 = vadd.f32 0.0, %v1126
  %v1128 = vpop.f32.mrf.mxu0
  %v1129 = vadd.f32 0.0, %v1128
  %1130 = vdwg.mxu0
  %v1131 = vadd.f32 %v869, %v1085
  %v1132 = vadd.f32 %v870, %v1099
  %v1133 = vadd.f32 %v871, %v1113
  %v1134 = vadd.f32 %v872, %v1127
  %v1135 = vadd.f32 %v873, %v1087
  %v1136 = vadd.f32 %v874, %v1101
  %v1137 = vadd.f32 %v875, %v1115
  %v1138 = vadd.f32 %v876, %v1129
  %v1139 = vmul.f32 %v1131, 0.5
  %v1140 = vmul.f32 %v1135, 0.5
  %v1141 = vtanh.pop %v1139
  %v1142 = vtanh.pop %v1140
  %v1143 = vmul.f32 %v1141, 0.5
  %v1144 = vmul.f32 %v1142, 0.5
  %v1145 = vadd.f32 %v1143, 0.5
  %v1146 = vadd.f32 %v1144, 0.5
  %v1147 = vmul.f32 %v1132, 0.5
  %v1148 = vmul.f32 %v1136, 0.5
  %v1149 = vtanh.pop %v1147
  %v1150 = vtanh.pop %v1148
  %v1151 = vmul.f32 %v1149, 0.5
  %v1152 = vmul.f32 %v1150, 0.5
  %v1153 = vadd.f32 %v1151, 0.5
  %v1154 = vadd.f32 %v1152, 0.5
  %v1155 = vtanh.pop %v1133
  %v1156 = vtanh.pop %v1137
  %v1157 = vmul.f32 %v1134, 0.5
  %v1158 = vmul.f32 %v1138, 0.5
  %v1159 = vtanh.pop %v1157
  %v1160 = vtanh.pop %v1158
  %v1161 = vmul.f32 %v1159, 0.5
  %v1162 = vmul.f32 %v1160, 0.5
  %v1163 = vadd.f32 %v1161, 0.5
  %v1164 = vadd.f32 %v1162, 0.5
  %v1165 = vmul.f32 %v1153, %v856
  %v1166 = vmul.f32 %v1154, %v857
  %v1167 = vmul.f32 %v1145, %v1155
  %v1168 = vmul.f32 %v1146, %v1156
  %v1169 = vadd.f32 %v1165, %v1167
  %v1170 = vadd.f32 %v1166, %v1168
  %v1171 = vtanh.pop %v1169
  %v1172 = vtanh.pop %v1170
  %v1173 = vmul.f32 %v1163, %v1171
  %v1174 = vmul.f32 %v1164, %v1172
  %v1175 = vpack.c.bf16 %v1173, %v1173
  %v1176 = vpack.c.bf16 %v1174, %v1174
  %s1177 = scalar_lea.vmem [#allocation3], 8
  %1178 = vst [vmem:[%s1177] sm:$0xf] %v1175
  %1179 = vst [vmem:[%s1177 + $0x4] sm:$0xf] %v1176
  %s1180 = smul.u32 4, 4
  %s1181 = smul.addr %s1180, 8
  %s1182 = scalar_lea.vmem [#allocation2], %s1181
  %v1183 = vld [vmem:[%s1182] sm:$0xff]
  %v1184 = vld [vmem:[%s1182 + $0x8] sm:$0xff]
  %v1185 = vld [vmem:[%s1182 + $0x10] sm:$0xff]
  %v1186 = vld [vmem:[%s1182 + $0x18] sm:$0xff]
  %v1187 = vld [vmem:[%s1182 + $0x20] sm:$0xff]
  %v1188 = vld [vmem:[%s1182 + $0x28] sm:$0xff]
  %v1189 = vld [vmem:[%s1182 + $0x30] sm:$0xff]
  %v1190 = vld [vmem:[%s1182 + $0x38] sm:$0xff]
  %v1191 = vld [vmem:[%s2] sm:$0xff]
  %v1192 = vld [vmem:[%s2 + $0x8] sm:$0xff]
  %v1193 = vld [vmem:[%s2 + $0x10] sm:$0xff]
  %v1194 = vld [vmem:[%s2 + $0x18] sm:$0xff]
  %v1195 = vld [vmem:[%s2 + $0x20] sm:$0xff]
  %v1196 = vld [vmem:[%s2 + $0x28] sm:$0xff]
  %v1197 = vld [vmem:[%s2 + $0x30] sm:$0xff]
  %v1198 = vld [vmem:[%s2 + $0x38] sm:$0xff]
  %v1199 = vld [vmem:[%s2 + $0x40] sm:$0xff]
  %v1200 = vld [vmem:[%s2 + $0x48] sm:$0xff]
  %v1201 = vld [vmem:[%s2 + $0x50] sm:$0xff]
  %v1202 = vld [vmem:[%s2 + $0x58] sm:$0xff]
  %v1203 = vld [vmem:[%s2 + $0x60] sm:$0xff]
  %v1204 = vld [vmem:[%s2 + $0x68] sm:$0xff]
  %v1205 = vld [vmem:[%s2 + $0x70] sm:$0xff]
  %v1206 = vld [vmem:[%s2 + $0x78] sm:$0xff]
  %v1207 = vld [vmem:[%s2 + $0x80] sm:$0xff]
  %v1208 = vld [vmem:[%s2 + $0x88] sm:$0xff]
  %v1209 = vld [vmem:[%s2 + $0x90] sm:$0xff]
  %v1210 = vld [vmem:[%s2 + $0x98] sm:$0xff]
  %v1211 = vld [vmem:[%s2 + $0xa0] sm:$0xff]
  %v1212 = vld [vmem:[%s2 + $0xa8] sm:$0xff]
  %v1213 = vld [vmem:[%s2 + $0xb0] sm:$0xff]
  %v1214 = vld [vmem:[%s2 + $0xb8] sm:$0xff]
  %v1215 = vld [vmem:[%s2 + $0xc0] sm:$0xff]
  %v1216 = vld [vmem:[%s2 + $0xc8] sm:$0xff]
  %v1217 = vld [vmem:[%s2 + $0xd0] sm:$0xff]
  %v1218 = vld [vmem:[%s2 + $0xd8] sm:$0xff]
  %v1219 = vld [vmem:[%s2 + $0xe0] sm:$0xff]
  %v1220 = vld [vmem:[%s2 + $0xe8] sm:$0xff]
  %v1221 = vld [vmem:[%s2 + $0xf0] sm:$0xff]
  %v1222 = vld [vmem:[%s2 + $0xf8] sm:$0xff]
  %v1225 = vunpack.c.l.b16 %v1175
  %v1226 = vunpack.c.l.b16 %v1176
  %v1227 = vpack.c.b16 %v1226, %v1225
  %v1261 = vunpack.c.l.b16 %v1191
  %v1262 = vunpack.c.h.b16 %v1191
  %v1263 = vunpack.c.l.b16 %v1192
  %v1264 = vunpack.c.h.b16 %v1192
  %v1265 = vunpack.c.l.b16 %v1193
  %v1266 = vunpack.c.h.b16 %v1193
  %v1267 = vunpack.c.l.b16 %v1194
  %v1268 = vunpack.c.h.b16 %v1194
  %v1269 = vunpack.c.l.b16 %v1195
  %v1270 = vunpack.c.h.b16 %v1195
  %v1271 = vunpack.c.l.b16 %v1196
  %v1272 = vunpack.c.h.b16 %v1196
  %v1273 = vunpack.c.l.b16 %v1197
  %v1274 = vunpack.c.h.b16 %v1197
  %v1275 = vunpack.c.l.b16 %v1198
  %v1276 = vunpack.c.h.b16 %v1198
  %v1277 = vunpack.c.l.b16 %v1199
  %v1278 = vunpack.c.h.b16 %v1199
  %v1279 = vunpack.c.l.b16 %v1200
  %v1280 = vunpack.c.h.b16 %v1200
  %v1281 = vunpack.c.l.b16 %v1201
  %v1282 = vunpack.c.h.b16 %v1201
  %v1283 = vunpack.c.l.b16 %v1202
  %v1284 = vunpack.c.h.b16 %v1202
  %v1285 = vunpack.c.l.b16 %v1203
  %v1286 = vunpack.c.h.b16 %v1203
  %v1287 = vunpack.c.l.b16 %v1204
  %v1288 = vunpack.c.h.b16 %v1204
  %v1289 = vunpack.c.l.b16 %v1205
  %v1290 = vunpack.c.h.b16 %v1205
  %v1291 = vunpack.c.l.b16 %v1206
  %v1292 = vunpack.c.h.b16 %v1206
  %v1293 = vunpack.c.l.b16 %v1207
  %v1294 = vunpack.c.h.b16 %v1207
  %v1295 = vunpack.c.l.b16 %v1208
  %v1296 = vunpack.c.h.b16 %v1208
  %v1297 = vunpack.c.l.b16 %v1209
  %v1298 = vunpack.c.h.b16 %v1209
  %v1299 = vunpack.c.l.b16 %v1210
  %v1300 = vunpack.c.h.b16 %v1210
  %v1301 = vunpack.c.l.b16 %v1211
  %v1302 = vunpack.c.h.b16 %v1211
  %v1303 = vunpack.c.l.b16 %v1212
  %v1304 = vunpack.c.h.b16 %v1212
  %v1305 = vunpack.c.l.b16 %v1213
  %v1306 = vunpack.c.h.b16 %v1213
  %v1307 = vunpack.c.l.b16 %v1214
  %v1308 = vunpack.c.h.b16 %v1214
  %v1309 = vunpack.c.l.b16 %v1215
  %v1310 = vunpack.c.h.b16 %v1215
  %v1311 = vunpack.c.l.b16 %v1216
  %v1312 = vunpack.c.h.b16 %v1216
  %v1313 = vunpack.c.l.b16 %v1217
  %v1314 = vunpack.c.h.b16 %v1217
  %v1315 = vunpack.c.l.b16 %v1218
  %v1316 = vunpack.c.h.b16 %v1218
  %v1317 = vunpack.c.l.b16 %v1219
  %v1318 = vunpack.c.h.b16 %v1219
  %v1319 = vunpack.c.l.b16 %v1220
  %v1320 = vunpack.c.h.b16 %v1220
  %v1321 = vunpack.c.l.b16 %v1221
  %v1322 = vunpack.c.h.b16 %v1221
  %v1323 = vunpack.c.l.b16 %v1222
  %v1324 = vunpack.c.h.b16 %v1222
  %v1325 = vpack.c.b16 %v1265, %v1261
  %v1326 = vpack.c.b16 %v1266, %v1262
  %v1327 = vpack.c.b16 %v1267, %v1263
  %v1328 = vpack.c.b16 %v1268, %v1264
  %v1329 = vpack.c.b16 %v1273, %v1269
  %v1330 = vpack.c.b16 %v1274, %v1270
  %v1331 = vpack.c.b16 %v1275, %v1271
  %v1332 = vpack.c.b16 %v1276, %v1272
  %v1333 = vpack.c.b16 %v1281, %v1277
  %v1334 = vpack.c.b16 %v1282, %v1278
  %v1335 = vpack.c.b16 %v1283, %v1279
  %v1336 = vpack.c.b16 %v1284, %v1280
  %v1337 = vpack.c.b16 %v1289, %v1285
  %v1338 = vpack.c.b16 %v1290, %v1286
  %v1339 = vpack.c.b16 %v1291, %v1287
  %v1340 = vpack.c.b16 %v1292, %v1288
  %v1341 = vpack.c.b16 %v1297, %v1293
  %v1342 = vpack.c.b16 %v1298, %v1294
  %v1343 = vpack.c.b16 %v1299, %v1295
  %v1344 = vpack.c.b16 %v1300, %v1296
  %v1345 = vpack.c.b16 %v1305, %v1301
  %v1346 = vpack.c.b16 %v1306, %v1302
  %v1347 = vpack.c.b16 %v1307, %v1303
  %v1348 = vpack.c.b16 %v1308, %v1304
  %v1349 = vpack.c.b16 %v1313, %v1309
  %v1350 = vpack.c.b16 %v1314, %v1310
  %v1351 = vpack.c.b16 %v1315, %v1311
  %v1352 = vpack.c.b16 %v1316, %v1312
  %v1353 = vpack.c.b16 %v1321, %v1317
  %v1354 = vpack.c.b16 %v1322, %v1318
  %v1355 = vpack.c.b16 %v1323, %v1319
  %v1356 = vpack.c.b16 %v1324, %v1320
  %1389 = vmatpush.bf16.msra.mxu0 %v1353
  %1390 = vmatpush.bf16.msra.mxu0 %v1349
  %1391 = vmatpush.bf16.msra.mxu0 %v1345
  %1392 = vmatpush.bf16.msra.mxu0 %v1341
  %1393 = vmatpush.bf16.msra.mxu0 %v1337
  %1394 = vmatpush.bf16.msra.mxu0 %v1333
  %1395 = vmatpush.bf16.msra.mxu0 %v1329
  %1396 = vmatpush.bf16.msra.mxu0 %v1325
  %1397 = vmatmul.bf16.gmra.mxu0 %v1227
  %v1398 = vpop.f32.mrf.mxu0
  %v1399 = vadd.f32 0.0, %v1398
  %v1400 = vpop.f32.mrf.mxu0
  %v1401 = vadd.f32 0.0, %v1400
  %1402 = vdwg.mxu0
  %1403 = vmatpush.bf16.msra.mxu0 %v1354
  %1404 = vmatpush.bf16.msra.mxu0 %v1350
  %1405 = vmatpush.bf16.msra.mxu0 %v1346
  %1406 = vmatpush.bf16.msra.mxu0 %v1342
  %1407 = vmatpush.bf16.msra.mxu0 %v1338
  %1408 = vmatpush.bf16.msra.mxu0 %v1334
  %1409 = vmatpush.bf16.msra.mxu0 %v1330
  %1410 = vmatpush.bf16.msra.mxu0 %v1326
  %1411 = vmatmul.bf16.gmra.mxu0 %v1227
  %v1412 = vpop.f32.mrf.mxu0
  %v1413 = vadd.f32 0.0, %v1412
  %v1414 = vpop.f32.mrf.mxu0
  %v1415 = vadd.f32 0.0, %v1414
  %1416 = vdwg.mxu0
  %1417 = vmatpush.bf16.msra.mxu0 %v1355
  %1418 = vmatpush.bf16.msra.mxu0 %v1351
  %1419 = vmatpush.bf16.msra.mxu0 %v1347
  %1420 = vmatpush.bf16.msra.mxu0 %v1343
  %1421 = vmatpush.bf16.msra.mxu0 %v1339
  %1422 = vmatpush.bf16.msra.mxu0 %v1335
  %1423 = vmatpush.bf16.msra.mxu0 %v1331
  %1424 = vmatpush.bf16.msra.mxu0 %v1327
  %1425 = vmatmul.bf16.gmra.mxu0 %v1227
  %v1426 = vpop.f32.mrf.mxu0
  %v1427 = vadd.f32 0.0, %v1426
  %v1428 = vpop.f32.mrf.mxu0
  %v1429 = vadd.f32 0.0, %v1428
  %1430 = vdwg.mxu0
  %1431 = vmatpush.bf16.msra.mxu0 %v1356
  %1432 = vmatpush.bf16.msra.mxu0 %v1352
  %1433 = vmatpush.bf16.msra.mxu0 %v1348
  %1434 = vmatpush.bf16.msra.mxu0 %v1344
  %1435 = vmatpush.bf16.msra.mxu0 %v1340
  %1436 = vmatpush.bf16.msra.mxu0 %v1336
  %1437 = vmatpush.bf16.msra.mxu0 %v1332
  %1438 = vmatpush.bf16.msra.mxu0 %v1328
  %1439 = vmatmul.bf16.gmra.mxu0 %v1227
  %v1440 = vpop.f32.mrf.mxu0
  %v1441 = vadd.f32 0.0, %v1440
  %v1442 = vpop.f32.mrf.mxu0
  %v1443 = vadd.f32 0.0, %v1442
  %1444 = vdwg.mxu0
  %v1445 = vadd.f32 %v1183, %v1399
  %v1446 = vadd.f32 %v1184, %v1413
  %v1447 = vadd.f32 %v1185, %v1427
  %v1448 = vadd.f32 %v1186, %v1441
  %v1449 = vadd.f32 %v1187, %v1401
  %v1450 = vadd.f32 %v1188, %v1415
  %v1451 = vadd.f32 %v1189, %v1429
  %v1452 = vadd.f32 %v1190, %v1443
  %v1453 = vmul.f32 %v1445, 0.5
  %v1454 = vmul.f32 %v1449, 0.5
  %v1455 = vtanh.pop %v1453
  %v1456 = vtanh.pop %v1454
  %v1457 = vmul.f32 %v1455, 0.5
  %v1458 = vmul.f32 %v1456, 0.5
  %v1459 = vadd.f32 %v1457, 0.5
  %v1460 = vadd.f32 %v1458, 0.5
  %v1461 = vmul.f32 %v1446, 0.5
  %v1462 = vmul.f32 %v1450, 0.5
  %v1463 = vtanh.pop %v1461
  %v1464 = vtanh.pop %v1462
  %v1465 = vmul.f32 %v1463, 0.5
  %v1466 = vmul.f32 %v1464, 0.5
  %v1467 = vadd.f32 %v1465, 0.5
  %v1468 = vadd.f32 %v1466, 0.5
  %v1469 = vtanh.pop %v1447
  %v1470 = vtanh.pop %v1451
  %v1471 = vmul.f32 %v1448, 0.5
  %v1472 = vmul.f32 %v1452, 0.5
  %v1473 = vtanh.pop %v1471
  %v1474 = vtanh.pop %v1472
  %v1475 = vmul.f32 %v1473, 0.5
  %v1476 = vmul.f32 %v1474, 0.5
  %v1477 = vadd.f32 %v1475, 0.5
  %v1478 = vadd.f32 %v1476, 0.5
  %v1479 = vmul.f32 %v1467, %v1169
  %v1480 = vmul.f32 %v1468, %v1170
  %v1481 = vmul.f32 %v1459, %v1469
  %v1482 = vmul.f32 %v1460, %v1470
  %v1483 = vadd.f32 %v1479, %v1481
  %v1484 = vadd.f32 %v1480, %v1482
  %v1485 = vtanh.pop %v1483
  %v1486 = vtanh.pop %v1484
  %v1487 = vmul.f32 %v1477, %v1485
  %v1488 = vmul.f32 %v1478, %v1486
  %v1489 = vpack.c.bf16 %v1487, %v1487
  %v1490 = vpack.c.bf16 %v1488, %v1488
  %s1491 = scalar_lea.vmem [#allocation3], 16
  %1492 = vst [vmem:[%s1491] sm:$0xf] %v1489
  %1493 = vst [vmem:[%s1491 + $0x4] sm:$0xf] %v1490
  %s1494 = smul.u32 6, 4
  %s1495 = smul.addr %s1494, 8
  %s1496 = scalar_lea.vmem [#allocation2], %s1495
  %v1497 = vld [vmem:[%s1496] sm:$0xff]
  %v1498 = vld [vmem:[%s1496 + $0x8] sm:$0xff]
  %v1499 = vld [vmem:[%s1496 + $0x10] sm:$0xff]
  %v1500 = vld [vmem:[%s1496 + $0x18] sm:$0xff]
  %v1501 = vld [vmem:[%s1496 + $0x20] sm:$0xff]
  %v1502 = vld [vmem:[%s1496 + $0x28] sm:$0xff]
  %v1503 = vld [vmem:[%s1496 + $0x30] sm:$0xff]
  %v1504 = vld [vmem:[%s1496 + $0x38] sm:$0xff]
  %v1505 = vld [vmem:[%s2] sm:$0xff]
  %v1506 = vld [vmem:[%s2 + $0x8] sm:$0xff]
  %v1507 = vld [vmem:[%s2 + $0x10] sm:$0xff]
  %v1508 = vld [vmem:[%s2 + $0x18] sm:$0xff]
  %v1509 = vld [vmem:[%s2 + $0x20] sm:$0xff]
  %v1510 = vld [vmem:[%s2 + $0x28] sm:$0xff]
  %v1511 = vld [vmem:[%s2 + $0x30] sm:$0xff]
  %v1512 = vld [vmem:[%s2 + $0x38] sm:$0xff]
  %v1513 = vld [vmem:[%s2 + $0x40] sm:$0xff]
  %v1514 = vld [vmem:[%s2 + $0x48] sm:$0xff]
  %v1515 = vld [vmem:[%s2 + $0x50] sm:$0xff]
  %v1516 = vld [vmem:[%s2 + $0x58] sm:$0xff]
  %v1517 = vld [vmem:[%s2 + $0x60] sm:$0xff]
  %v1518 = vld [vmem:[%s2 + $0x68] sm:$0xff]
  %v1519 = vld [vmem:[%s2 + $0x70] sm:$0xff]
  %v1520 = vld [vmem:[%s2 + $0x78] sm:$0xff]
  %v1521 = vld [vmem:[%s2 + $0x80] sm:$0xff]
  %v1522 = vld [vmem:[%s2 + $0x88] sm:$0xff]
  %v1523 = vld [vmem:[%s2 + $0x90] sm:$0xff]
  %v1524 = vld [vmem:[%s2 + $0x98] sm:$0xff]
  %v1525 = vld [vmem:[%s2 + $0xa0] sm:$0xff]
  %v1526 = vld [vmem:[%s2 + $0xa8] sm:$0xff]
  %v1527 = vld [vmem:[%s2 + $0xb0] sm:$0xff]
  %v1528 = vld [vmem:[%s2 + $0xb8] sm:$0xff]
  %v1529 = vld [vmem:[%s2 + $0xc0] sm:$0xff]
  %v1530 = vld [vmem:[%s2 + $0xc8] sm:$0xff]
  %v1531 = vld [vmem:[%s2 + $0xd0] sm:$0xff]
  %v1532 = vld [vmem:[%s2 + $0xd8] sm:$0xff]
  %v1533 = vld [vmem:[%s2 + $0xe0] sm:$0xff]
  %v1534 = vld [vmem:[%s2 + $0xe8] sm:$0xff]
  %v1535 = vld [vmem:[%s2 + $0xf0] sm:$0xff]
  %v1536 = vld [vmem:[%s2 + $0xf8] sm:$0xff]
  %v1539 = vunpack.c.l.b16 %v1489
  %v1540 = vunpack.c.l.b16 %v1490
  %v1541 = vpack.c.b16 %v1540, %v1539
  %v1575 = vunpack.c.l.b16 %v1505
  %v1576 = vunpack.c.h.b16 %v1505
  %v1577 = vunpack.c.l.b16 %v1506
  %v1578 = vunpack.c.h.b16 %v1506
  %v1579 = vunpack.c.l.b16 %v1507
  %v1580 = vunpack.c.h.b16 %v1507
  %v1581 = vunpack.c.l.b16 %v1508
  %v1582 = vunpack.c.h.b16 %v1508
  %v1583 = vunpack.c.l.b16 %v1509
  %v1584 = vunpack.c.h.b16 %v1509
  %v1585 = vunpack.c.l.b16 %v1510
  %v1586 = vunpack.c.h.b16 %v1510
  %v1587 = vunpack.c.l.b16 %v1511
  %v1588 = vunpack.c.h.b16 %v1511
  %v1589 = vunpack.c.l.b16 %v1512
  %v1590 = vunpack.c.h.b16 %v1512
  %v1591 = vunpack.c.l.b16 %v1513
  %v1592 = vunpack.c.h.b16 %v1513
  %v1593 = vunpack.c.l.b16 %v1514
  %v1594 = vunpack.c.h.b16 %v1514
  %v1595 = vunpack.c.l.b16 %v1515
  %v1596 = vunpack.c.h.b16 %v1515
  %v1597 = vunpack.c.l.b16 %v1516
  %v1598 = vunpack.c.h.b16 %v1516
  %v1599 = vunpack.c.l.b16 %v1517
  %v1600 = vunpack.c.h.b16 %v1517
  %v1601 = vunpack.c.l.b16 %v1518
  %v1602 = vunpack.c.h.b16 %v1518
  %v1603 = vunpack.c.l.b16 %v1519
  %v1604 = vunpack.c.h.b16 %v1519
  %v1605 = vunpack.c.l.b16 %v1520
  %v1606 = vunpack.c.h.b16 %v1520
  %v1607 = vunpack.c.l.b16 %v1521
  %v1608 = vunpack.c.h.b16 %v1521
  %v1609 = vunpack.c.l.b16 %v1522
  %v1610 = vunpack.c.h.b16 %v1522
  %v1611 = vunpack.c.l.b16 %v1523
  %v1612 = vunpack.c.h.b16 %v1523
  %v1613 = vunpack.c.l.b16 %v1524
  %v1614 = vunpack.c.h.b16 %v1524
  %v1615 = vunpack.c.l.b16 %v1525
  %v1616 = vunpack.c.h.b16 %v1525
  %v1617 = vunpack.c.l.b16 %v1526
  %v1618 = vunpack.c.h.b16 %v1526
  %v1619 = vunpack.c.l.b16 %v1527
  %v1620 = vunpack.c.h.b16 %v1527
  %v1621 = vunpack.c.l.b16 %v1528
  %v1622 = vunpack.c.h.b16 %v1528
  %v1623 = vunpack.c.l.b16 %v1529
  %v1624 = vunpack.c.h.b16 %v1529
  %v1625 = vunpack.c.l.b16 %v1530
  %v1626 = vunpack.c.h.b16 %v1530
  %v1627 = vunpack.c.l.b16 %v1531
  %v1628 = vunpack.c.h.b16 %v1531
  %v1629 = vunpack.c.l.b16 %v1532
  %v1630 = vunpack.c.h.b16 %v1532
  %v1631 = vunpack.c.l.b16 %v1533
  %v1632 = vunpack.c.h.b16 %v1533
  %v1633 = vunpack.c.l.b16 %v1534
  %v1634 = vunpack.c.h.b16 %v1534
  %v1635 = vunpack.c.l.b16 %v1535
  %v1636 = vunpack.c.h.b16 %v1535
  %v1637 = vunpack.c.l.b16 %v1536
  %v1638 = vunpack.c.h.b16 %v1536
  %v1639 = vpack.c.b16 %v1579, %v1575
  %v1640 = vpack.c.b16 %v1580, %v1576
  %v1641 = vpack.c.b16 %v1581, %v1577
  %v1642 = vpack.c.b16 %v1582, %v1578
  %v1643 = vpack.c.b16 %v1587, %v1583
  %v1644 = vpack.c.b16 %v1588, %v1584
  %v1645 = vpack.c.b16 %v1589, %v1585
  %v1646 = vpack.c.b16 %v1590, %v1586
  %v1647 = vpack.c.b16 %v1595, %v1591
  %v1648 = vpack.c.b16 %v1596, %v1592
  %v1649 = vpack.c.b16 %v1597, %v1593
  %v1650 = vpack.c.b16 %v1598, %v1594
  %v1651 = vpack.c.b16 %v1603, %v1599
  %v1652 = vpack.c.b16 %v1604, %v1600
  %v1653 = vpack.c.b16 %v1605, %v1601
  %v1654 = vpack.c.b16 %v1606, %v1602
  %v1655 = vpack.c.b16 %v1611, %v1607
  %v1656 = vpack.c.b16 %v1612, %v1608
  %v1657 = vpack.c.b16 %v1613, %v1609
  %v1658 = vpack.c.b16 %v1614, %v1610
  %v1659 = vpack.c.b16 %v1619, %v1615
  %v1660 = vpack.c.b16 %v1620, %v1616
  %v1661 = vpack.c.b16 %v1621, %v1617
  %v1662 = vpack.c.b16 %v1622, %v1618
  %v1663 = vpack.c.b16 %v1627, %v1623
  %v1664 = vpack.c.b16 %v1628, %v1624
  %v1665 = vpack.c.b16 %v1629, %v1625
  %v1666 = vpack.c.b16 %v1630, %v1626
  %v1667 = vpack.c.b16 %v1635, %v1631
  %v1668 = vpack.c.b16 %v1636, %v1632
  %v1669 = vpack.c.b16 %v1637, %v1633
  %v1670 = vpack.c.b16 %v1638, %v1634
  %1703 = vmatpush.bf16.msra.mxu0 %v1667
  %1704 = vmatpush.bf16.msra.mxu0 %v1663
  %1705 = vmatpush.bf16.msra.mxu0 %v1659
  %1706 = vmatpush.bf16.msra.mxu0 %v1655
  %1707 = vmatpush.bf16.msra.mxu0 %v1651
  %1708 = vmatpush.bf16.msra.mxu0 %v1647
  %1709 = vmatpush.bf16.msra.mxu0 %v1643
  %1710 = vmatpush.bf16.msra.mxu0 %v1639
  %1711 = vmatmul.bf16.gmra.mxu0 %v1541
  %v1712 = vpop.f32.mrf.mxu0
  %v1713 = vadd.f32 0.0, %v1712
  %v1714 = vpop.f32.mrf.mxu0
  %v1715 = vadd.f32 0.0, %v1714
  %1716 = vdwg.mxu0
  %1717 = vmatpush.bf16.msra.mxu0 %v1668
  %1718 = vmatpush.bf16.msra.mxu0 %v1664
  %1719 = vmatpush.bf16.msra.mxu0 %v1660
  %1720 = vmatpush.bf16.msra.mxu0 %v1656
  %1721 = vmatpush.bf16.msra.mxu0 %v1652
  %1722 = vmatpush.bf16.msra.mxu0 %v1648
  %1723 = vmatpush.bf16.msra.mxu0 %v1644
  %1724 = vmatpush.bf16.msra.mxu0 %v1640
  %1725 = vmatmul.bf16.gmra.mxu0 %v1541
  %v1726 = vpop.f32.mrf.mxu0
  %v1727 = vadd.f32 0.0, %v1726
  %v1728 = vpop.f32.mrf.mxu0
  %v1729 = vadd.f32 0.0, %v1728
  %1730 = vdwg.mxu0
  %1731 = vmatpush.bf16.msra.mxu0 %v1669
  %1732 = vmatpush.bf16.msra.mxu0 %v1665
  %1733 = vmatpush.bf16.msra.mxu0 %v1661
  %1734 = vmatpush.bf16.msra.mxu0 %v1657
  %1735 = vmatpush.bf16.msra.mxu0 %v1653
  %1736 = vmatpush.bf16.msra.mxu0 %v1649
  %1737 = vmatpush.bf16.msra.mxu0 %v1645
  %1738 = vmatpush.bf16.msra.mxu0 %v1641
  %1739 = vmatmul.bf16.gmra.mxu0 %v1541
  %v1740 = vpop.f32.mrf.mxu0
  %v1741 = vadd.f32 0.0, %v1740
  %v1742 = vpop.f32.mrf.mxu0
  %v1743 = vadd.f32 0.0, %v1742
  %1744 = vdwg.mxu0
  %1745 = vmatpush.bf16.msra.mxu0 %v1670
  %1746 = vmatpush.bf16.msra.mxu0 %v1666
  %1747 = vmatpush.bf16.msra.mxu0 %v1662
  %1748 = vmatpush.bf16.msra.mxu0 %v1658
  %1749 = vmatpush.bf16.msra.mxu0 %v1654
  %1750 = vmatpush.bf16.msra.mxu0 %v1650
  %1751 = vmatpush.bf16.msra.mxu0 %v1646
  %1752 = vmatpush.bf16.msra.mxu0 %v1642
  %1753 = vmatmul.bf16.gmra.mxu0 %v1541
  %v1754 = vpop.f32.mrf.mxu0
  %v1755 = vadd.f32 0.0, %v1754
  %v1756 = vpop.f32.mrf.mxu0
  %v1757 = vadd.f32 0.0, %v1756
  %1758 = vdwg.mxu0
  %v1759 = vadd.f32 %v1497, %v1713
  %v1760 = vadd.f32 %v1498, %v1727
  %v1761 = vadd.f32 %v1499, %v1741
  %v1762 = vadd.f32 %v1500, %v1755
  %v1763 = vadd.f32 %v1501, %v1715
  %v1764 = vadd.f32 %v1502, %v1729
  %v1765 = vadd.f32 %v1503, %v1743
  %v1766 = vadd.f32 %v1504, %v1757
  %v1767 = vmul.f32 %v1759, 0.5
  %v1768 = vmul.f32 %v1763, 0.5
  %v1769 = vtanh.pop %v1767
  %v1770 = vtanh.pop %v1768
  %v1771 = vmul.f32 %v1769, 0.5
  %v1772 = vmul.f32 %v1770, 0.5
  %v1773 = vadd.f32 %v1771, 0.5
  %v1774 = vadd.f32 %v1772, 0.5
  %v1775 = vmul.f32 %v1760, 0.5
  %v1776 = vmul.f32 %v1764, 0.5
  %v1777 = vtanh.pop %v1775
  %v1778 = vtanh.pop %v1776
  %v1779 = vmul.f32 %v1777, 0.5
  %v1780 = vmul.f32 %v1778, 0.5
  %v1781 = vadd.f32 %v1779, 0.5
  %v1782 = vadd.f32 %v1780, 0.5
  %v1783 = vtanh.pop %v1761
  %v1784 = vtanh.pop %v1765
  %v1785 = vmul.f32 %v1762, 0.5
  %v1786 = vmul.f32 %v1766, 0.5
  %v1787 = vtanh.pop %v1785
  %v1788 = vtanh.pop %v1786
  %v1789 = vmul.f32 %v1787, 0.5
  %v1790 = vmul.f32 %v1788, 0.5
  %v1791 = vadd.f32 %v1789, 0.5
  %v1792 = vadd.f32 %v1790, 0.5
  %v1793 = vmul.f32 %v1781, %v1483
  %v1794 = vmul.f32 %v1782, %v1484
  %v1795 = vmul.f32 %v1773, %v1783
  %v1796 = vmul.f32 %v1774, %v1784
  %v1797 = vadd.f32 %v1793, %v1795
  %v1798 = vadd.f32 %v1794, %v1796
  %v1799 = vtanh.pop %v1797
  %v1800 = vtanh.pop %v1798
  %v1801 = vmul.f32 %v1791, %v1799
  %v1802 = vmul.f32 %v1792, %v1800
  %v1803 = vpack.c.bf16 %v1801, %v1801
  %v1804 = vpack.c.bf16 %v1802, %v1802
  %s1805 = scalar_lea.vmem [#allocation3], 24
  %1806 = vst [vmem:[%s1805] sm:$0xf] %v1803
  %1807 = vst [vmem:[%s1805 + $0x4] sm:$0xf] %v1804
  %s1808 = smul.u32 8, 4
  %s1809 = smul.addr %s1808, 8
  %s1810 = scalar_lea.vmem [#allocation2], %s1809
  %v1811 = vld [vmem:[%s1810] sm:$0xff]
  %v1812 = vld [vmem:[%s1810 + $0x8] sm:$0xff]
  %v1813 = vld [vmem:[%s1810 + $0x10] sm:$0xff]
  %v1814 = vld [vmem:[%s1810 + $0x18] sm:$0xff]
  %v1815 = vld [vmem:[%s1810 + $0x20] sm:$0xff]
  %v1816 = vld [vmem:[%s1810 + $0x28] sm:$0xff]
  %v1817 = vld [vmem:[%s1810 + $0x30] sm:$0xff]
  %v1818 = vld [vmem:[%s1810 + $0x38] sm:$0xff]
  %v1819 = vld [vmem:[%s2] sm:$0xff]
  %v1820 = vld [vmem:[%s2 + $0x8] sm:$0xff]
  %v1821 = vld [vmem:[%s2 + $0x10] sm:$0xff]
  %v1822 = vld [vmem:[%s2 + $0x18] sm:$0xff]
  %v1823 = vld [vmem:[%s2 + $0x20] sm:$0xff]
  %v1824 = vld [vmem:[%s2 + $0x28] sm:$0xff]
  %v1825 = vld [vmem:[%s2 + $0x30] sm:$0xff]
  %v1826 = vld [vmem:[%s2 + $0x38] sm:$0xff]
  %v1827 = vld [vmem:[%s2 + $0x40] sm:$0xff]
  %v1828 = vld [vmem:[%s2 + $0x48] sm:$0xff]
  %v1829 = vld [vmem:[%s2 + $0x50] sm:$0xff]
  %v1830 = vld [vmem:[%s2 + $0x58] sm:$0xff]
  %v1831 = vld [vmem:[%s2 + $0x60] sm:$0xff]
  %v1832 = vld [vmem:[%s2 + $0x68] sm:$0xff]
  %v1833 = vld [vmem:[%s2 + $0x70] sm:$0xff]
  %v1834 = vld [vmem:[%s2 + $0x78] sm:$0xff]
  %v1835 = vld [vmem:[%s2 + $0x80] sm:$0xff]
  %v1836 = vld [vmem:[%s2 + $0x88] sm:$0xff]
  %v1837 = vld [vmem:[%s2 + $0x90] sm:$0xff]
  %v1838 = vld [vmem:[%s2 + $0x98] sm:$0xff]
  %v1839 = vld [vmem:[%s2 + $0xa0] sm:$0xff]
  %v1840 = vld [vmem:[%s2 + $0xa8] sm:$0xff]
  %v1841 = vld [vmem:[%s2 + $0xb0] sm:$0xff]
  %v1842 = vld [vmem:[%s2 + $0xb8] sm:$0xff]
  %v1843 = vld [vmem:[%s2 + $0xc0] sm:$0xff]
  %v1844 = vld [vmem:[%s2 + $0xc8] sm:$0xff]
  %v1845 = vld [vmem:[%s2 + $0xd0] sm:$0xff]
  %v1846 = vld [vmem:[%s2 + $0xd8] sm:$0xff]
  %v1847 = vld [vmem:[%s2 + $0xe0] sm:$0xff]
  %v1848 = vld [vmem:[%s2 + $0xe8] sm:$0xff]
  %v1849 = vld [vmem:[%s2 + $0xf0] sm:$0xff]
  %v1850 = vld [vmem:[%s2 + $0xf8] sm:$0xff]
  %v1853 = vunpack.c.l.b16 %v1803
  %v1854 = vunpack.c.l.b16 %v1804
  %v1855 = vpack.c.b16 %v1854, %v1853
  %v1889 = vunpack.c.l.b16 %v1819
  %v1890 = vunpack.c.h.b16 %v1819
  %v1891 = vunpack.c.l.b16 %v1820
  %v1892 = vunpack.c.h.b16 %v1820
  %v1893 = vunpack.c.l.b16 %v1821
  %v1894 = vunpack.c.h.b16 %v1821
  %v1895 = vunpack.c.l.b16 %v1822
  %v1896 = vunpack.c.h.b16 %v1822
  %v1897 = vunpack.c.l.b16 %v1823
  %v1898 = vunpack.c.h.b16 %v1823
  %v1899 = vunpack.c.l.b16 %v1824
  %v1900 = vunpack.c.h.b16 %v1824
  %v1901 = vunpack.c.l.b16 %v1825
  %v1902 = vunpack.c.h.b16 %v1825
  %v1903 = vunpack.c.l.b16 %v1826
  %v1904 = vunpack.c.h.b16 %v1826
  %v1905 = vunpack.c.l.b16 %v1827
  %v1906 = vunpack.c.h.b16 %v1827
  %v1907 = vunpack.c.l.b16 %v1828
  %v1908 = vunpack.c.h.b16 %v1828
  %v1909 = vunpack.c.l.b16 %v1829
  %v1910 = vunpack.c.h.b16 %v1829
  %v1911 = vunpack.c.l.b16 %v1830
  %v1912 = vunpack.c.h.b16 %v1830
  %v1913 = vunpack.c.l.b16 %v1831
  %v1914 = vunpack.c.h.b16 %v1831
  %v1915 = vunpack.c.l.b16 %v1832
  %v1916 = vunpack.c.h.b16 %v1832
  %v1917 = vunpack.c.l.b16 %v1833
  %v1918 = vunpack.c.h.b16 %v1833
  %v1919 = vunpack.c.l.b16 %v1834
  %v1920 = vunpack.c.h.b16 %v1834
  %v1921 = vunpack.c.l.b16 %v1835
  %v1922 = vunpack.c.h.b16 %v1835
  %v1923 = vunpack.c.l.b16 %v1836
  %v1924 = vunpack.c.h.b16 %v1836
  %v1925 = vunpack.c.l.b16 %v1837
  %v1926 = vunpack.c.h.b16 %v1837
  %v1927 = vunpack.c.l.b16 %v1838
  %v1928 = vunpack.c.h.b16 %v1838
  %v1929 = vunpack.c.l.b16 %v1839
  %v1930 = vunpack.c.h.b16 %v1839
  %v1931 = vunpack.c.l.b16 %v1840
  %v1932 = vunpack.c.h.b16 %v1840
  %v1933 = vunpack.c.l.b16 %v1841
  %v1934 = vunpack.c.h.b16 %v1841
  %v1935 = vunpack.c.l.b16 %v1842
  %v1936 = vunpack.c.h.b16 %v1842
  %v1937 = vunpack.c.l.b16 %v1843
  %v1938 = vunpack.c.h.b16 %v1843
  %v1939 = vunpack.c.l.b16 %v1844
  %v1940 = vunpack.c.h.b16 %v1844
  %v1941 = vunpack.c.l.b16 %v1845
  %v1942 = vunpack.c.h.b16 %v1845
  %v1943 = vunpack.c.l.b16 %v1846
  %v1944 = vunpack.c.h.b16 %v1846
  %v1945 = vunpack.c.l.b16 %v1847
  %v1946 = vunpack.c.h.b16 %v1847
  %v1947 = vunpack.c.l.b16 %v1848
  %v1948 = vunpack.c.h.b16 %v1848
  %v1949 = vunpack.c.l.b16 %v1849
  %v1950 = vunpack.c.h.b16 %v1849
  %v1951 = vunpack.c.l.b16 %v1850
  %v1952 = vunpack.c.h.b16 %v1850
  %v1953 = vpack.c.b16 %v1893, %v1889
  %v1954 = vpack.c.b16 %v1894, %v1890
  %v1955 = vpack.c.b16 %v1895, %v1891
  %v1956 = vpack.c.b16 %v1896, %v1892
  %v1957 = vpack.c.b16 %v1901, %v1897
  %v1958 = vpack.c.b16 %v1902, %v1898
  %v1959 = vpack.c.b16 %v1903, %v1899
  %v1960 = vpack.c.b16 %v1904, %v1900
  %v1961 = vpack.c.b16 %v1909, %v1905
  %v1962 = vpack.c.b16 %v1910, %v1906
  %v1963 = vpack.c.b16 %v1911, %v1907
  %v1964 = vpack.c.b16 %v1912, %v1908
  %v1965 = vpack.c.b16 %v1917, %v1913
  %v1966 = vpack.c.b16 %v1918, %v1914
  %v1967 = vpack.c.b16 %v1919, %v1915
  %v1968 = vpack.c.b16 %v1920, %v1916
  %v1969 = vpack.c.b16 %v1925, %v1921
  %v1970 = vpack.c.b16 %v1926, %v1922
  %v1971 = vpack.c.b16 %v1927, %v1923
  %v1972 = vpack.c.b16 %v1928, %v1924
  %v1973 = vpack.c.b16 %v1933, %v1929
  %v1974 = vpack.c.b16 %v1934, %v1930
  %v1975 = vpack.c.b16 %v1935, %v1931
  %v1976 = vpack.c.b16 %v1936, %v1932
  %v1977 = vpack.c.b16 %v1941, %v1937
  %v1978 = vpack.c.b16 %v1942, %v1938
  %v1979 = vpack.c.b16 %v1943, %v1939
  %v1980 = vpack.c.b16 %v1944, %v1940
  %v1981 = vpack.c.b16 %v1949, %v1945
  %v1982 = vpack.c.b16 %v1950, %v1946
  %v1983 = vpack.c.b16 %v1951, %v1947
  %v1984 = vpack.c.b16 %v1952, %v1948
  %2017 = vmatpush.bf16.msra.mxu0 %v1981
  %2018 = vmatpush.bf16.msra.mxu0 %v1977
  %2019 = vmatpush.bf16.msra.mxu0 %v1973
  %2020 = vmatpush.bf16.msra.mxu0 %v1969
  %2021 = vmatpush.bf16.msra.mxu0 %v1965
  %2022 = vmatpush.bf16.msra.mxu0 %v1961
  %2023 = vmatpush.bf16.msra.mxu0 %v1957
  %2024 = vmatpush.bf16.msra.mxu0 %v1953
  %2025 = vmatmul.bf16.gmra.mxu0 %v1855
  %v2026 = vpop.f32.mrf.mxu0
  %v2027 = vadd.f32 0.0, %v2026
  %v2028 = vpop.f32.mrf.mxu0
  %v2029 = vadd.f32 0.0, %v2028
  %2030 = vdwg.mxu0
  %2031 = vmatpush.bf16.msra.mxu0 %v1982
  %2032 = vmatpush.bf16.msra.mxu0 %v1978
  %2033 = vmatpush.bf16.msra.mxu0 %v1974
  %2034 = vmatpush.bf16.msra.mxu0 %v1970
  %2035 = vmatpush.bf16.msra.mxu0 %v1966
  %2036 = vmatpush.bf16.msra.mxu0 %v1962
  %2037 = vmatpush.bf16.msra.mxu0 %v1958
  %2038 = vmatpush.bf16.msra.mxu0 %v1954
  %2039 = vmatmul.bf16.gmra.mxu0 %v1855
  %v2040 = vpop.f32.mrf.mxu0
  %v2041 = vadd.f32 0.0, %v2040
  %v2042 = vpop.f32.mrf.mxu0
  %v2043 = vadd.f32 0.0, %v2042
  %2044 = vdwg.mxu0
  %2045 = vmatpush.bf16.msra.mxu0 %v1983
  %2046 = vmatpush.bf16.msra.mxu0 %v1979
  %2047 = vmatpush.bf16.msra.mxu0 %v1975
  %2048 = vmatpush.bf16.msra.mxu0 %v1971
  %2049 = vmatpush.bf16.msra.mxu0 %v1967
  %2050 = vmatpush.bf16.msra.mxu0 %v1963
  %2051 = vmatpush.bf16.msra.mxu0 %v1959
  %2052 = vmatpush.bf16.msra.mxu0 %v1955
  %2053 = vmatmul.bf16.gmra.mxu0 %v1855
  %v2054 = vpop.f32.mrf.mxu0
  %v2055 = vadd.f32 0.0, %v2054
  %v2056 = vpop.f32.mrf.mxu0
  %v2057 = vadd.f32 0.0, %v2056
  %2058 = vdwg.mxu0
  %2059 = vmatpush.bf16.msra.mxu0 %v1984
  %2060 = vmatpush.bf16.msra.mxu0 %v1980
  %2061 = vmatpush.bf16.msra.mxu0 %v1976
  %2062 = vmatpush.bf16.msra.mxu0 %v1972
  %2063 = vmatpush.bf16.msra.mxu0 %v1968
  %2064 = vmatpush.bf16.msra.mxu0 %v1964
  %2065 = vmatpush.bf16.msra.mxu0 %v1960
  %2066 = vmatpush.bf16.msra.mxu0 %v1956
  %2067 = vmatmul.bf16.gmra.mxu0 %v1855
  %v2068 = vpop.f32.mrf.mxu0
  %v2069 = vadd.f32 0.0, %v2068
  %v2070 = vpop.f32.mrf.mxu0
  %v2071 = vadd.f32 0.0, %v2070
  %2072 = vdwg.mxu0
  %v2073 = vadd.f32 %v1811, %v2027
  %v2074 = vadd.f32 %v1812, %v2041
  %v2075 = vadd.f32 %v1813, %v2055
  %v2076 = vadd.f32 %v1814, %v2069
  %v2077 = vadd.f32 %v1815, %v2029
  %v2078 = vadd.f32 %v1816, %v2043
  %v2079 = vadd.f32 %v1817, %v2057
  %v2080 = vadd.f32 %v1818, %v2071
  %v2081 = vmul.f32 %v2073, 0.5
  %v2082 = vmul.f32 %v2077, 0.5
  %v2083 = vtanh.pop %v2081
  %v2084 = vtanh.pop %v2082
  %v2085 = vmul.f32 %v2083, 0.5
  %v2086 = vmul.f32 %v2084, 0.5
  %v2087 = vadd.f32 %v2085, 0.5
  %v2088 = vadd.f32 %v2086, 0.5
  %v2089 = vmul.f32 %v2074, 0.5
  %v2090 = vmul.f32 %v2078, 0.5
  %v2091 = vtanh.pop %v2089
  %v2092 = vtanh.pop %v2090
  %v2093 = vmul.f32 %v2091, 0.5
  %v2094 = vmul.f32 %v2092, 0.5
  %v2095 = vadd.f32 %v2093, 0.5
  %v2096 = vadd.f32 %v2094, 0.5
  %v2097 = vtanh.pop %v2075
  %v2098 = vtanh.pop %v2079
  %v2099 = vmul.f32 %v2076, 0.5
  %v2100 = vmul.f32 %v2080, 0.5
  %v2101 = vtanh.pop %v2099
  %v2102 = vtanh.pop %v2100
  %v2103 = vmul.f32 %v2101, 0.5
  %v2104 = vmul.f32 %v2102, 0.5
  %v2105 = vadd.f32 %v2103, 0.5
  %v2106 = vadd.f32 %v2104, 0.5
  %v2107 = vmul.f32 %v2095, %v1797
  %v2108 = vmul.f32 %v2096, %v1798
  %v2109 = vmul.f32 %v2087, %v2097
  %v2110 = vmul.f32 %v2088, %v2098
  %v2111 = vadd.f32 %v2107, %v2109
  %v2112 = vadd.f32 %v2108, %v2110
  %v2113 = vtanh.pop %v2111
  %v2114 = vtanh.pop %v2112
  %v2115 = vmul.f32 %v2105, %v2113
  %v2116 = vmul.f32 %v2106, %v2114
  %v2117 = vpack.c.bf16 %v2115, %v2115
  %v2118 = vpack.c.bf16 %v2116, %v2116
  %s2119 = scalar_lea.vmem [#allocation3], 32
  %2120 = vst [vmem:[%s2119] sm:$0xf] %v2117
  %2121 = vst [vmem:[%s2119 + $0x4] sm:$0xf] %v2118
  %s2122 = smul.u32 10, 4
  %s2123 = smul.addr %s2122, 8
  %s2124 = scalar_lea.vmem [#allocation2], %s2123
  %v2125 = vld [vmem:[%s2124] sm:$0xff]
  %v2126 = vld [vmem:[%s2124 + $0x8] sm:$0xff]
  %v2127 = vld [vmem:[%s2124 + $0x10] sm:$0xff]
  %v2128 = vld [vmem:[%s2124 + $0x18] sm:$0xff]
  %v2129 = vld [vmem:[%s2124 + $0x20] sm:$0xff]
  %v2130 = vld [vmem:[%s2124 + $0x28] sm:$0xff]
  %v2131 = vld [vmem:[%s2124 + $0x30] sm:$0xff]
  %v2132 = vld [vmem:[%s2124 + $0x38] sm:$0xff]
  %v2133 = vld [vmem:[%s2] sm:$0xff]
  %v2134 = vld [vmem:[%s2 + $0x8] sm:$0xff]
  %v2135 = vld [vmem:[%s2 + $0x10] sm:$0xff]
  %v2136 = vld [vmem:[%s2 + $0x18] sm:$0xff]
  %v2137 = vld [vmem:[%s2 + $0x20] sm:$0xff]
  %v2138 = vld [vmem:[%s2 + $0x28] sm:$0xff]
  %v2139 = vld [vmem:[%s2 + $0x30] sm:$0xff]
  %v2140 = vld [vmem:[%s2 + $0x38] sm:$0xff]
  %v2141 = vld [vmem:[%s2 + $0x40] sm:$0xff]
  %v2142 = vld [vmem:[%s2 + $0x48] sm:$0xff]
  %v2143 = vld [vmem:[%s2 + $0x50] sm:$0xff]
  %v2144 = vld [vmem:[%s2 + $0x58] sm:$0xff]
  %v2145 = vld [vmem:[%s2 + $0x60] sm:$0xff]
  %v2146 = vld [vmem:[%s2 + $0x68] sm:$0xff]
  %v2147 = vld [vmem:[%s2 + $0x70] sm:$0xff]
  %v2148 = vld [vmem:[%s2 + $0x78] sm:$0xff]
  %v2149 = vld [vmem:[%s2 + $0x80] sm:$0xff]
  %v2150 = vld [vmem:[%s2 + $0x88] sm:$0xff]
  %v2151 = vld [vmem:[%s2 + $0x90] sm:$0xff]
  %v2152 = vld [vmem:[%s2 + $0x98] sm:$0xff]
  %v2153 = vld [vmem:[%s2 + $0xa0] sm:$0xff]
  %v2154 = vld [vmem:[%s2 + $0xa8] sm:$0xff]
  %v2155 = vld [vmem:[%s2 + $0xb0] sm:$0xff]
  %v2156 = vld [vmem:[%s2 + $0xb8] sm:$0xff]
  %v2157 = vld [vmem:[%s2 + $0xc0] sm:$0xff]
  %v2158 = vld [vmem:[%s2 + $0xc8] sm:$0xff]
  %v2159 = vld [vmem:[%s2 + $0xd0] sm:$0xff]
  %v2160 = vld [vmem:[%s2 + $0xd8] sm:$0xff]
  %v2161 = vld [vmem:[%s2 + $0xe0] sm:$0xff]
  %v2162 = vld [vmem:[%s2 + $0xe8] sm:$0xff]
  %v2163 = vld [vmem:[%s2 + $0xf0] sm:$0xff]
  %v2164 = vld [vmem:[%s2 + $0xf8] sm:$0xff]
  %v2167 = vunpack.c.l.b16 %v2117
  %v2168 = vunpack.c.l.b16 %v2118
  %v2169 = vpack.c.b16 %v2168, %v2167
  %v2203 = vunpack.c.l.b16 %v2133
  %v2204 = vunpack.c.h.b16 %v2133
  %v2205 = vunpack.c.l.b16 %v2134
  %v2206 = vunpack.c.h.b16 %v2134
  %v2207 = vunpack.c.l.b16 %v2135
  %v2208 = vunpack.c.h.b16 %v2135
  %v2209 = vunpack.c.l.b16 %v2136
  %v2210 = vunpack.c.h.b16 %v2136
  %v2211 = vunpack.c.l.b16 %v2137
  %v2212 = vunpack.c.h.b16 %v2137
  %v2213 = vunpack.c.l.b16 %v2138
  %v2214 = vunpack.c.h.b16 %v2138
  %v2215 = vunpack.c.l.b16 %v2139
  %v2216 = vunpack.c.h.b16 %v2139
  %v2217 = vunpack.c.l.b16 %v2140
  %v2218 = vunpack.c.h.b16 %v2140
  %v2219 = vunpack.c.l.b16 %v2141
  %v2220 = vunpack.c.h.b16 %v2141
  %v2221 = vunpack.c.l.b16 %v2142
  %v2222 = vunpack.c.h.b16 %v2142
  %v2223 = vunpack.c.l.b16 %v2143
  %v2224 = vunpack.c.h.b16 %v2143
  %v2225 = vunpack.c.l.b16 %v2144
  %v2226 = vunpack.c.h.b16 %v2144
  %v2227 = vunpack.c.l.b16 %v2145
  %v2228 = vunpack.c.h.b16 %v2145
  %v2229 = vunpack.c.l.b16 %v2146
  %v2230 = vunpack.c.h.b16 %v2146
  %v2231 = vunpack.c.l.b16 %v2147
  %v2232 = vunpack.c.h.b16 %v2147
  %v2233 = vunpack.c.l.b16 %v2148
  %v2234 = vunpack.c.h.b16 %v2148
  %v2235 = vunpack.c.l.b16 %v2149
  %v2236 = vunpack.c.h.b16 %v2149
  %v2237 = vunpack.c.l.b16 %v2150
  %v2238 = vunpack.c.h.b16 %v2150
  %v2239 = vunpack.c.l.b16 %v2151
  %v2240 = vunpack.c.h.b16 %v2151
  %v2241 = vunpack.c.l.b16 %v2152
  %v2242 = vunpack.c.h.b16 %v2152
  %v2243 = vunpack.c.l.b16 %v2153
  %v2244 = vunpack.c.h.b16 %v2153
  %v2245 = vunpack.c.l.b16 %v2154
  %v2246 = vunpack.c.h.b16 %v2154
  %v2247 = vunpack.c.l.b16 %v2155
  %v2248 = vunpack.c.h.b16 %v2155
  %v2249 = vunpack.c.l.b16 %v2156
  %v2250 = vunpack.c.h.b16 %v2156
  %v2251 = vunpack.c.l.b16 %v2157
  %v2252 = vunpack.c.h.b16 %v2157
  %v2253 = vunpack.c.l.b16 %v2158
  %v2254 = vunpack.c.h.b16 %v2158
  %v2255 = vunpack.c.l.b16 %v2159
  %v2256 = vunpack.c.h.b16 %v2159
  %v2257 = vunpack.c.l.b16 %v2160
  %v2258 = vunpack.c.h.b16 %v2160
  %v2259 = vunpack.c.l.b16 %v2161
  %v2260 = vunpack.c.h.b16 %v2161
  %v2261 = vunpack.c.l.b16 %v2162
  %v2262 = vunpack.c.h.b16 %v2162
  %v2263 = vunpack.c.l.b16 %v2163
  %v2264 = vunpack.c.h.b16 %v2163
  %v2265 = vunpack.c.l.b16 %v2164
  %v2266 = vunpack.c.h.b16 %v2164
  %v2267 = vpack.c.b16 %v2207, %v2203
  %v2268 = vpack.c.b16 %v2208, %v2204
  %v2269 = vpack.c.b16 %v2209, %v2205
  %v2270 = vpack.c.b16 %v2210, %v2206
  %v2271 = vpack.c.b16 %v2215, %v2211
  %v2272 = vpack.c.b16 %v2216, %v2212
  %v2273 = vpack.c.b16 %v2217, %v2213
  %v2274 = vpack.c.b16 %v2218, %v2214
  %v2275 = vpack.c.b16 %v2223, %v2219
  %v2276 = vpack.c.b16 %v2224, %v2220
  %v2277 = vpack.c.b16 %v2225, %v2221
  %v2278 = vpack.c.b16 %v2226, %v2222
  %v2279 = vpack.c.b16 %v2231, %v2227
  %v2280 = vpack.c.b16 %v2232, %v2228
  %v2281 = vpack.c.b16 %v2233, %v2229
  %v2282 = vpack.c.b16 %v2234, %v2230
  %v2283 = vpack.c.b16 %v2239, %v2235
  %v2284 = vpack.c.b16 %v2240, %v2236
  %v2285 = vpack.c.b16 %v2241, %v2237
  %v2286 = vpack.c.b16 %v2242, %v2238
  %v2287 = vpack.c.b16 %v2247, %v2243
  %v2288 = vpack.c.b16 %v2248, %v2244
  %v2289 = vpack.c.b16 %v2249, %v2245
  %v2290 = vpack.c.b16 %v2250, %v2246
  %v2291 = vpack.c.b16 %v2255, %v2251
  %v2292 = vpack.c.b16 %v2256, %v2252
  %v2293 = vpack.c.b16 %v2257, %v2253
  %v2294 = vpack.c.b16 %v2258, %v2254
  %v2295 = vpack.c.b16 %v2263, %v2259
  %v2296 = vpack.c.b16 %v2264, %v2260
  %v2297 = vpack.c.b16 %v2265, %v2261
  %v2298 = vpack.c.b16 %v2266, %v2262
  %2331 = vmatpush.bf16.msra.mxu0 %v2295
  %2332 = vmatpush.bf16.msra.mxu0 %v2291
  %2333 = vmatpush.bf16.msra.mxu0 %v2287
  %2334 = vmatpush.bf16.msra.mxu0 %v2283
  %2335 = vmatpush.bf16.msra.mxu0 %v2279
  %2336 = vmatpush.bf16.msra.mxu0 %v2275
  %2337 = vmatpush.bf16.msra.mxu0 %v2271
  %2338 = vmatpush.bf16.msra.mxu0 %v2267
  %2339 = vmatmul.bf16.gmra.mxu0 %v2169
  %v2340 = vpop.f32.mrf.mxu0
  %v2341 = vadd.f32 0.0, %v2340
  %v2342 = vpop.f32.mrf.mxu0
  %v2343 = vadd.f32 0.0, %v2342
  %2344 = vdwg.mxu0
  %2345 = vmatpush.bf16.msra.mxu0 %v2296
  %2346 = vmatpush.bf16.msra.mxu0 %v2292
  %2347 = vmatpush.bf16.msra.mxu0 %v2288
  %2348 = vmatpush.bf16.msra.mxu0 %v2284
  %2349 = vmatpush.bf16.msra.mxu0 %v2280
  %2350 = vmatpush.bf16.msra.mxu0 %v2276
  %2351 = vmatpush.bf16.msra.mxu0 %v2272
  %2352 = vmatpush.bf16.msra.mxu0 %v2268
  %2353 = vmatmul.bf16.gmra.mxu0 %v2169
  %v2354 = vpop.f32.mrf.mxu0
  %v2355 = vadd.f32 0.0, %v2354
  %v2356 = vpop.f32.mrf.mxu0
  %v2357 = vadd.f32 0.0, %v2356
  %2358 = vdwg.mxu0
  %2359 = vmatpush.bf16.msra.mxu0 %v2297
  %2360 = vmatpush.bf16.msra.mxu0 %v2293
  %2361 = vmatpush.bf16.msra.mxu0 %v2289
  %2362 = vmatpush.bf16.msra.mxu0 %v2285
  %2363 = vmatpush.bf16.msra.mxu0 %v2281
  %2364 = vmatpush.bf16.msra.mxu0 %v2277
  %2365 = vmatpush.bf16.msra.mxu0 %v2273
  %2366 = vmatpush.bf16.msra.mxu0 %v2269
  %2367 = vmatmul.bf16.gmra.mxu0 %v2169
  %v2368 = vpop.f32.mrf.mxu0
  %v2369 = vadd.f32 0.0, %v2368
  %v2370 = vpop.f32.mrf.mxu0
  %v2371 = vadd.f32 0.0, %v2370
  %2372 = vdwg.mxu0
  %2373 = vmatpush.bf16.msra.mxu0 %v2298
  %2374 = vmatpush.bf16.msra.mxu0 %v2294
  %2375 = vmatpush.bf16.msra.mxu0 %v2290
  %2376 = vmatpush.bf16.msra.mxu0 %v2286
  %2377 = vmatpush.bf16.msra.mxu0 %v2282
  %2378 = vmatpush.bf16.msra.mxu0 %v2278
  %2379 = vmatpush.bf16.msra.mxu0 %v2274
  %2380 = vmatpush.bf16.msra.mxu0 %v2270
  %2381 = vmatmul.bf16.gmra.mxu0 %v2169
  %v2382 = vpop.f32.mrf.mxu0
  %v2383 = vadd.f32 0.0, %v2382
  %v2384 = vpop.f32.mrf.mxu0
  %v2385 = vadd.f32 0.0, %v2384
  %2386 = vdwg.mxu0
  %v2387 = vadd.f32 %v2125, %v2341
  %v2388 = vadd.f32 %v2126, %v2355
  %v2389 = vadd.f32 %v2127, %v2369
  %v2390 = vadd.f32 %v2128, %v2383
  %v2391 = vadd.f32 %v2129, %v2343
  %v2392 = vadd.f32 %v2130, %v2357
  %v2393 = vadd.f32 %v2131, %v2371
  %v2394 = vadd.f32 %v2132, %v2385
  %v2395 = vmul.f32 %v2387, 0.5
  %v2396 = vmul.f32 %v2391, 0.5
  %v2397 = vtanh.pop %v2395
  %v2398 = vtanh.pop %v2396
  %v2399 = vmul.f32 %v2397, 0.5
  %v2400 = vmul.f32 %v2398, 0.5
  %v2401 = vadd.f32 %v2399, 0.5
  %v2402 = vadd.f32 %v2400, 0.5
  %v2403 = vmul.f32 %v2388, 0.5
  %v2404 = vmul.f32 %v2392, 0.5
  %v2405 = vtanh.pop %v2403
  %v2406 = vtanh.pop %v2404
  %v2407 = vmul.f32 %v2405, 0.5
  %v2408 = vmul.f32 %v2406, 0.5
  %v2409 = vadd.f32 %v2407, 0.5
  %v2410 = vadd.f32 %v2408, 0.5
  %v2411 = vtanh.pop %v2389
  %v2412 = vtanh.pop %v2393
  %v2413 = vmul.f32 %v2390, 0.5
  %v2414 = vmul.f32 %v2394, 0.5
  %v2415 = vtanh.pop %v2413
  %v2416 = vtanh.pop %v2414
  %v2417 = vmul.f32 %v2415, 0.5
  %v2418 = vmul.f32 %v2416, 0.5
  %v2419 = vadd.f32 %v2417, 0.5
  %v2420 = vadd.f32 %v2418, 0.5
  %v2421 = vmul.f32 %v2409, %v2111
  %v2422 = vmul.f32 %v2410, %v2112
  %v2423 = vmul.f32 %v2401, %v2411
  %v2424 = vmul.f32 %v2402, %v2412
  %v2425 = vadd.f32 %v2421, %v2423
  %v2426 = vadd.f32 %v2422, %v2424
  %v2427 = vtanh.pop %v2425
  %v2428 = vtanh.pop %v2426
  %v2429 = vmul.f32 %v2419, %v2427
  %v2430 = vmul.f32 %v2420, %v2428
  %v2431 = vpack.c.bf16 %v2429, %v2429
  %v2432 = vpack.c.bf16 %v2430, %v2430
  %s2433 = scalar_lea.vmem [#allocation3], 40
  %2434 = vst [vmem:[%s2433] sm:$0xf] %v2431
  %2435 = vst [vmem:[%s2433 + $0x4] sm:$0xf] %v2432
  %s2436 = smul.u32 12, 4
  %s2437 = smul.addr %s2436, 8
  %s2438 = scalar_lea.vmem [#allocation2], %s2437
  %v2439 = vld [vmem:[%s2438] sm:$0xff]
  %v2440 = vld [vmem:[%s2438 + $0x8] sm:$0xff]
  %v2441 = vld [vmem:[%s2438 + $0x10] sm:$0xff]
  %v2442 = vld [vmem:[%s2438 + $0x18] sm:$0xff]
  %v2443 = vld [vmem:[%s2438 + $0x20] sm:$0xff]
  %v2444 = vld [vmem:[%s2438 + $0x28] sm:$0xff]
  %v2445 = vld [vmem:[%s2438 + $0x30] sm:$0xff]
  %v2446 = vld [vmem:[%s2438 + $0x38] sm:$0xff]
  %v2447 = vld [vmem:[%s2] sm:$0xff]
  %v2448 = vld [vmem:[%s2 + $0x8] sm:$0xff]
  %v2449 = vld [vmem:[%s2 + $0x10] sm:$0xff]
  %v2450 = vld [vmem:[%s2 + $0x18] sm:$0xff]
  %v2451 = vld [vmem:[%s2 + $0x20] sm:$0xff]
  %v2452 = vld [vmem:[%s2 + $0x28] sm:$0xff]
  %v2453 = vld [vmem:[%s2 + $0x30] sm:$0xff]
  %v2454 = vld [vmem:[%s2 + $0x38] sm:$0xff]
  %v2455 = vld [vmem:[%s2 + $0x40] sm:$0xff]
  %v2456 = vld [vmem:[%s2 + $0x48] sm:$0xff]
  %v2457 = vld [vmem:[%s2 + $0x50] sm:$0xff]
  %v2458 = vld [vmem:[%s2 + $0x58] sm:$0xff]
  %v2459 = vld [vmem:[%s2 + $0x60] sm:$0xff]
  %v2460 = vld [vmem:[%s2 + $0x68] sm:$0xff]
  %v2461 = vld [vmem:[%s2 + $0x70] sm:$0xff]
  %v2462 = vld [vmem:[%s2 + $0x78] sm:$0xff]
  %v2463 = vld [vmem:[%s2 + $0x80] sm:$0xff]
  %v2464 = vld [vmem:[%s2 + $0x88] sm:$0xff]
  %v2465 = vld [vmem:[%s2 + $0x90] sm:$0xff]
  %v2466 = vld [vmem:[%s2 + $0x98] sm:$0xff]
  %v2467 = vld [vmem:[%s2 + $0xa0] sm:$0xff]
  %v2468 = vld [vmem:[%s2 + $0xa8] sm:$0xff]
  %v2469 = vld [vmem:[%s2 + $0xb0] sm:$0xff]
  %v2470 = vld [vmem:[%s2 + $0xb8] sm:$0xff]
  %v2471 = vld [vmem:[%s2 + $0xc0] sm:$0xff]
  %v2472 = vld [vmem:[%s2 + $0xc8] sm:$0xff]
  %v2473 = vld [vmem:[%s2 + $0xd0] sm:$0xff]
  %v2474 = vld [vmem:[%s2 + $0xd8] sm:$0xff]
  %v2475 = vld [vmem:[%s2 + $0xe0] sm:$0xff]
  %v2476 = vld [vmem:[%s2 + $0xe8] sm:$0xff]
  %v2477 = vld [vmem:[%s2 + $0xf0] sm:$0xff]
  %v2478 = vld [vmem:[%s2 + $0xf8] sm:$0xff]
  %v2481 = vunpack.c.l.b16 %v2431
  %v2482 = vunpack.c.l.b16 %v2432
  %v2483 = vpack.c.b16 %v2482, %v2481
  %v2517 = vunpack.c.l.b16 %v2447
  %v2518 = vunpack.c.h.b16 %v2447
  %v2519 = vunpack.c.l.b16 %v2448
  %v2520 = vunpack.c.h.b16 %v2448
  %v2521 = vunpack.c.l.b16 %v2449
  %v2522 = vunpack.c.h.b16 %v2449
  %v2523 = vunpack.c.l.b16 %v2450
  %v2524 = vunpack.c.h.b16 %v2450
  %v2525 = vunpack.c.l.b16 %v2451
  %v2526 = vunpack.c.h.b16 %v2451
  %v2527 = vunpack.c.l.b16 %v2452
  %v2528 = vunpack.c.h.b16 %v2452
  %v2529 = vunpack.c.l.b16 %v2453
  %v2530 = vunpack.c.h.b16 %v2453
  %v2531 = vunpack.c.l.b16 %v2454
  %v2532 = vunpack.c.h.b16 %v2454
  %v2533 = vunpack.c.l.b16 %v2455
  %v2534 = vunpack.c.h.b16 %v2455
  %v2535 = vunpack.c.l.b16 %v2456
  %v2536 = vunpack.c.h.b16 %v2456
  %v2537 = vunpack.c.l.b16 %v2457
  %v2538 = vunpack.c.h.b16 %v2457
  %v2539 = vunpack.c.l.b16 %v2458
  %v2540 = vunpack.c.h.b16 %v2458
  %v2541 = vunpack.c.l.b16 %v2459
  %v2542 = vunpack.c.h.b16 %v2459
  %v2543 = vunpack.c.l.b16 %v2460
  %v2544 = vunpack.c.h.b16 %v2460
  %v2545 = vunpack.c.l.b16 %v2461
  %v2546 = vunpack.c.h.b16 %v2461
  %v2547 = vunpack.c.l.b16 %v2462
  %v2548 = vunpack.c.h.b16 %v2462
  %v2549 = vunpack.c.l.b16 %v2463
  %v2550 = vunpack.c.h.b16 %v2463
  %v2551 = vunpack.c.l.b16 %v2464
  %v2552 = vunpack.c.h.b16 %v2464
  %v2553 = vunpack.c.l.b16 %v2465
  %v2554 = vunpack.c.h.b16 %v2465
  %v2555 = vunpack.c.l.b16 %v2466
  %v2556 = vunpack.c.h.b16 %v2466
  %v2557 = vunpack.c.l.b16 %v2467
  %v2558 = vunpack.c.h.b16 %v2467
  %v2559 = vunpack.c.l.b16 %v2468
  %v2560 = vunpack.c.h.b16 %v2468
  %v2561 = vunpack.c.l.b16 %v2469
  %v2562 = vunpack.c.h.b16 %v2469
  %v2563 = vunpack.c.l.b16 %v2470
  %v2564 = vunpack.c.h.b16 %v2470
  %v2565 = vunpack.c.l.b16 %v2471
  %v2566 = vunpack.c.h.b16 %v2471
  %v2567 = vunpack.c.l.b16 %v2472
  %v2568 = vunpack.c.h.b16 %v2472
  %v2569 = vunpack.c.l.b16 %v2473
  %v2570 = vunpack.c.h.b16 %v2473
  %v2571 = vunpack.c.l.b16 %v2474
  %v2572 = vunpack.c.h.b16 %v2474
  %v2573 = vunpack.c.l.b16 %v2475
  %v2574 = vunpack.c.h.b16 %v2475
  %v2575 = vunpack.c.l.b16 %v2476
  %v2576 = vunpack.c.h.b16 %v2476
  %v2577 = vunpack.c.l.b16 %v2477
  %v2578 = vunpack.c.h.b16 %v2477
  %v2579 = vunpack.c.l.b16 %v2478
  %v2580 = vunpack.c.h.b16 %v2478
  %v2581 = vpack.c.b16 %v2521, %v2517
  %v2582 = vpack.c.b16 %v2522, %v2518
  %v2583 = vpack.c.b16 %v2523, %v2519
  %v2584 = vpack.c.b16 %v2524, %v2520
  %v2585 = vpack.c.b16 %v2529, %v2525
  %v2586 = vpack.c.b16 %v2530, %v2526
  %v2587 = vpack.c.b16 %v2531, %v2527
  %v2588 = vpack.c.b16 %v2532, %v2528
  %v2589 = vpack.c.b16 %v2537, %v2533
  %v2590 = vpack.c.b16 %v2538, %v2534
  %v2591 = vpack.c.b16 %v2539, %v2535
  %v2592 = vpack.c.b16 %v2540, %v2536
  %v2593 = vpack.c.b16 %v2545, %v2541
  %v2594 = vpack.c.b16 %v2546, %v2542
  %v2595 = vpack.c.b16 %v2547, %v2543
  %v2596 = vpack.c.b16 %v2548, %v2544
  %v2597 = vpack.c.b16 %v2553, %v2549
  %v2598 = vpack.c.b16 %v2554, %v2550
  %v2599 = vpack.c.b16 %v2555, %v2551
  %v2600 = vpack.c.b16 %v2556, %v2552
  %v2601 = vpack.c.b16 %v2561, %v2557
  %v2602 = vpack.c.b16 %v2562, %v2558
  %v2603 = vpack.c.b16 %v2563, %v2559
  %v2604 = vpack.c.b16 %v2564, %v2560
  %v2605 = vpack.c.b16 %v2569, %v2565
  %v2606 = vpack.c.b16 %v2570, %v2566
  %v2607 = vpack.c.b16 %v2571, %v2567
  %v2608 = vpack.c.b16 %v2572, %v2568
  %v2609 = vpack.c.b16 %v2577, %v2573
  %v2610 = vpack.c.b16 %v2578, %v2574
  %v2611 = vpack.c.b16 %v2579, %v2575
  %v2612 = vpack.c.b16 %v2580, %v2576
  %2645 = vmatpush.bf16.msra.mxu0 %v2609
  %2646 = vmatpush.bf16.msra.mxu0 %v2605
  %2647 = vmatpush.bf16.msra.mxu0 %v2601
  %2648 = vmatpush.bf16.msra.mxu0 %v2597
  %2649 = vmatpush.bf16.msra.mxu0 %v2593
  %2650 = vmatpush.bf16.msra.mxu0 %v2589
  %2651 = vmatpush.bf16.msra.mxu0 %v2585
  %2652 = vmatpush.bf16.msra.mxu0 %v2581
  %2653 = vmatmul.bf16.gmra.mxu0 %v2483
  %v2654 = vpop.f32.mrf.mxu0
  %v2655 = vadd.f32 0.0, %v2654
  %v2656 = vpop.f32.mrf.mxu0
  %v2657 = vadd.f32 0.0, %v2656
  %2658 = vdwg.mxu0
  %2659 = vmatpush.bf16.msra.mxu0 %v2610
  %2660 = vmatpush.bf16.msra.mxu0 %v2606
  %2661 = vmatpush.bf16.msra.mxu0 %v2602
  %2662 = vmatpush.bf16.msra.mxu0 %v2598
  %2663 = vmatpush.bf16.msra.mxu0 %v2594
  %2664 = vmatpush.bf16.msra.mxu0 %v2590
  %2665 = vmatpush.bf16.msra.mxu0 %v2586
  %2666 = vmatpush.bf16.msra.mxu0 %v2582
  %2667 = vmatmul.bf16.gmra.mxu0 %v2483
  %v2668 = vpop.f32.mrf.mxu0
  %v2669 = vadd.f32 0.0, %v2668
  %v2670 = vpop.f32.mrf.mxu0
  %v2671 = vadd.f32 0.0, %v2670
  %2672 = vdwg.mxu0
  %2673 = vmatpush.bf16.msra.mxu0 %v2611
  %2674 = vmatpush.bf16.msra.mxu0 %v2607
  %2675 = vmatpush.bf16.msra.mxu0 %v2603
  %2676 = vmatpush.bf16.msra.mxu0 %v2599
  %2677 = vmatpush.bf16.msra.mxu0 %v2595
  %2678 = vmatpush.bf16.msra.mxu0 %v2591
  %2679 = vmatpush.bf16.msra.mxu0 %v2587
  %2680 = vmatpush.bf16.msra.mxu0 %v2583
  %2681 = vmatmul.bf16.gmra.mxu0 %v2483
  %v2682 = vpop.f32.mrf.mxu0
  %v2683 = vadd.f32 0.0, %v2682
  %v2684 = vpop.f32.mrf.mxu0
  %v2685 = vadd.f32 0.0, %v2684
  %2686 = vdwg.mxu0
  %2687 = vmatpush.bf16.msra.mxu0 %v2612
  %2688 = vmatpush.bf16.msra.mxu0 %v2608
  %2689 = vmatpush.bf16.msra.mxu0 %v2604
  %2690 = vmatpush.bf16.msra.mxu0 %v2600
  %2691 = vmatpush.bf16.msra.mxu0 %v2596
  %2692 = vmatpush.bf16.msra.mxu0 %v2592
  %2693 = vmatpush.bf16.msra.mxu0 %v2588
  %2694 = vmatpush.bf16.msra.mxu0 %v2584
  %2695 = vmatmul.bf16.gmra.mxu0 %v2483
  %v2696 = vpop.f32.mrf.mxu0
  %v2697 = vadd.f32 0.0, %v2696
  %v2698 = vpop.f32.mrf.mxu0
  %v2699 = vadd.f32 0.0, %v2698
  %2700 = vdwg.mxu0
  %v2701 = vadd.f32 %v2439, %v2655
  %v2702 = vadd.f32 %v2440, %v2669
  %v2703 = vadd.f32 %v2441, %v2683
  %v2704 = vadd.f32 %v2442, %v2697
  %v2705 = vadd.f32 %v2443, %v2657
  %v2706 = vadd.f32 %v2444, %v2671
  %v2707 = vadd.f32 %v2445, %v2685
  %v2708 = vadd.f32 %v2446, %v2699
  %v2709 = vmul.f32 %v2701, 0.5
  %v2710 = vmul.f32 %v2705, 0.5
  %v2711 = vtanh.pop %v2709
  %v2712 = vtanh.pop %v2710
  %v2713 = vmul.f32 %v2711, 0.5
  %v2714 = vmul.f32 %v2712, 0.5
  %v2715 = vadd.f32 %v2713, 0.5
  %v2716 = vadd.f32 %v2714, 0.5
  %v2717 = vmul.f32 %v2702, 0.5
  %v2718 = vmul.f32 %v2706, 0.5
  %v2719 = vtanh.pop %v2717
  %v2720 = vtanh.pop %v2718
  %v2721 = vmul.f32 %v2719, 0.5
  %v2722 = vmul.f32 %v2720, 0.5
  %v2723 = vadd.f32 %v2721, 0.5
  %v2724 = vadd.f32 %v2722, 0.5
  %v2725 = vtanh.pop %v2703
  %v2726 = vtanh.pop %v2707
  %v2727 = vmul.f32 %v2704, 0.5
  %v2728 = vmul.f32 %v2708, 0.5
  %v2729 = vtanh.pop %v2727
  %v2730 = vtanh.pop %v2728
  %v2731 = vmul.f32 %v2729, 0.5
  %v2732 = vmul.f32 %v2730, 0.5
  %v2733 = vadd.f32 %v2731, 0.5
  %v2734 = vadd.f32 %v2732, 0.5
  %v2735 = vmul.f32 %v2723, %v2425
  %v2736 = vmul.f32 %v2724, %v2426
  %v2737 = vmul.f32 %v2715, %v2725
  %v2738 = vmul.f32 %v2716, %v2726
  %v2739 = vadd.f32 %v2735, %v2737
  %v2740 = vadd.f32 %v2736, %v2738
  %v2741 = vtanh.pop %v2739
  %v2742 = vtanh.pop %v2740
  %v2743 = vmul.f32 %v2733, %v2741
  %v2744 = vmul.f32 %v2734, %v2742
  %v2745 = vpack.c.bf16 %v2743, %v2743
  %v2746 = vpack.c.bf16 %v2744, %v2744
  %s2747 = scalar_lea.vmem [#allocation3], 48
  %2748 = vst [vmem:[%s2747] sm:$0xf] %v2745
  %2749 = vst [vmem:[%s2747 + $0x4] sm:$0xf] %v2746
  %s2750 = smul.u32 14, 4
  %s2751 = smul.addr %s2750, 8
  %s2752 = scalar_lea.vmem [#allocation2], %s2751
  %v2753 = vld [vmem:[%s2752] sm:$0xff]
  %v2754 = vld [vmem:[%s2752 + $0x8] sm:$0xff]
  %v2755 = vld [vmem:[%s2752 + $0x10] sm:$0xff]
  %v2756 = vld [vmem:[%s2752 + $0x18] sm:$0xff]
  %v2757 = vld [vmem:[%s2752 + $0x20] sm:$0xff]
  %v2758 = vld [vmem:[%s2752 + $0x28] sm:$0xff]
  %v2759 = vld [vmem:[%s2752 + $0x30] sm:$0xff]
  %v2760 = vld [vmem:[%s2752 + $0x38] sm:$0xff]
  %v2761 = vld [vmem:[%s2] sm:$0xff]
  %v2762 = vld [vmem:[%s2 + $0x8] sm:$0xff]
  %v2763 = vld [vmem:[%s2 + $0x10] sm:$0xff]
  %v2764 = vld [vmem:[%s2 + $0x18] sm:$0xff]
  %v2765 = vld [vmem:[%s2 + $0x20] sm:$0xff]
  %v2766 = vld [vmem:[%s2 + $0x28] sm:$0xff]
  %v2767 = vld [vmem:[%s2 + $0x30] sm:$0xff]
  %v2768 = vld [vmem:[%s2 + $0x38] sm:$0xff]
  %v2769 = vld [vmem:[%s2 + $0x40] sm:$0xff]
  %v2770 = vld [vmem:[%s2 + $0x48] sm:$0xff]
  %v2771 = vld [vmem:[%s2 + $0x50] sm:$0xff]
  %v2772 = vld [vmem:[%s2 + $0x58] sm:$0xff]
  %v2773 = vld [vmem:[%s2 + $0x60] sm:$0xff]
  %v2774 = vld [vmem:[%s2 + $0x68] sm:$0xff]
  %v2775 = vld [vmem:[%s2 + $0x70] sm:$0xff]
  %v2776 = vld [vmem:[%s2 + $0x78] sm:$0xff]
  %v2777 = vld [vmem:[%s2 + $0x80] sm:$0xff]
  %v2778 = vld [vmem:[%s2 + $0x88] sm:$0xff]
  %v2779 = vld [vmem:[%s2 + $0x90] sm:$0xff]
  %v2780 = vld [vmem:[%s2 + $0x98] sm:$0xff]
  %v2781 = vld [vmem:[%s2 + $0xa0] sm:$0xff]
  %v2782 = vld [vmem:[%s2 + $0xa8] sm:$0xff]
  %v2783 = vld [vmem:[%s2 + $0xb0] sm:$0xff]
  %v2784 = vld [vmem:[%s2 + $0xb8] sm:$0xff]
  %v2785 = vld [vmem:[%s2 + $0xc0] sm:$0xff]
  %v2786 = vld [vmem:[%s2 + $0xc8] sm:$0xff]
  %v2787 = vld [vmem:[%s2 + $0xd0] sm:$0xff]
  %v2788 = vld [vmem:[%s2 + $0xd8] sm:$0xff]
  %v2789 = vld [vmem:[%s2 + $0xe0] sm:$0xff]
  %v2790 = vld [vmem:[%s2 + $0xe8] sm:$0xff]
  %v2791 = vld [vmem:[%s2 + $0xf0] sm:$0xff]
  %v2792 = vld [vmem:[%s2 + $0xf8] sm:$0xff]
  %v2795 = vunpack.c.l.b16 %v2745
  %v2796 = vunpack.c.l.b16 %v2746
  %v2797 = vpack.c.b16 %v2796, %v2795
  %v2831 = vunpack.c.l.b16 %v2761
  %v2832 = vunpack.c.h.b16 %v2761
  %v2833 = vunpack.c.l.b16 %v2762
  %v2834 = vunpack.c.h.b16 %v2762
  %v2835 = vunpack.c.l.b16 %v2763
  %v2836 = vunpack.c.h.b16 %v2763
  %v2837 = vunpack.c.l.b16 %v2764
  %v2838 = vunpack.c.h.b16 %v2764
  %v2839 = vunpack.c.l.b16 %v2765
  %v2840 = vunpack.c.h.b16 %v2765
  %v2841 = vunpack.c.l.b16 %v2766
  %v2842 = vunpack.c.h.b16 %v2766
  %v2843 = vunpack.c.l.b16 %v2767
  %v2844 = vunpack.c.h.b16 %v2767
  %v2845 = vunpack.c.l.b16 %v2768
  %v2846 = vunpack.c.h.b16 %v2768
  %v2847 = vunpack.c.l.b16 %v2769
  %v2848 = vunpack.c.h.b16 %v2769
  %v2849 = vunpack.c.l.b16 %v2770
  %v2850 = vunpack.c.h.b16 %v2770
  %v2851 = vunpack.c.l.b16 %v2771
  %v2852 = vunpack.c.h.b16 %v2771
  %v2853 = vunpack.c.l.b16 %v2772
  %v2854 = vunpack.c.h.b16 %v2772
  %v2855 = vunpack.c.l.b16 %v2773
  %v2856 = vunpack.c.h.b16 %v2773
  %v2857 = vunpack.c.l.b16 %v2774
  %v2858 = vunpack.c.h.b16 %v2774
  %v2859 = vunpack.c.l.b16 %v2775
  %v2860 = vunpack.c.h.b16 %v2775
  %v2861 = vunpack.c.l.b16 %v2776
  %v2862 = vunpack.c.h.b16 %v2776
  %v2863 = vunpack.c.l.b16 %v2777
  %v2864 = vunpack.c.h.b16 %v2777
  %v2865 = vunpack.c.l.b16 %v2778
  %v2866 = vunpack.c.h.b16 %v2778
  %v2867 = vunpack.c.l.b16 %v2779
  %v2868 = vunpack.c.h.b16 %v2779
  %v2869 = vunpack.c.l.b16 %v2780
  %v2870 = vunpack.c.h.b16 %v2780
  %v2871 = vunpack.c.l.b16 %v2781
  %v2872 = vunpack.c.h.b16 %v2781
  %v2873 = vunpack.c.l.b16 %v2782
  %v2874 = vunpack.c.h.b16 %v2782
  %v2875 = vunpack.c.l.b16 %v2783
  %v2876 = vunpack.c.h.b16 %v2783
  %v2877 = vunpack.c.l.b16 %v2784
  %v2878 = vunpack.c.h.b16 %v2784
  %v2879 = vunpack.c.l.b16 %v2785
  %v2880 = vunpack.c.h.b16 %v2785
  %v2881 = vunpack.c.l.b16 %v2786
  %v2882 = vunpack.c.h.b16 %v2786
  %v2883 = vunpack.c.l.b16 %v2787
  %v2884 = vunpack.c.h.b16 %v2787
  %v2885 = vunpack.c.l.b16 %v2788
  %v2886 = vunpack.c.h.b16 %v2788
  %v2887 = vunpack.c.l.b16 %v2789
  %v2888 = vunpack.c.h.b16 %v2789
  %v2889 = vunpack.c.l.b16 %v2790
  %v2890 = vunpack.c.h.b16 %v2790
  %v2891 = vunpack.c.l.b16 %v2791
  %v2892 = vunpack.c.h.b16 %v2791
  %v2893 = vunpack.c.l.b16 %v2792
  %v2894 = vunpack.c.h.b16 %v2792
  %v2895 = vpack.c.b16 %v2835, %v2831
  %v2896 = vpack.c.b16 %v2836, %v2832
  %v2897 = vpack.c.b16 %v2837, %v2833
  %v2898 = vpack.c.b16 %v2838, %v2834
  %v2899 = vpack.c.b16 %v2843, %v2839
  %v2900 = vpack.c.b16 %v2844, %v2840
  %v2901 = vpack.c.b16 %v2845, %v2841
  %v2902 = vpack.c.b16 %v2846, %v2842
  %v2903 = vpack.c.b16 %v2851, %v2847
  %v2904 = vpack.c.b16 %v2852, %v2848
  %v2905 = vpack.c.b16 %v2853, %v2849
  %v2906 = vpack.c.b16 %v2854, %v2850
  %v2907 = vpack.c.b16 %v2859, %v2855
  %v2908 = vpack.c.b16 %v2860, %v2856
  %v2909 = vpack.c.b16 %v2861, %v2857
  %v2910 = vpack.c.b16 %v2862, %v2858
  %v2911 = vpack.c.b16 %v2867, %v2863
  %v2912 = vpack.c.b16 %v2868, %v2864
  %v2913 = vpack.c.b16 %v2869, %v2865
  %v2914 = vpack.c.b16 %v2870, %v2866
  %v2915 = vpack.c.b16 %v2875, %v2871
  %v2916 = vpack.c.b16 %v2876, %v2872
  %v2917 = vpack.c.b16 %v2877, %v2873
  %v2918 = vpack.c.b16 %v2878, %v2874
  %v2919 = vpack.c.b16 %v2883, %v2879
  %v2920 = vpack.c.b16 %v2884, %v2880
  %v2921 = vpack.c.b16 %v2885, %v2881
  %v2922 = vpack.c.b16 %v2886, %v2882
  %v2923 = vpack.c.b16 %v2891, %v2887
  %v2924 = vpack.c.b16 %v2892, %v2888
  %v2925 = vpack.c.b16 %v2893, %v2889
  %v2926 = vpack.c.b16 %v2894, %v2890
  %2959 = vmatpush.bf16.msra.mxu0 %v2923
  %2960 = vmatpush.bf16.msra.mxu0 %v2919
  %2961 = vmatpush.bf16.msra.mxu0 %v2915
  %2962 = vmatpush.bf16.msra.mxu0 %v2911
  %2963 = vmatpush.bf16.msra.mxu0 %v2907
  %2964 = vmatpush.bf16.msra.mxu0 %v2903
  %2965 = vmatpush.bf16.msra.mxu0 %v2899
  %2966 = vmatpush.bf16.msra.mxu0 %v2895
  %2967 = vmatmul.bf16.gmra.mxu0 %v2797
  %v2968 = vpop.f32.mrf.mxu0
  %v2969 = vadd.f32 0.0, %v2968
  %v2970 = vpop.f32.mrf.mxu0
  %v2971 = vadd.f32 0.0, %v2970
  %2972 = vdwg.mxu0
  %2973 = vmatpush.bf16.msra.mxu0 %v2924
  %2974 = vmatpush.bf16.msra.mxu0 %v2920
  %2975 = vmatpush.bf16.msra.mxu0 %v2916
  %2976 = vmatpush.bf16.msra.mxu0 %v2912
  %2977 = vmatpush.bf16.msra.mxu0 %v2908
  %2978 = vmatpush.bf16.msra.mxu0 %v2904
  %2979 = vmatpush.bf16.msra.mxu0 %v2900
  %2980 = vmatpush.bf16.msra.mxu0 %v2896
  %2981 = vmatmul.bf16.gmra.mxu0 %v2797
  %v2982 = vpop.f32.mrf.mxu0
  %v2983 = vadd.f32 0.0, %v2982
  %v2984 = vpop.f32.mrf.mxu0
  %v2985 = vadd.f32 0.0, %v2984
  %2986 = vdwg.mxu0
  %2987 = vmatpush.bf16.msra.mxu0 %v2925
  %2988 = vmatpush.bf16.msra.mxu0 %v2921
  %2989 = vmatpush.bf16.msra.mxu0 %v2917
  %2990 = vmatpush.bf16.msra.mxu0 %v2913
  %2991 = vmatpush.bf16.msra.mxu0 %v2909
  %2992 = vmatpush.bf16.msra.mxu0 %v2905
  %2993 = vmatpush.bf16.msra.mxu0 %v2901
  %2994 = vmatpush.bf16.msra.mxu0 %v2897
  %2995 = vmatmul.bf16.gmra.mxu0 %v2797
  %v2996 = vpop.f32.mrf.mxu0
  %v2997 = vadd.f32 0.0, %v2996
  %v2998 = vpop.f32.mrf.mxu0
  %v2999 = vadd.f32 0.0, %v2998
  %3000 = vdwg.mxu0
  %3001 = vmatpush.bf16.msra.mxu0 %v2926
  %3002 = vmatpush.bf16.msra.mxu0 %v2922
  %3003 = vmatpush.bf16.msra.mxu0 %v2918
  %3004 = vmatpush.bf16.msra.mxu0 %v2914
  %3005 = vmatpush.bf16.msra.mxu0 %v2910
  %3006 = vmatpush.bf16.msra.mxu0 %v2906
  %3007 = vmatpush.bf16.msra.mxu0 %v2902
  %3008 = vmatpush.bf16.msra.mxu0 %v2898
  %3009 = vmatmul.bf16.gmra.mxu0 %v2797
  %v3010 = vpop.f32.mrf.mxu0
  %v3011 = vadd.f32 0.0, %v3010
  %v3012 = vpop.f32.mrf.mxu0
  %v3013 = vadd.f32 0.0, %v3012
  %3014 = vdwg.mxu0
  %v3015 = vadd.f32 %v2753, %v2969
  %v3016 = vadd.f32 %v2754, %v2983
  %v3017 = vadd.f32 %v2755, %v2997
  %v3018 = vadd.f32 %v2756, %v3011
  %v3019 = vadd.f32 %v2757, %v2971
  %v3020 = vadd.f32 %v2758, %v2985
  %v3021 = vadd.f32 %v2759, %v2999
  %v3022 = vadd.f32 %v2760, %v3013
  %v3023 = vmul.f32 %v3015, 0.5
  %v3024 = vmul.f32 %v3019, 0.5
  %v3025 = vtanh.pop %v3023
  %v3026 = vtanh.pop %v3024
  %v3027 = vmul.f32 %v3025, 0.5
  %v3028 = vmul.f32 %v3026, 0.5
  %v3029 = vadd.f32 %v3027, 0.5
  %v3030 = vadd.f32 %v3028, 0.5
  %v3031 = vmul.f32 %v3016, 0.5
  %v3032 = vmul.f32 %v3020, 0.5
  %v3033 = vtanh.pop %v3031
  %v3034 = vtanh.pop %v3032
  %v3035 = vmul.f32 %v3033, 0.5
  %v3036 = vmul.f32 %v3034, 0.5
  %v3037 = vadd.f32 %v3035, 0.5
  %v3038 = vadd.f32 %v3036, 0.5
  %v3039 = vtanh.pop %v3017
  %v3040 = vtanh.pop %v3021
  %v3041 = vmul.f32 %v3018, 0.5
  %v3042 = vmul.f32 %v3022, 0.5
  %v3043 = vtanh.pop %v3041
  %v3044 = vtanh.pop %v3042
  %v3045 = vmul.f32 %v3043, 0.5
  %v3046 = vmul.f32 %v3044, 0.5
  %v3047 = vadd.f32 %v3045, 0.5
  %v3048 = vadd.f32 %v3046, 0.5
  %v3049 = vmul.f32 %v3037, %v2739
  %v3050 = vmul.f32 %v3038, %v2740
  %v3051 = vmul.f32 %v3029, %v3039
  %v3052 = vmul.f32 %v3030, %v3040
  %v3053 = vadd.f32 %v3049, %v3051
  %v3054 = vadd.f32 %v3050, %v3052
  %v3055 = vtanh.pop %v3053
  %v3056 = vtanh.pop %v3054
  %v3057 = vmul.f32 %v3047, %v3055
  %v3058 = vmul.f32 %v3048, %v3056
  %v3059 = vpack.c.bf16 %v3057, %v3057
  %v3060 = vpack.c.bf16 %v3058, %v3058
  %s3061 = scalar_lea.vmem [#allocation3], 56
  %3062 = vst [vmem:[%s3061] sm:$0xf] %v3059
  %3063 = vst [vmem:[%s3061 + $0x4] sm:$0xf] %v3060
  %v3064 = vld [vmem:[#allocation3] sm:$0xf]
  %v3065 = vld [vmem:[#allocation3 + $0x4] sm:$0xf]
  %v3066 = vld [vmem:[#allocation3 + $0x8] sm:$0xf]
  %v3067 = vld [vmem:[#allocation3 + $0xc] sm:$0xf]
  %v3068 = vld [vmem:[#allocation3 + $0x10] sm:$0xf]
  %v3069 = vld [vmem:[#allocation3 + $0x14] sm:$0xf]
  %v3070 = vld [vmem:[#allocation3 + $0x18] sm:$0xf]
  %v3071 = vld [vmem:[#allocation3 + $0x1c] sm:$0xf]
  %v3072 = vld [vmem:[#allocation3 + $0x20] sm:$0xf]
  %v3073 = vld [vmem:[#allocation3 + $0x24] sm:$0xf]
  %v3074 = vld [vmem:[#allocation3 + $0x28] sm:$0xf]
  %v3075 = vld [vmem:[#allocation3 + $0x2c] sm:$0xf]
  %v3076 = vld [vmem:[#allocation3 + $0x30] sm:$0xf]
  %v3077 = vld [vmem:[#allocation3 + $0x34] sm:$0xf]
  %v3078 = vld [vmem:[#allocation3 + $0x38] sm:$0xf]
  %v3079 = vld [vmem:[#allocation3 + $0x3c] sm:$0xf]
  %v3080 = vld [vmem:[%s4] sm:$0xff]
  %v3081 = vld [vmem:[%s4 + $0x8] sm:$0xff]
  %v3082 = vld [vmem:[%s4 + $0x10] sm:$0xff]
  %v3083 = vld [vmem:[%s4 + $0x18] sm:$0xff]
  %v3084 = vld [vmem:[%s4 + $0x20] sm:$0xff]
  %v3085 = vld [vmem:[%s4 + $0x28] sm:$0xff]
  %v3086 = vld [vmem:[%s4 + $0x30] sm:$0xff]
  %v3087 = vld [vmem:[%s4 + $0x38] sm:$0xff]
  %v3088 = vld [vmem:[%s4 + $0x40] sm:$0xff]
  %v3089 = vld [vmem:[%s4 + $0x48] sm:$0xff]
  %v3090 = vld [vmem:[%s4 + $0x50] sm:$0xff]
  %v3091 = vld [vmem:[%s4 + $0x58] sm:$0xff]
  %v3092 = vld [vmem:[%s4 + $0x60] sm:$0xff]
  %v3093 = vld [vmem:[%s4 + $0x68] sm:$0xff]
  %v3094 = vld [vmem:[%s4 + $0x70] sm:$0xff]
  %v3095 = vld [vmem:[%s4 + $0x78] sm:$0xff]
  %v3096 = vld [vmem:[%s4 + $0x80] sm:$0xff]
  %v3097 = vld [vmem:[%s4 + $0x88] sm:$0xff]
  %v3098 = vld [vmem:[%s4 + $0x90] sm:$0xff]
  %v3099 = vld [vmem:[%s4 + $0x98] sm:$0xff]
  %v3100 = vld [vmem:[%s4 + $0xa0] sm:$0xff]
  %v3101 = vld [vmem:[%s4 + $0xa8] sm:$0xff]
  %v3102 = vld [vmem:[%s4 + $0xb0] sm:$0xff]
  %v3103 = vld [vmem:[%s4 + $0xb8] sm:$0xff]
  %v3104 = vld [vmem:[%s4 + $0xc0] sm:$0xff]
  %v3105 = vld [vmem:[%s4 + $0xc8] sm:$0xff]
  %v3106 = vld [vmem:[%s4 + $0xd0] sm:$0xff]
  %v3107 = vld [vmem:[%s4 + $0xd8] sm:$0xff]
  %v3108 = vld [vmem:[%s4 + $0xe0] sm:$0xff]
  %v3109 = vld [vmem:[%s4 + $0xe8] sm:$0xff]
  %v3110 = vld [vmem:[%s4 + $0xf0] sm:$0xff]
  %v3111 = vld [vmem:[%s4 + $0xf8] sm:$0xff]
  %v3112 = vld [vmem:[%s6] sm:$0xf]
  %v3114 = vperm.slane %v3112, 0
  %v3115 = vperm.slane %v3112, 1
  %v3116 = vperm.slane %v3112, 2
  %v3117 = vperm.slane %v3112, 3
  %v3138 = vunpack.c.l.b16 %v3064
  %v3139 = vunpack.c.l.b16 %v3065
  %v3140 = vunpack.c.l.b16 %v3066
  %v3141 = vunpack.c.l.b16 %v3067
  %v3142 = vunpack.c.l.b16 %v3068
  %v3143 = vunpack.c.l.b16 %v3069
  %v3144 = vunpack.c.l.b16 %v3070
  %v3145 = vunpack.c.l.b16 %v3071
  %v3146 = vunpack.c.l.b16 %v3072
  %v3147 = vunpack.c.l.b16 %v3073
  %v3148 = vunpack.c.l.b16 %v3074
  %v3149 = vunpack.c.l.b16 %v3075
  %v3150 = vunpack.c.l.b16 %v3076
  %v3151 = vunpack.c.l.b16 %v3077
  %v3152 = vunpack.c.l.b16 %v3078
  %v3153 = vunpack.c.l.b16 %v3079
  %v3154 = vpack.c.b16 %v3139, %v3138
  %v3155 = vpack.c.b16 %v3141, %v3140
  %v3156 = vpack.c.b16 %v3143, %v3142
  %v3157 = vpack.c.b16 %v3145, %v3144
  %v3158 = vpack.c.b16 %v3147, %v3146
  %v3159 = vpack.c.b16 %v3149, %v3148
  %v3160 = vpack.c.b16 %v3151, %v3150
  %v3161 = vpack.c.b16 %v3153, %v3152
  %v3202 = vunpack.c.l.b16 %v3080
  %v3203 = vunpack.c.h.b16 %v3080
  %v3204 = vunpack.c.l.b16 %v3081
  %v3205 = vunpack.c.h.b16 %v3081
  %v3206 = vunpack.c.l.b16 %v3082
  %v3207 = vunpack.c.h.b16 %v3082
  %v3208 = vunpack.c.l.b16 %v3083
  %v3209 = vunpack.c.h.b16 %v3083
  %v3210 = vunpack.c.l.b16 %v3084
  %v3211 = vunpack.c.h.b16 %v3084
  %v3212 = vunpack.c.l.b16 %v3085
  %v3213 = vunpack.c.h.b16 %v3085
  %v3214 = vunpack.c.l.b16 %v3086
  %v3215 = vunpack.c.h.b16 %v3086
  %v3216 = vunpack.c.l.b16 %v3087
  %v3217 = vunpack.c.h.b16 %v3087
  %v3218 = vunpack.c.l.b16 %v3088
  %v3219 = vunpack.c.h.b16 %v3088
  %v3220 = vunpack.c.l.b16 %v3089
  %v3221 = vunpack.c.h.b16 %v3089
  %v3222 = vunpack.c.l.b16 %v3090
  %v3223 = vunpack.c.h.b16 %v3090
  %v3224 = vunpack.c.l.b16 %v3091
  %v3225 = vunpack.c.h.b16 %v3091
  %v3226 = vunpack.c.l.b16 %v3092
  %v3227 = vunpack.c.h.b16 %v3092
  %v3228 = vunpack.c.l.b16 %v3093
  %v3229 = vunpack.c.h.b16 %v3093
  %v3230 = vunpack.c.l.b16 %v3094
  %v3231 = vunpack.c.h.b16 %v3094
  %v3232 = vunpack.c.l.b16 %v3095
  %v3233 = vunpack.c.h.b16 %v3095
  %v3234 = vunpack.c.l.b16 %v3096
  %v3235 = vunpack.c.h.b16 %v3096
  %v3236 = vunpack.c.l.b16 %v3097
  %v3237 = vunpack.c.h.b16 %v3097
  %v3238 = vunpack.c.l.b16 %v3098
  %v3239 = vunpack.c.h.b16 %v3098
  %v3240 = vunpack.c.l.b16 %v3099
  %v3241 = vunpack.c.h.b16 %v3099
  %v3242 = vunpack.c.l.b16 %v3100
  %v3243 = vunpack.c.h.b16 %v3100
  %v3244 = vunpack.c.l.b16 %v3101
  %v3245 = vunpack.c.h.b16 %v3101
  %v3246 = vunpack.c.l.b16 %v3102
  %v3247 = vunpack.c.h.b16 %v3102
  %v3248 = vunpack.c.l.b16 %v3103
  %v3249 = vunpack.c.h.b16 %v3103
  %v3250 = vunpack.c.l.b16 %v3104
  %v3251 = vunpack.c.h.b16 %v3104
  %v3252 = vunpack.c.l.b16 %v3105
  %v3253 = vunpack.c.h.b16 %v3105
  %v3254 = vunpack.c.l.b16 %v3106
  %v3255 = vunpack.c.h.b16 %v3106
  %v3256 = vunpack.c.l.b16 %v3107
  %v3257 = vunpack.c.h.b16 %v3107
  %v3258 = vunpack.c.l.b16 %v3108
  %v3259 = vunpack.c.h.b16 %v3108
  %v3260 = vunpack.c.l.b16 %v3109
  %v3261 = vunpack.c.h.b16 %v3109
  %v3262 = vunpack.c.l.b16 %v3110
  %v3263 = vunpack.c.h.b16 %v3110
  %v3264 = vunpack.c.l.b16 %v3111
  %v3265 = vunpack.c.h.b16 %v3111
  %v3266 = vpack.c.b16 %v3206, %v3202
  %v3267 = vpack.c.b16 %v3207, %v3203
  %v3268 = vpack.c.b16 %v3208, %v3204
  %v3269 = vpack.c.b16 %v3209, %v3205
  %v3270 = vpack.c.b16 %v3214, %v3210
  %v3271 = vpack.c.b16 %v3215, %v3211
  %v3272 = vpack.c.b16 %v3216, %v3212
  %v3273 = vpack.c.b16 %v3217, %v3213
  %v3274 = vpack.c.b16 %v3222, %v3218
  %v3275 = vpack.c.b16 %v3223, %v3219
  %v3276 = vpack.c.b16 %v3224, %v3220
  %v3277 = vpack.c.b16 %v3225, %v3221
  %v3278 = vpack.c.b16 %v3230, %v3226
  %v3279 = vpack.c.b16 %v3231, %v3227
  %v3280 = vpack.c.b16 %v3232, %v3228
  %v3281 = vpack.c.b16 %v3233, %v3229
  %v3282 = vpack.c.b16 %v3238, %v3234
  %v3283 = vpack.c.b16 %v3239, %v3235
  %v3284 = vpack.c.b16 %v3240, %v3236
  %v3285 = vpack.c.b16 %v3241, %v3237
  %v3286 = vpack.c.b16 %v3246, %v3242
  %v3287 = vpack.c.b16 %v3247, %v3243
  %v3288 = vpack.c.b16 %v3248, %v3244
  %v3289 = vpack.c.b16 %v3249, %v3245
  %v3290 = vpack.c.b16 %v3254, %v3250
  %v3291 = vpack.c.b16 %v3255, %v3251
  %v3292 = vpack.c.b16 %v3256, %v3252
  %v3293 = vpack.c.b16 %v3257, %v3253
  %v3294 = vpack.c.b16 %v3262, %v3258
  %v3295 = vpack.c.b16 %v3263, %v3259
  %v3296 = vpack.c.b16 %v3264, %v3260
  %v3297 = vpack.c.b16 %v3265, %v3261
  %3330 = vmatpush.bf16.msra.mxu0 %v3294
  %3331 = vmatpush.bf16.msra.mxu0 %v3290
  %3332 = vmatpush.bf16.msra.mxu0 %v3286
  %3333 = vmatpush.bf16.msra.mxu0 %v3282
  %3334 = vmatpush.bf16.msra.mxu0 %v3278
  %3335 = vmatpush.bf16.msra.mxu0 %v3274
  %3336 = vmatpush.bf16.msra.mxu0 %v3270
  %3337 = vmatpush.bf16.msra.mxu0 %v3266
  %3338 = vmatmul.bf16.gmra.mxu0 %v3154
  %v3339 = vpop.f32.mrf.mxu0
  %v3340 = vadd.f32 %v3114, %v3339
  %v3341 = vpop.f32.mrf.mxu0
  %v3342 = vadd.f32 %v3114, %v3341
  %3343 = vmatmul.bf16.gmra.mxu0 %v3155
  %v3344 = vpop.f32.mrf.mxu0
  %v3345 = vadd.f32 %v3114, %v3344
  %v3346 = vpop.f32.mrf.mxu0
  %v3347 = vadd.f32 %v3114, %v3346
  %3348 = vmatmul.bf16.gmra.mxu0 %v3156
  %v3349 = vpop.f32.mrf.mxu0
  %v3350 = vadd.f32 %v3114, %v3349
  %v3351 = vpop.f32.mrf.mxu0
  %v3352 = vadd.f32 %v3114, %v3351
  %3353 = vmatmul.bf16.gmra.mxu0 %v3157
  %v3354 = vpop.f32.mrf.mxu0
  %v3355 = vadd.f32 %v3114, %v3354
  %v3356 = vpop.f32.mrf.mxu0
  %v3357 = vadd.f32 %v3114, %v3356
  %3358 = vmatmul.bf16.gmra.mxu0 %v3158
  %v3359 = vpop.f32.mrf.mxu0
  %v3360 = vadd.f32 %v3114, %v3359
  %v3361 = vpop.f32.mrf.mxu0
  %v3362 = vadd.f32 %v3114, %v3361
  %3363 = vmatmul.bf16.gmra.mxu0 %v3159
  %v3364 = vpop.f32.mrf.mxu0
  %v3365 = vadd.f32 %v3114, %v3364
  %v3366 = vpop.f32.mrf.mxu0
  %v3367 = vadd.f32 %v3114, %v3366
  %3368 = vmatmul.bf16.gmra.mxu0 %v3160
  %v3369 = vpop.f32.mrf.mxu0
  %v3370 = vadd.f32 %v3114, %v3369
  %v3371 = vpop.f32.mrf.mxu0
  %v3372 = vadd.f32 %v3114, %v3371
  %3373 = vmatmul.bf16.gmra.mxu0 %v3161
  %v3374 = vpop.f32.mrf.mxu0
  %v3375 = vadd.f32 %v3114, %v3374
  %v3376 = vpop.f32.mrf.mxu0
  %v3377 = vadd.f32 %v3114, %v3376
  %3378 = vdwg.mxu0
  %3379 = vmatpush.bf16.msra.mxu0 %v3295
  %3380 = vmatpush.bf16.msra.mxu0 %v3291
  %3381 = vmatpush.bf16.msra.mxu0 %v3287
  %3382 = vmatpush.bf16.msra.mxu0 %v3283
  %3383 = vmatpush.bf16.msra.mxu0 %v3279
  %3384 = vmatpush.bf16.msra.mxu0 %v3275
  %3385 = vmatpush.bf16.msra.mxu0 %v3271
  %3386 = vmatpush.bf16.msra.mxu0 %v3267
  %3387 = vmatmul.bf16.gmra.mxu0 %v3154
  %v3388 = vpop.f32.mrf.mxu0
  %v3389 = vadd.f32 %v3115, %v3388
  %v3390 = vpop.f32.mrf.mxu0
  %v3391 = vadd.f32 %v3115, %v3390
  %3392 = vmatmul.bf16.gmra.mxu0 %v3155
  %v3393 = vpop.f32.mrf.mxu0
  %v3394 = vadd.f32 %v3115, %v3393
  %v3395 = vpop.f32.mrf.mxu0
  %v3396 = vadd.f32 %v3115, %v3395
  %3397 = vmatmul.bf16.gmra.mxu0 %v3156
  %v3398 = vpop.f32.mrf.mxu0
  %v3399 = vadd.f32 %v3115, %v3398
  %v3400 = vpop.f32.mrf.mxu0
  %v3401 = vadd.f32 %v3115, %v3400
  %3402 = vmatmul.bf16.gmra.mxu0 %v3157
  %v3403 = vpop.f32.mrf.mxu0
  %v3404 = vadd.f32 %v3115, %v3403
  %v3405 = vpop.f32.mrf.mxu0
  %v3406 = vadd.f32 %v3115, %v3405
  %3407 = vmatmul.bf16.gmra.mxu0 %v3158
  %v3408 = vpop.f32.mrf.mxu0
  %v3409 = vadd.f32 %v3115, %v3408
  %v3410 = vpop.f32.mrf.mxu0
  %v3411 = vadd.f32 %v3115, %v3410
  %3412 = vmatmul.bf16.gmra.mxu0 %v3159
  %v3413 = vpop.f32.mrf.mxu0
  %v3414 = vadd.f32 %v3115, %v3413
  %v3415 = vpop.f32.mrf.mxu0
  %v3416 = vadd.f32 %v3115, %v3415
  %3417 = vmatmul.bf16.gmra.mxu0 %v3160
  %v3418 = vpop.f32.mrf.mxu0
  %v3419 = vadd.f32 %v3115, %v3418
  %v3420 = vpop.f32.mrf.mxu0
  %v3421 = vadd.f32 %v3115, %v3420
  %3422 = vmatmul.bf16.gmra.mxu0 %v3161
  %v3423 = vpop.f32.mrf.mxu0
  %v3424 = vadd.f32 %v3115, %v3423
  %v3425 = vpop.f32.mrf.mxu0
  %v3426 = vadd.f32 %v3115, %v3425
  %3427 = vdwg.mxu0
  %3428 = vmatpush.bf16.msra.mxu0 %v3296
  %3429 = vmatpush.bf16.msra.mxu0 %v3292
  %3430 = vmatpush.bf16.msra.mxu0 %v3288
  %3431 = vmatpush.bf16.msra.mxu0 %v3284
  %3432 = vmatpush.bf16.msra.mxu0 %v3280
  %3433 = vmatpush.bf16.msra.mxu0 %v3276
  %3434 = vmatpush.bf16.msra.mxu0 %v3272
  %3435 = vmatpush.bf16.msra.mxu0 %v3268
  %3436 = vmatmul.bf16.gmra.mxu0 %v3154
  %v3437 = vpop.f32.mrf.mxu0
  %v3438 = vadd.f32 %v3116, %v3437
  %v3439 = vpop.f32.mrf.mxu0
  %v3440 = vadd.f32 %v3116, %v3439
  %3441 = vmatmul.bf16.gmra.mxu0 %v3155
  %v3442 = vpop.f32.mrf.mxu0
  %v3443 = vadd.f32 %v3116, %v3442
  %v3444 = vpop.f32.mrf.mxu0
  %v3445 = vadd.f32 %v3116, %v3444
  %3446 = vmatmul.bf16.gmra.mxu0 %v3156
  %v3447 = vpop.f32.mrf.mxu0
  %v3448 = vadd.f32 %v3116, %v3447
  %v3449 = vpop.f32.mrf.mxu0
  %v3450 = vadd.f32 %v3116, %v3449
  %3451 = vmatmul.bf16.gmra.mxu0 %v3157
  %v3452 = vpop.f32.mrf.mxu0
  %v3453 = vadd.f32 %v3116, %v3452
  %v3454 = vpop.f32.mrf.mxu0
  %v3455 = vadd.f32 %v3116, %v3454
  %3456 = vmatmul.bf16.gmra.mxu0 %v3158
  %v3457 = vpop.f32.mrf.mxu0
  %v3458 = vadd.f32 %v3116, %v3457
  %v3459 = vpop.f32.mrf.mxu0
  %v3460 = vadd.f32 %v3116, %v3459
  %3461 = vmatmul.bf16.gmra.mxu0 %v3159
  %v3462 = vpop.f32.mrf.mxu0
  %v3463 = vadd.f32 %v3116, %v3462
  %v3464 = vpop.f32.mrf.mxu0
  %v3465 = vadd.f32 %v3116, %v3464
  %3466 = vmatmul.bf16.gmra.mxu0 %v3160
  %v3467 = vpop.f32.mrf.mxu0
  %v3468 = vadd.f32 %v3116, %v3467
  %v3469 = vpop.f32.mrf.mxu0
  %v3470 = vadd.f32 %v3116, %v3469
  %3471 = vmatmul.bf16.gmra.mxu0 %v3161
  %v3472 = vpop.f32.mrf.mxu0
  %v3473 = vadd.f32 %v3116, %v3472
  %v3474 = vpop.f32.mrf.mxu0
  %v3475 = vadd.f32 %v3116, %v3474
  %3476 = vdwg.mxu0
  %3477 = vmatpush.bf16.msra.mxu0 %v3297
  %3478 = vmatpush.bf16.msra.mxu0 %v3293
  %3479 = vmatpush.bf16.msra.mxu0 %v3289
  %3480 = vmatpush.bf16.msra.mxu0 %v3285
  %3481 = vmatpush.bf16.msra.mxu0 %v3281
  %3482 = vmatpush.bf16.msra.mxu0 %v3277
  %3483 = vmatpush.bf16.msra.mxu0 %v3273
  %3484 = vmatpush.bf16.msra.mxu0 %v3269
  %3485 = vmatmul.bf16.gmra.mxu0 %v3154
  %v3486 = vpop.f32.mrf.mxu0
  %v3487 = vadd.f32 %v3117, %v3486
  %v3488 = vpop.f32.mrf.mxu0
  %v3489 = vadd.f32 %v3117, %v3488
  %3490 = vmatmul.bf16.gmra.mxu0 %v3155
  %v3491 = vpop.f32.mrf.mxu0
  %v3492 = vadd.f32 %v3117, %v3491
  %v3493 = vpop.f32.mrf.mxu0
  %v3494 = vadd.f32 %v3117, %v3493
  %3495 = vmatmul.bf16.gmra.mxu0 %v3156
  %v3496 = vpop.f32.mrf.mxu0
  %v3497 = vadd.f32 %v3117, %v3496
  %v3498 = vpop.f32.mrf.mxu0
  %v3499 = vadd.f32 %v3117, %v3498
  %3500 = vmatmul.bf16.gmra.mxu0 %v3157
  %v3501 = vpop.f32.mrf.mxu0
  %v3502 = vadd.f32 %v3117, %v3501
  %v3503 = vpop.f32.mrf.mxu0
  %v3504 = vadd.f32 %v3117, %v3503
  %3505 = vmatmul.bf16.gmra.mxu0 %v3158
  %v3506 = vpop.f32.mrf.mxu0
  %v3507 = vadd.f32 %v3117, %v3506
  %v3508 = vpop.f32.mrf.mxu0
  %v3509 = vadd.f32 %v3117, %v3508
  %3510 = vmatmul.bf16.gmra.mxu0 %v3159
  %v3511 = vpop.f32.mrf.mxu0
  %v3512 = vadd.f32 %v3117, %v3511
  %v3513 = vpop.f32.mrf.mxu0
  %v3514 = vadd.f32 %v3117, %v3513
  %3515 = vmatmul.bf16.gmra.mxu0 %v3160
  %v3516 = vpop.f32.mrf.mxu0
  %v3517 = vadd.f32 %v3117, %v3516
  %v3518 = vpop.f32.mrf.mxu0
  %v3519 = vadd.f32 %v3117, %v3518
  %3520 = vmatmul.bf16.gmra.mxu0 %v3161
  %v3521 = vpop.f32.mrf.mxu0
  %v3522 = vadd.f32 %v3117, %v3521
  %v3523 = vpop.f32.mrf.mxu0
  %v3524 = vadd.f32 %v3117, %v3523
  %3525 = vdwg.mxu0
  %3526 = vst [vmem:[#allocation2] sm:$0xff] %v3340
  %3527 = vst [vmem:[#allocation2 + $0x8] sm:$0xff] %v3389
  %3528 = vst [vmem:[#allocation2 + $0x10] sm:$0xff] %v3438
  %3529 = vst [vmem:[#allocation2 + $0x18] sm:$0xff] %v3487
  %3530 = vst [vmem:[#allocation2 + $0x20] sm:$0xff] %v3342
  %3531 = vst [vmem:[#allocation2 + $0x28] sm:$0xff] %v3391
  %3532 = vst [vmem:[#allocation2 + $0x30] sm:$0xff] %v3440
  %3533 = vst [vmem:[#allocation2 + $0x38] sm:$0xff] %v3489
  %3534 = vst [vmem:[#allocation2 + $0x40] sm:$0xff] %v3345
  %3535 = vst [vmem:[#allocation2 + $0x48] sm:$0xff] %v3394
  %3536 = vst [vmem:[#allocation2 + $0x50] sm:$0xff] %v3443
  %3537 = vst [vmem:[#allocation2 + $0x58] sm:$0xff] %v3492
  %3538 = vst [vmem:[#allocation2 + $0x60] sm:$0xff] %v3347
  %3539 = vst [vmem:[#allocation2 + $0x68] sm:$0xff] %v3396
  %3540 = vst [vmem:[#allocation2 + $0x70] sm:$0xff] %v3445
  %3541 = vst [vmem:[#allocation2 + $0x78] sm:$0xff] %v3494
  %3542 = vst [vmem:[#allocation2 + $0x80] sm:$0xff] %v3350
  %3543 = vst [vmem:[#allocation2 + $0x88] sm:$0xff] %v3399
  %3544 = vst [vmem:[#allocation2 + $0x90] sm:$0xff] %v3448
  %3545 = vst [vmem:[#allocation2 + $0x98] sm:$0xff] %v3497
  %3546 = vst [vmem:[#allocation2 + $0xa0] sm:$0xff] %v3352
  %3547 = vst [vmem:[#allocation2 + $0xa8] sm:$0xff] %v3401
  %3548 = vst [vmem:[#allocation2 + $0xb0] sm:$0xff] %v3450
  %3549 = vst [vmem:[#allocation2 + $0xb8] sm:$0xff] %v3499
  %3550 = vst [vmem:[#allocation2 + $0xc0] sm:$0xff] %v3355
  %3551 = vst [vmem:[#allocation2 + $0xc8] sm:$0xff] %v3404
  %3552 = vst [vmem:[#allocation2 + $0xd0] sm:$0xff] %v3453
  %3553 = vst [vmem:[#allocation2 + $0xd8] sm:$0xff] %v3502
  %3554 = vst [vmem:[#allocation2 + $0xe0] sm:$0xff] %v3357
  %3555 = vst [vmem:[#allocation2 + $0xe8] sm:$0xff] %v3406
  %3556 = vst [vmem:[#allocation2 + $0xf0] sm:$0xff] %v3455
  %3557 = vst [vmem:[#allocation2 + $0xf8] sm:$0xff] %v3504
  %3558 = vst [vmem:[#allocation2 + $0x100] sm:$0xff] %v3360
  %3559 = vst [vmem:[#allocation2 + $0x108] sm:$0xff] %v3409
  %3560 = vst [vmem:[#allocation2 + $0x110] sm:$0xff] %v3458
  %3561 = vst [vmem:[#allocation2 + $0x118] sm:$0xff] %v3507
  %3562 = vst [vmem:[#allocation2 + $0x120] sm:$0xff] %v3362
  %3563 = vst [vmem:[#allocation2 + $0x128] sm:$0xff] %v3411
  %3564 = vst [vmem:[#allocation2 + $0x130] sm:$0xff] %v3460
  %3565 = vst [vmem:[#allocation2 + $0x138] sm:$0xff] %v3509
  %3566 = vst [vmem:[#allocation2 + $0x140] sm:$0xff] %v3365
  %3567 = vst [vmem:[#allocation2 + $0x148] sm:$0xff] %v3414
  %3568 = vst [vmem:[#allocation2 + $0x150] sm:$0xff] %v3463
  %3569 = vst [vmem:[#allocation2 + $0x158] sm:$0xff] %v3512
  %3570 = vst [vmem:[#allocation2 + $0x160] sm:$0xff] %v3367
  %3571 = vst [vmem:[#allocation2 + $0x168] sm:$0xff] %v3416
  %3572 = vst [vmem:[#allocation2 + $0x170] sm:$0xff] %v3465
  %3573 = vst [vmem:[#allocation2 + $0x178] sm:$0xff] %v3514
  %3574 = vst [vmem:[#allocation2 + $0x180] sm:$0xff] %v3370
  %3575 = vst [vmem:[#allocation2 + $0x188] sm:$0xff] %v3419
  %3576 = vst [vmem:[#allocation2 + $0x190] sm:$0xff] %v3468
  %3577 = vst [vmem:[#allocation2 + $0x198] sm:$0xff] %v3517
  %3578 = vst [vmem:[#allocation2 + $0x1a0] sm:$0xff] %v3372
  %3579 = vst [vmem:[#allocation2 + $0x1a8] sm:$0xff] %v3421
  %3580 = vst [vmem:[#allocation2 + $0x1b0] sm:$0xff] %v3470
  %3581 = vst [vmem:[#allocation2 + $0x1b8] sm:$0xff] %v3519
  %3582 = vst [vmem:[#allocation2 + $0x1c0] sm:$0xff] %v3375
  %3583 = vst [vmem:[#allocation2 + $0x1c8] sm:$0xff] %v3424
  %3584 = vst [vmem:[#allocation2 + $0x1d0] sm:$0xff] %v3473
  %3585 = vst [vmem:[#allocation2 + $0x1d8] sm:$0xff] %v3522
  %3586 = vst [vmem:[#allocation2 + $0x1e0] sm:$0xff] %v3377
  %3587 = vst [vmem:[#allocation2 + $0x1e8] sm:$0xff] %v3426
  %3588 = vst [vmem:[#allocation2 + $0x1f0] sm:$0xff] %v3475
  %3589 = vst [vmem:[#allocation2 + $0x1f8] sm:$0xff] %v3524
  %v3590 = vld [vmem:[%s561] sm:$0xff]
  %v3591 = vld [vmem:[%s561 + $0x8] sm:$0xff]
  %v3592 = vld [vmem:[%s561 + $0x10] sm:$0xff]
  %v3593 = vld [vmem:[%s561 + $0x18] sm:$0xff]
  %v3594 = vld [vmem:[%s561 + $0x20] sm:$0xff]
  %v3595 = vld [vmem:[%s561 + $0x28] sm:$0xff]
  %v3596 = vld [vmem:[%s561 + $0x30] sm:$0xff]
  %v3597 = vld [vmem:[%s561 + $0x38] sm:$0xff]
  %v3598 = vld [vmem:[%s5] sm:$0xff]
  %v3599 = vld [vmem:[%s5 + $0x8] sm:$0xff]
  %v3600 = vld [vmem:[%s5 + $0x10] sm:$0xff]
  %v3601 = vld [vmem:[%s5 + $0x18] sm:$0xff]
  %v3602 = vld [vmem:[%s5 + $0x20] sm:$0xff]
  %v3603 = vld [vmem:[%s5 + $0x28] sm:$0xff]
  %v3604 = vld [vmem:[%s5 + $0x30] sm:$0xff]
  %v3605 = vld [vmem:[%s5 + $0x38] sm:$0xff]
  %v3606 = vld [vmem:[%s5 + $0x40] sm:$0xff]
  %v3607 = vld [vmem:[%s5 + $0x48] sm:$0xff]
  %v3608 = vld [vmem:[%s5 + $0x50] sm:$0xff]
  %v3609 = vld [vmem:[%s5 + $0x58] sm:$0xff]
  %v3610 = vld [vmem:[%s5 + $0x60] sm:$0xff]
  %v3611 = vld [vmem:[%s5 + $0x68] sm:$0xff]
  %v3612 = vld [vmem:[%s5 + $0x70] sm:$0xff]
  %v3613 = vld [vmem:[%s5 + $0x78] sm:$0xff]
  %v3614 = vld [vmem:[%s5 + $0x80] sm:$0xff]
  %v3615 = vld [vmem:[%s5 + $0x88] sm:$0xff]
  %v3616 = vld [vmem:[%s5 + $0x90] sm:$0xff]
  %v3617 = vld [vmem:[%s5 + $0x98] sm:$0xff]
  %v3618 = vld [vmem:[%s5 + $0xa0] sm:$0xff]
  %v3619 = vld [vmem:[%s5 + $0xa8] sm:$0xff]
  %v3620 = vld [vmem:[%s5 + $0xb0] sm:$0xff]
  %v3621 = vld [vmem:[%s5 + $0xb8] sm:$0xff]
  %v3622 = vld [vmem:[%s5 + $0xc0] sm:$0xff]
  %v3623 = vld [vmem:[%s5 + $0xc8] sm:$0xff]
  %v3624 = vld [vmem:[%s5 + $0xd0] sm:$0xff]
  %v3625 = vld [vmem:[%s5 + $0xd8] sm:$0xff]
  %v3626 = vld [vmem:[%s5 + $0xe0] sm:$0xff]
  %v3627 = vld [vmem:[%s5 + $0xe8] sm:$0xff]
  %v3628 = vld [vmem:[%s5 + $0xf0] sm:$0xff]
  %v3629 = vld [vmem:[%s5 + $0xf8] sm:$0xff]
  %v3662 = vunpack.c.l.b16 %v3598
  %v3663 = vunpack.c.h.b16 %v3598
  %v3664 = vunpack.c.l.b16 %v3599
  %v3665 = vunpack.c.h.b16 %v3599
  %v3666 = vunpack.c.l.b16 %v3600
  %v3667 = vunpack.c.h.b16 %v3600
  %v3668 = vunpack.c.l.b16 %v3601
  %v3669 = vunpack.c.h.b16 %v3601
  %v3670 = vunpack.c.l.b16 %v3602
  %v3671 = vunpack.c.h.b16 %v3602
  %v3672 = vunpack.c.l.b16 %v3603
  %v3673 = vunpack.c.h.b16 %v3603
  %v3674 = vunpack.c.l.b16 %v3604
  %v3675 = vunpack.c.h.b16 %v3604
  %v3676 = vunpack.c.l.b16 %v3605
  %v3677 = vunpack.c.h.b16 %v3605
  %v3678 = vunpack.c.l.b16 %v3606
  %v3679 = vunpack.c.h.b16 %v3606
  %v3680 = vunpack.c.l.b16 %v3607
  %v3681 = vunpack.c.h.b16 %v3607
  %v3682 = vunpack.c.l.b16 %v3608
  %v3683 = vunpack.c.h.b16 %v3608
  %v3684 = vunpack.c.l.b16 %v3609
  %v3685 = vunpack.c.h.b16 %v3609
  %v3686 = vunpack.c.l.b16 %v3610
  %v3687 = vunpack.c.h.b16 %v3610
  %v3688 = vunpack.c.l.b16 %v3611
  %v3689 = vunpack.c.h.b16 %v3611
  %v3690 = vunpack.c.l.b16 %v3612
  %v3691 = vunpack.c.h.b16 %v3612
  %v3692 = vunpack.c.l.b16 %v3613
  %v3693 = vunpack.c.h.b16 %v3613
  %v3694 = vunpack.c.l.b16 %v3614
  %v3695 = vunpack.c.h.b16 %v3614
  %v3696 = vunpack.c.l.b16 %v3615
  %v3697 = vunpack.c.h.b16 %v3615
  %v3698 = vunpack.c.l.b16 %v3616
  %v3699 = vunpack.c.h.b16 %v3616
  %v3700 = vunpack.c.l.b16 %v3617
  %v3701 = vunpack.c.h.b16 %v3617
  %v3702 = vunpack.c.l.b16 %v3618
  %v3703 = vunpack.c.h.b16 %v3618
  %v3704 = vunpack.c.l.b16 %v3619
  %v3705 = vunpack.c.h.b16 %v3619
  %v3706 = vunpack.c.l.b16 %v3620
  %v3707 = vunpack.c.h.b16 %v3620
  %v3708 = vunpack.c.l.b16 %v3621
  %v3709 = vunpack.c.h.b16 %v3621
  %v3710 = vunpack.c.l.b16 %v3622
  %v3711 = vunpack.c.h.b16 %v3622
  %v3712 = vunpack.c.l.b16 %v3623
  %v3713 = vunpack.c.h.b16 %v3623
  %v3714 = vunpack.c.l.b16 %v3624
  %v3715 = vunpack.c.h.b16 %v3624
  %v3716 = vunpack.c.l.b16 %v3625
  %v3717 = vunpack.c.h.b16 %v3625
  %v3718 = vunpack.c.l.b16 %v3626
  %v3719 = vunpack.c.h.b16 %v3626
  %v3720 = vunpack.c.l.b16 %v3627
  %v3721 = vunpack.c.h.b16 %v3627
  %v3722 = vunpack.c.l.b16 %v3628
  %v3723 = vunpack.c.h.b16 %v3628
  %v3724 = vunpack.c.l.b16 %v3629
  %v3725 = vunpack.c.h.b16 %v3629
  %v3726 = vpack.c.b16 %v3666, %v3662
  %v3727 = vpack.c.b16 %v3667, %v3663
  %v3728 = vpack.c.b16 %v3668, %v3664
  %v3729 = vpack.c.b16 %v3669, %v3665
  %v3730 = vpack.c.b16 %v3674, %v3670
  %v3731 = vpack.c.b16 %v3675, %v3671
  %v3732 = vpack.c.b16 %v3676, %v3672
  %v3733 = vpack.c.b16 %v3677, %v3673
  %v3734 = vpack.c.b16 %v3682, %v3678
  %v3735 = vpack.c.b16 %v3683, %v3679
  %v3736 = vpack.c.b16 %v3684, %v3680
  %v3737 = vpack.c.b16 %v3685, %v3681
  %v3738 = vpack.c.b16 %v3690, %v3686
  %v3739 = vpack.c.b16 %v3691, %v3687
  %v3740 = vpack.c.b16 %v3692, %v3688
  %v3741 = vpack.c.b16 %v3693, %v3689
  %v3742 = vpack.c.b16 %v3698, %v3694
  %v3743 = vpack.c.b16 %v3699, %v3695
  %v3744 = vpack.c.b16 %v3700, %v3696
  %v3745 = vpack.c.b16 %v3701, %v3697
  %v3746 = vpack.c.b16 %v3706, %v3702
  %v3747 = vpack.c.b16 %v3707, %v3703
  %v3748 = vpack.c.b16 %v3708, %v3704
  %v3749 = vpack.c.b16 %v3709, %v3705
  %v3750 = vpack.c.b16 %v3714, %v3710
  %v3751 = vpack.c.b16 %v3715, %v3711
  %v3752 = vpack.c.b16 %v3716, %v3712
  %v3753 = vpack.c.b16 %v3717, %v3713
  %v3754 = vpack.c.b16 %v3722, %v3718
  %v3755 = vpack.c.b16 %v3723, %v3719
  %v3756 = vpack.c.b16 %v3724, %v3720
  %v3757 = vpack.c.b16 %v3725, %v3721
  %3790 = vmatpush.bf16.msra.mxu0 %v3754
  %3791 = vmatpush.bf16.msra.mxu0 %v3750
  %3792 = vmatpush.bf16.msra.mxu0 %v3746
  %3793 = vmatpush.bf16.msra.mxu0 %v3742
  %3794 = vmatpush.bf16.msra.mxu0 %v3738
  %3795 = vmatpush.bf16.msra.mxu0 %v3734
  %3796 = vmatpush.bf16.msra.mxu0 %v3730
  %3797 = vmatpush.bf16.msra.mxu0 %v3726
  %3798 = vmatmul.bf16.gmra.mxu0 0
  %v3799 = vpop.f32.mrf.mxu0
  %v3800 = vadd.f32 0.0, %v3799
  %v3801 = vpop.f32.mrf.mxu0
  %v3802 = vadd.f32 0.0, %v3801
  %3803 = vdwg.mxu0
  %3804 = vmatpush.bf16.msra.mxu0 %v3755
  %3805 = vmatpush.bf16.msra.mxu0 %v3751
  %3806 = vmatpush.bf16.msra.mxu0 %v3747
  %3807 = vmatpush.bf16.msra.mxu0 %v3743
  %3808 = vmatpush.bf16.msra.mxu0 %v3739
  %3809 = vmatpush.bf16.msra.mxu0 %v3735
  %3810 = vmatpush.bf16.msra.mxu0 %v3731
  %3811 = vmatpush.bf16.msra.mxu0 %v3727
  %3812 = vmatmul.bf16.gmra.mxu0 0
  %v3813 = vpop.f32.mrf.mxu0
  %v3814 = vadd.f32 0.0, %v3813
  %v3815 = vpop.f32.mrf.mxu0
  %v3816 = vadd.f32 0.0, %v3815
  %3817 = vdwg.mxu0
  %3818 = vmatpush.bf16.msra.mxu0 %v3756
  %3819 = vmatpush.bf16.msra.mxu0 %v3752
  %3820 = vmatpush.bf16.msra.mxu0 %v3748
  %3821 = vmatpush.bf16.msra.mxu0 %v3744
  %3822 = vmatpush.bf16.msra.mxu0 %v3740
  %3823 = vmatpush.bf16.msra.mxu0 %v3736
  %3824 = vmatpush.bf16.msra.mxu0 %v3732
  %3825 = vmatpush.bf16.msra.mxu0 %v3728
  %3826 = vmatmul.bf16.gmra.mxu0 0
  %v3827 = vpop.f32.mrf.mxu0
  %v3828 = vadd.f32 0.0, %v3827
  %v3829 = vpop.f32.mrf.mxu0
  %v3830 = vadd.f32 0.0, %v3829
  %3831 = vdwg.mxu0
  %3832 = vmatpush.bf16.msra.mxu0 %v3757
  %3833 = vmatpush.bf16.msra.mxu0 %v3753
  %3834 = vmatpush.bf16.msra.mxu0 %v3749
  %3835 = vmatpush.bf16.msra.mxu0 %v3745
  %3836 = vmatpush.bf16.msra.mxu0 %v3741
  %3837 = vmatpush.bf16.msra.mxu0 %v3737
  %3838 = vmatpush.bf16.msra.mxu0 %v3733
  %3839 = vmatpush.bf16.msra.mxu0 %v3729
  %3840 = vmatmul.bf16.gmra.mxu0 0
  %v3841 = vpop.f32.mrf.mxu0
  %v3842 = vadd.f32 0.0, %v3841
  %v3843 = vpop.f32.mrf.mxu0
  %v3844 = vadd.f32 0.0, %v3843
  %3845 = vdwg.mxu0
  %v3846 = vadd.f32 %v3590, %v3800
  %v3847 = vadd.f32 %v3591, %v3814
  %v3848 = vadd.f32 %v3592, %v3828
  %v3849 = vadd.f32 %v3593, %v3842
  %v3850 = vadd.f32 %v3594, %v3802
  %v3851 = vadd.f32 %v3595, %v3816
  %v3852 = vadd.f32 %v3596, %v3830
  %v3853 = vadd.f32 %v3597, %v3844
  %v3854 = vmul.f32 %v3846, 0.5
  %v3855 = vmul.f32 %v3850, 0.5
  %v3856 = vtanh.pop %v3854
  %v3857 = vtanh.pop %v3855
  %v3858 = vmul.f32 %v3856, 0.5
  %v3859 = vmul.f32 %v3857, 0.5
  %v3860 = vadd.f32 %v3858, 0.5
  %v3861 = vadd.f32 %v3859, 0.5
  %v3862 = vmul.f32 %v3847, 0.5
  %v3863 = vmul.f32 %v3851, 0.5
  %v3864 = vtanh.pop %v3862
  %v3865 = vtanh.pop %v3863
  %v3866 = vmul.f32 %v3864, 0.5
  %v3867 = vmul.f32 %v3865, 0.5
  %v3868 = vadd.f32 %v3866, 0.5
  %v3869 = vadd.f32 %v3867, 0.5
  %v3870 = vtanh.pop %v3848
  %v3871 = vtanh.pop %v3852
  %v3872 = vmul.f32 %v3849, 0.5
  %v3873 = vmul.f32 %v3853, 0.5
  %v3874 = vtanh.pop %v3872
  %v3875 = vtanh.pop %v3873
  %v3876 = vmul.f32 %v3874, 0.5
  %v3877 = vmul.f32 %v3875, 0.5
  %v3878 = vadd.f32 %v3876, 0.5
  %v3879 = vadd.f32 %v3877, 0.5
  %v3880 = vmul.f32 %v3868, 0.0
  %v3881 = vmul.f32 %v3869, 0.0
  %v3882 = vmul.f32 %v3860, %v3870
  %v3883 = vmul.f32 %v3861, %v3871
  %v3884 = vadd.f32 %v3880, %v3882
  %v3885 = vadd.f32 %v3881, %v3883
  %v3886 = vtanh.pop %v3884
  %v3887 = vtanh.pop %v3885
  %v3888 = vmul.f32 %v3878, %v3886
  %v3889 = vmul.f32 %v3879, %v3887
  %v3890 = vld [vmem:[%s868] sm:$0xff]
  %v3891 = vld [vmem:[%s868 + $0x8] sm:$0xff]
  %v3892 = vld [vmem:[%s868 + $0x10] sm:$0xff]
  %v3893 = vld [vmem:[%s868 + $0x18] sm:$0xff]
  %v3894 = vld [vmem:[%s868 + $0x20] sm:$0xff]
  %v3895 = vld [vmem:[%s868 + $0x28] sm:$0xff]
  %v3896 = vld [vmem:[%s868 + $0x30] sm:$0xff]
  %v3897 = vld [vmem:[%s868 + $0x38] sm:$0xff]
  %v3898 = vpack.c.bf16 %v3889, %v3888
  %3899 = vmatpush.bf16.msra.mxu0 %v3754
  %3900 = vmatpush.bf16.msra.mxu0 %v3750
  %3901 = vmatpush.bf16.msra.mxu0 %v3746
  %3902 = vmatpush.bf16.msra.mxu0 %v3742
  %3903 = vmatpush.bf16.msra.mxu0 %v3738
  %3904 = vmatpush.bf16.msra.mxu0 %v3734
  %3905 = vmatpush.bf16.msra.mxu0 %v3730
  %3906 = vmatpush.bf16.msra.mxu0 %v3726
  %3907 = vmatmul.bf16.gmra.mxu0 %v3898
  %v3908 = vpop.f32.mrf.mxu0
  %v3909 = vadd.f32 0.0, %v3908
  %v3910 = vpop.f32.mrf.mxu0
  %v3911 = vadd.f32 0.0, %v3910
  %3912 = vdwg.mxu0
  %3913 = vmatpush.bf16.msra.mxu0 %v3755
  %3914 = vmatpush.bf16.msra.mxu0 %v3751
  %3915 = vmatpush.bf16.msra.mxu0 %v3747
  %3916 = vmatpush.bf16.msra.mxu0 %v3743
  %3917 = vmatpush.bf16.msra.mxu0 %v3739
  %3918 = vmatpush.bf16.msra.mxu0 %v3735
  %3919 = vmatpush.bf16.msra.mxu0 %v3731
  %3920 = vmatpush.bf16.msra.mxu0 %v3727
  %3921 = vmatmul.bf16.gmra.mxu0 %v3898
  %v3922 = vpop.f32.mrf.mxu0
  %v3923 = vadd.f32 0.0, %v3922
  %v3924 = vpop.f32.mrf.mxu0
  %v3925 = vadd.f32 0.0, %v3924
  %3926 = vdwg.mxu0
  %3927 = vmatpush.bf16.msra.mxu0 %v3756
  %3928 = vmatpush.bf16.msra.mxu0 %v3752
  %3929 = vmatpush.bf16.msra.mxu0 %v3748
  %3930 = vmatpush.bf16.msra.mxu0 %v3744
  %3931 = vmatpush.bf16.msra.mxu0 %v3740
  %3932 = vmatpush.bf16.msra.mxu0 %v3736
  %3933 = vmatpush.bf16.msra.mxu0 %v3732
  %3934 = vmatpush.bf16.msra.mxu0 %v3728
  %3935 = vmatmul.bf16.gmra.mxu0 %v3898
  %v3936 = vpop.f32.mrf.mxu0
  %v3937 = vadd.f32 0.0, %v3936
  %v3938 = vpop.f32.mrf.mxu0
  %v3939 = vadd.f32 0.0, %v3938
  %3940 = vdwg.mxu0
  %3941 = vmatpush.bf16.msra.mxu0 %v3757
  %3942 = vmatpush.bf16.msra.mxu0 %v3753
  %3943 = vmatpush.bf16.msra.mxu0 %v3749
  %3944 = vmatpush.bf16.msra.mxu0 %v3745
  %3945 = vmatpush.bf16.msra.mxu0 %v3741
  %3946 = vmatpush.bf16.msra.mxu0 %v3737
  %3947 = vmatpush.bf16.msra.mxu0 %v3733
  %3948 = vmatpush.bf16.msra.mxu0 %v3729
  %3949 = vmatmul.bf16.gmra.mxu0 %v3898
  %v3950 = vpop.f32.mrf.mxu0
  %v3951 = vadd.f32 0.0, %v3950
  %v3952 = vpop.f32.mrf.mxu0
  %v3953 = vadd.f32 0.0, %v3952
  %3954 = vdwg.mxu0
  %v3955 = vadd.f32 %v3890, %v3909
  %v3956 = vadd.f32 %v3891, %v3923
  %v3957 = vadd.f32 %v3892, %v3937
  %v3958 = vadd.f32 %v3893, %v3951
  %v3959 = vadd.f32 %v3894, %v3911
  %v3960 = vadd.f32 %v3895, %v3925
  %v3961 = vadd.f32 %v3896, %v3939
  %v3962 = vadd.f32 %v3897, %v3953
  %v3963 = vmul.f32 %v3955, 0.5
  %v3964 = vmul.f32 %v3959, 0.5
  %v3965 = vtanh.pop %v3963
  %v3966 = vtanh.pop %v3964
  %v3967 = vmul.f32 %v3965, 0.5
  %v3968 = vmul.f32 %v3966, 0.5
  %v3969 = vadd.f32 %v3967, 0.5
  %v3970 = vadd.f32 %v3968, 0.5
  %v3971 = vmul.f32 %v3956, 0.5
  %v3972 = vmul.f32 %v3960, 0.5
  %v3973 = vtanh.pop %v3971
  %v3974 = vtanh.pop %v3972
  %v3975 = vmul.f32 %v3973, 0.5
  %v3976 = vmul.f32 %v3974, 0.5
  %v3977 = vadd.f32 %v3975, 0.5
  %v3978 = vadd.f32 %v3976, 0.5
  %v3979 = vtanh.pop %v3957
  %v3980 = vtanh.pop %v3961
  %v3981 = vmul.f32 %v3958, 0.5
  %v3982 = vmul.f32 %v3962, 0.5
  %v3983 = vtanh.pop %v3981
  %v3984 = vtanh.pop %v3982
  %v3985 = vmul.f32 %v3983, 0.5
  %v3986 = vmul.f32 %v3984, 0.5
  %v3987 = vadd.f32 %v3985, 0.5
  %v3988 = vadd.f32 %v3986, 0.5
  %v3989 = vmul.f32 %v3977, %v3884
  %v3990 = vmul.f32 %v3978, %v3885
  %v3991 = vmul.f32 %v3969, %v3979
  %v3992 = vmul.f32 %v3970, %v3980
  %v3993 = vadd.f32 %v3989, %v3991
  %v3994 = vadd.f32 %v3990, %v3992
  %v3995 = vtanh.pop %v3993
  %v3996 = vtanh.pop %v3994
  %v3997 = vmul.f32 %v3987, %v3995
  %v3998 = vmul.f32 %v3988, %v3996
  %v3999 = vld [vmem:[%s1182] sm:$0xff]
  %v4000 = vld [vmem:[%s1182 + $0x8] sm:$0xff]
  %v4001 = vld [vmem:[%s1182 + $0x10] sm:$0xff]
  %v4002 = vld [vmem:[%s1182 + $0x18] sm:$0xff]
  %v4003 = vld [vmem:[%s1182 + $0x20] sm:$0xff]
  %v4004 = vld [vmem:[%s1182 + $0x28] sm:$0xff]
  %v4005 = vld [vmem:[%s1182 + $0x30] sm:$0xff]
  %v4006 = vld [vmem:[%s1182 + $0x38] sm:$0xff]
  %v4007 = vpack.c.bf16 %v3998, %v3997
  %4008 = vmatpush.bf16.msra.mxu0 %v3754
  %4009 = vmatpush.bf16.msra.mxu0 %v3750
  %4010 = vmatpush.bf16.msra.mxu0 %v3746
  %4011 = vmatpush.bf16.msra.mxu0 %v3742
  %4012 = vmatpush.bf16.msra.mxu0 %v3738
  %4013 = vmatpush.bf16.msra.mxu0 %v3734
  %4014 = vmatpush.bf16.msra.mxu0 %v3730
  %4015 = vmatpush.bf16.msra.mxu0 %v3726
  %4016 = vmatmul.bf16.gmra.mxu0 %v4007
  %v4017 = vpop.f32.mrf.mxu0
  %v4018 = vadd.f32 0.0, %v4017
  %v4019 = vpop.f32.mrf.mxu0
  %v4020 = vadd.f32 0.0, %v4019
  %4021 = vdwg.mxu0
  %4022 = vmatpush.bf16.msra.mxu0 %v3755
  %4023 = vmatpush.bf16.msra.mxu0 %v3751
  %4024 = vmatpush.bf16.msra.mxu0 %v3747
  %4025 = vmatpush.bf16.msra.mxu0 %v3743
  %4026 = vmatpush.bf16.msra.mxu0 %v3739
  %4027 = vmatpush.bf16.msra.mxu0 %v3735
  %4028 = vmatpush.bf16.msra.mxu0 %v3731
  %4029 = vmatpush.bf16.msra.mxu0 %v3727
  %4030 = vmatmul.bf16.gmra.mxu0 %v4007
  %v4031 = vpop.f32.mrf.mxu0
  %v4032 = vadd.f32 0.0, %v4031
  %v4033 = vpop.f32.mrf.mxu0
  %v4034 = vadd.f32 0.0, %v4033
  %4035 = vdwg.mxu0
  %4036 = vmatpush.bf16.msra.mxu0 %v3756
  %4037 = vmatpush.bf16.msra.mxu0 %v3752
  %4038 = vmatpush.bf16.msra.mxu0 %v3748
  %4039 = vmatpush.bf16.msra.mxu0 %v3744
  %4040 = vmatpush.bf16.msra.mxu0 %v3740
  %4041 = vmatpush.bf16.msra.mxu0 %v3736
  %4042 = vmatpush.bf16.msra.mxu0 %v3732
  %4043 = vmatpush.bf16.msra.mxu0 %v3728
  %4044 = vmatmul.bf16.gmra.mxu0 %v4007
  %v4045 = vpop.f32.mrf.mxu0
  %v4046 = vadd.f32 0.0, %v4045
  %v4047 = vpop.f32.mrf.mxu0
  %v4048 = vadd.f32 0.0, %v4047
  %4049 = vdwg.mxu0
  %4050 = vmatpush.bf16.msra.mxu0 %v3757
  %4051 = vmatpush.bf16.msra.mxu0 %v3753
  %4052 = vmatpush.bf16.msra.mxu0 %v3749
  %4053 = vmatpush.bf16.msra.mxu0 %v3745
  %4054 = vmatpush.bf16.msra.mxu0 %v3741
  %4055 = vmatpush.bf16.msra.mxu0 %v3737
  %4056 = vmatpush.bf16.msra.mxu0 %v3733
  %4057 = vmatpush.bf16.msra.mxu0 %v3729
  %4058 = vmatmul.bf16.gmra.mxu0 %v4007
  %v4059 = vpop.f32.mrf.mxu0
  %v4060 = vadd.f32 0.0, %v4059
  %v4061 = vpop.f32.mrf.mxu0
  %v4062 = vadd.f32 0.0, %v4061
  %4063 = vdwg.mxu0
  %v4064 = vadd.f32 %v3999, %v4018
  %v4065 = vadd.f32 %v4000, %v4032
  %v4066 = vadd.f32 %v4001, %v4046
  %v4067 = vadd.f32 %v4002, %v4060
  %v4068 = vadd.f32 %v4003, %v4020
  %v4069 = vadd.f32 %v4004, %v4034
  %v4070 = vadd.f32 %v4005, %v4048
  %v4071 = vadd.f32 %v4006, %v4062
  %v4072 = vmul.f32 %v4064, 0.5
  %v4073 = vmul.f32 %v4068, 0.5
  %v4074 = vtanh.pop %v4072
  %v4075 = vtanh.pop %v4073
  %v4076 = vmul.f32 %v4074, 0.5
  %v4077 = vmul.f32 %v4075, 0.5
  %v4078 = vadd.f32 %v4076, 0.5
  %v4079 = vadd.f32 %v4077, 0.5
  %v4080 = vmul.f32 %v4065, 0.5
  %v4081 = vmul.f32 %v4069, 0.5
  %v4082 = vtanh.pop %v4080
  %v4083 = vtanh.pop %v4081
  %v4084 = vmul.f32 %v4082, 0.5
  %v4085 = vmul.f32 %v4083, 0.5
  %v4086 = vadd.f32 %v4084, 0.5
  %v4087 = vadd.f32 %v4085, 0.5
  %v4088 = vtanh.pop %v4066
  %v4089 = vtanh.pop %v4070
  %v4090 = vmul.f32 %v4067, 0.5
  %v4091 = vmul.f32 %v4071, 0.5
  %v4092 = vtanh.pop %v4090
  %v4093 = vtanh.pop %v4091
  %v4094 = vmul.f32 %v4092, 0.5
  %v4095 = vmul.f32 %v4093, 0.5
  %v4096 = vadd.f32 %v4094, 0.5
  %v4097 = vadd.f32 %v4095, 0.5
  %v4098 = vmul.f32 %v4086, %v3993
  %v4099 = vmul.f32 %v4087, %v3994
  %v4100 = vmul.f32 %v4078, %v4088
  %v4101 = vmul.f32 %v4079, %v4089
  %v4102 = vadd.f32 %v4098, %v4100
  %v4103 = vadd.f32 %v4099, %v4101
  %v4104 = vtanh.pop %v4102
  %v4105 = vtanh.pop %v4103
  %v4106 = vmul.f32 %v4096, %v4104
  %v4107 = vmul.f32 %v4097, %v4105
  %v4108 = vld [vmem:[%s1496] sm:$0xff]
  %v4109 = vld [vmem:[%s1496 + $0x8] sm:$0xff]
  %v4110 = vld [vmem:[%s1496 + $0x10] sm:$0xff]
  %v4111 = vld [vmem:[%s1496 + $0x18] sm:$0xff]
  %v4112 = vld [vmem:[%s1496 + $0x20] sm:$0xff]
  %v4113 = vld [vmem:[%s1496 + $0x28] sm:$0xff]
  %v4114 = vld [vmem:[%s1496 + $0x30] sm:$0xff]
  %v4115 = vld [vmem:[%s1496 + $0x38] sm:$0xff]
  %v4116 = vpack.c.bf16 %v4107, %v4106
  %4117 = vmatpush.bf16.msra.mxu0 %v3754
  %4118 = vmatpush.bf16.msra.mxu0 %v3750
  %4119 = vmatpush.bf16.msra.mxu0 %v3746
  %4120 = vmatpush.bf16.msra.mxu0 %v3742
  %4121 = vmatpush.bf16.msra.mxu0 %v3738
  %4122 = vmatpush.bf16.msra.mxu0 %v3734
  %4123 = vmatpush.bf16.msra.mxu0 %v3730
  %4124 = vmatpush.bf16.msra.mxu0 %v3726
  %4125 = vmatmul.bf16.gmra.mxu0 %v4116
  %v4126 = vpop.f32.mrf.mxu0
  %v4127 = vadd.f32 0.0, %v4126
  %v4128 = vpop.f32.mrf.mxu0
  %v4129 = vadd.f32 0.0, %v4128
  %4130 = vdwg.mxu0
  %4131 = vmatpush.bf16.msra.mxu0 %v3755
  %4132 = vmatpush.bf16.msra.mxu0 %v3751
  %4133 = vmatpush.bf16.msra.mxu0 %v3747
  %4134 = vmatpush.bf16.msra.mxu0 %v3743
  %4135 = vmatpush.bf16.msra.mxu0 %v3739
  %4136 = vmatpush.bf16.msra.mxu0 %v3735
  %4137 = vmatpush.bf16.msra.mxu0 %v3731
  %4138 = vmatpush.bf16.msra.mxu0 %v3727
  %4139 = vmatmul.bf16.gmra.mxu0 %v4116
  %v4140 = vpop.f32.mrf.mxu0
  %v4141 = vadd.f32 0.0, %v4140
  %v4142 = vpop.f32.mrf.mxu0
  %v4143 = vadd.f32 0.0, %v4142
  %4144 = vdwg.mxu0
  %4145 = vmatpush.bf16.msra.mxu0 %v3756
  %4146 = vmatpush.bf16.msra.mxu0 %v3752
  %4147 = vmatpush.bf16.msra.mxu0 %v3748
  %4148 = vmatpush.bf16.msra.mxu0 %v3744
  %4149 = vmatpush.bf16.msra.mxu0 %v3740
  %4150 = vmatpush.bf16.msra.mxu0 %v3736
  %4151 = vmatpush.bf16.msra.mxu0 %v3732
  %4152 = vmatpush.bf16.msra.mxu0 %v3728
  %4153 = vmatmul.bf16.gmra.mxu0 %v4116
  %v4154 = vpop.f32.mrf.mxu0
  %v4155 = vadd.f32 0.0, %v4154
  %v4156 = vpop.f32.mrf.mxu0
  %v4157 = vadd.f32 0.0, %v4156
  %4158 = vdwg.mxu0
  %4159 = vmatpush.bf16.msra.mxu0 %v3757
  %4160 = vmatpush.bf16.msra.mxu0 %v3753
  %4161 = vmatpush.bf16.msra.mxu0 %v3749
  %4162 = vmatpush.bf16.msra.mxu0 %v3745
  %4163 = vmatpush.bf16.msra.mxu0 %v3741
  %4164 = vmatpush.bf16.msra.mxu0 %v3737
  %4165 = vmatpush.bf16.msra.mxu0 %v3733
  %4166 = vmatpush.bf16.msra.mxu0 %v3729
  %4167 = vmatmul.bf16.gmra.mxu0 %v4116
  %v4168 = vpop.f32.mrf.mxu0
  %v4169 = vadd.f32 0.0, %v4168
  %v4170 = vpop.f32.mrf.mxu0
  %v4171 = vadd.f32 0.0, %v4170
  %4172 = vdwg.mxu0
  %v4173 = vadd.f32 %v4108, %v4127
  %v4174 = vadd.f32 %v4109, %v4141
  %v4175 = vadd.f32 %v4110, %v4155
  %v4176 = vadd.f32 %v4111, %v4169
  %v4177 = vadd.f32 %v4112, %v4129
  %v4178 = vadd.f32 %v4113, %v4143
  %v4179 = vadd.f32 %v4114, %v4157
  %v4180 = vadd.f32 %v4115, %v4171
  %v4181 = vmul.f32 %v4173, 0.5
  %v4182 = vmul.f32 %v4177, 0.5
  %v4183 = vtanh.pop %v4181
  %v4184 = vtanh.pop %v4182
  %v4185 = vmul.f32 %v4183, 0.5
  %v4186 = vmul.f32 %v4184, 0.5
  %v4187 = vadd.f32 %v4185, 0.5
  %v4188 = vadd.f32 %v4186, 0.5
  %v4189 = vmul.f32 %v4174, 0.5
  %v4190 = vmul.f32 %v4178, 0.5
  %v4191 = vtanh.pop %v4189
  %v4192 = vtanh.pop %v4190
  %v4193 = vmul.f32 %v4191, 0.5
  %v4194 = vmul.f32 %v4192, 0.5
  %v4195 = vadd.f32 %v4193, 0.5
  %v4196 = vadd.f32 %v4194, 0.5
  %v4197 = vtanh.pop %v4175
  %v4198 = vtanh.pop %v4179
  %v4199 = vmul.f32 %v4176, 0.5
  %v4200 = vmul.f32 %v4180, 0.5
  %v4201 = vtanh.pop %v4199
  %v4202 = vtanh.pop %v4200
  %v4203 = vmul.f32 %v4201, 0.5
  %v4204 = vmul.f32 %v4202, 0.5
  %v4205 = vadd.f32 %v4203, 0.5
  %v4206 = vadd.f32 %v4204, 0.5
  %v4207 = vmul.f32 %v4195, %v4102
  %v4208 = vmul.f32 %v4196, %v4103
  %v4209 = vmul.f32 %v4187, %v4197
  %v4210 = vmul.f32 %v4188, %v4198
  %v4211 = vadd.f32 %v4207, %v4209
  %v4212 = vadd.f32 %v4208, %v4210
  %v4213 = vtanh.pop %v4211
  %v4214 = vtanh.pop %v4212
  %v4215 = vmul.f32 %v4205, %v4213
  %v4216 = vmul.f32 %v4206, %v4214
  %v4217 = vld [vmem:[%s1810] sm:$0xff]
  %v4218 = vld [vmem:[%s1810 + $0x8] sm:$0xff]
  %v4219 = vld [vmem:[%s1810 + $0x10] sm:$0xff]
  %v4220 = vld [vmem:[%s1810 + $0x18] sm:$0xff]
  %v4221 = vld [vmem:[%s1810 + $0x20] sm:$0xff]
  %v4222 = vld [vmem:[%s1810 + $0x28] sm:$0xff]
  %v4223 = vld [vmem:[%s1810 + $0x30] sm:$0xff]
  %v4224 = vld [vmem:[%s1810 + $0x38] sm:$0xff]
  %v4225 = vpack.c.bf16 %v4216, %v4215
  %4226 = vmatpush.bf16.msra.mxu0 %v3754
  %4227 = vmatpush.bf16.msra.mxu0 %v3750
  %4228 = vmatpush.bf16.msra.mxu0 %v3746
  %4229 = vmatpush.bf16.msra.mxu0 %v3742
  %4230 = vmatpush.bf16.msra.mxu0 %v3738
  %4231 = vmatpush.bf16.msra.mxu0 %v3734
  %4232 = vmatpush.bf16.msra.mxu0 %v3730
  %4233 = vmatpush.bf16.msra.mxu0 %v3726
  %4234 = vmatmul.bf16.gmra.mxu0 %v4225
  %v4235 = vpop.f32.mrf.mxu0
  %v4236 = vadd.f32 0.0, %v4235
  %v4237 = vpop.f32.mrf.mxu0
  %v4238 = vadd.f32 0.0, %v4237
  %4239 = vdwg.mxu0
  %4240 = vmatpush.bf16.msra.mxu0 %v3755
  %4241 = vmatpush.bf16.msra.mxu0 %v3751
  %4242 = vmatpush.bf16.msra.mxu0 %v3747
  %4243 = vmatpush.bf16.msra.mxu0 %v3743
  %4244 = vmatpush.bf16.msra.mxu0 %v3739
  %4245 = vmatpush.bf16.msra.mxu0 %v3735
  %4246 = vmatpush.bf16.msra.mxu0 %v3731
  %4247 = vmatpush.bf16.msra.mxu0 %v3727
  %4248 = vmatmul.bf16.gmra.mxu0 %v4225
  %v4249 = vpop.f32.mrf.mxu0
  %v4250 = vadd.f32 0.0, %v4249
  %v4251 = vpop.f32.mrf.mxu0
  %v4252 = vadd.f32 0.0, %v4251
  %4253 = vdwg.mxu0
  %4254 = vmatpush.bf16.msra.mxu0 %v3756
  %4255 = vmatpush.bf16.msra.mxu0 %v3752
  %4256 = vmatpush.bf16.msra.mxu0 %v3748
  %4257 = vmatpush.bf16.msra.mxu0 %v3744
  %4258 = vmatpush.bf16.msra.mxu0 %v3740
  %4259 = vmatpush.bf16.msra.mxu0 %v3736
  %4260 = vmatpush.bf16.msra.mxu0 %v3732
  %4261 = vmatpush.bf16.msra.mxu0 %v3728
  %4262 = vmatmul.bf16.gmra.mxu0 %v4225
  %v4263 = vpop.f32.mrf.mxu0
  %v4264 = vadd.f32 0.0, %v4263
  %v4265 = vpop.f32.mrf.mxu0
  %v4266 = vadd.f32 0.0, %v4265
  %4267 = vdwg.mxu0
  %4268 = vmatpush.bf16.msra.mxu0 %v3757
  %4269 = vmatpush.bf16.msra.mxu0 %v3753
  %4270 = vmatpush.bf16.msra.mxu0 %v3749
  %4271 = vmatpush.bf16.msra.mxu0 %v3745
  %4272 = vmatpush.bf16.msra.mxu0 %v3741
  %4273 = vmatpush.bf16.msra.mxu0 %v3737
  %4274 = vmatpush.bf16.msra.mxu0 %v3733
  %4275 = vmatpush.bf16.msra.mxu0 %v3729
  %4276 = vmatmul.bf16.gmra.mxu0 %v4225
  %v4277 = vpop.f32.mrf.mxu0
  %v4278 = vadd.f32 0.0, %v4277
  %v4279 = vpop.f32.mrf.mxu0
  %v4280 = vadd.f32 0.0, %v4279
  %4281 = vdwg.mxu0
  %v4282 = vadd.f32 %v4217, %v4236
  %v4283 = vadd.f32 %v4218, %v4250
  %v4284 = vadd.f32 %v4219, %v4264
  %v4285 = vadd.f32 %v4220, %v4278
  %v4286 = vadd.f32 %v4221, %v4238
  %v4287 = vadd.f32 %v4222, %v4252
  %v4288 = vadd.f32 %v4223, %v4266
  %v4289 = vadd.f32 %v4224, %v4280
  %v4290 = vmul.f32 %v4282, 0.5
  %v4291 = vmul.f32 %v4286, 0.5
  %v4292 = vtanh.pop %v4290
  %v4293 = vtanh.pop %v4291
  %v4294 = vmul.f32 %v4292, 0.5
  %v4295 = vmul.f32 %v4293, 0.5
  %v4296 = vadd.f32 %v4294, 0.5
  %v4297 = vadd.f32 %v4295, 0.5
  %v4298 = vmul.f32 %v4283, 0.5
  %v4299 = vmul.f32 %v4287, 0.5
  %v4300 = vtanh.pop %v4298
  %v4301 = vtanh.pop %v4299
  %v4302 = vmul.f32 %v4300, 0.5
  %v4303 = vmul.f32 %v4301, 0.5
  %v4304 = vadd.f32 %v4302, 0.5
  %v4305 = vadd.f32 %v4303, 0.5
  %v4306 = vtanh.pop %v4284
  %v4307 = vtanh.pop %v4288
  %v4308 = vmul.f32 %v4285, 0.5
  %v4309 = vmul.f32 %v4289, 0.5
  %v4310 = vtanh.pop %v4308
  %v4311 = vtanh.pop %v4309
  %v4312 = vmul.f32 %v4310, 0.5
  %v4313 = vmul.f32 %v4311, 0.5
  %v4314 = vadd.f32 %v4312, 0.5
  %v4315 = vadd.f32 %v4313, 0.5
  %v4316 = vmul.f32 %v4304, %v4211
  %v4317 = vmul.f32 %v4305, %v4212
  %v4318 = vmul.f32 %v4296, %v4306
  %v4319 = vmul.f32 %v4297, %v4307
  %v4320 = vadd.f32 %v4316, %v4318
  %v4321 = vadd.f32 %v4317, %v4319
  %v4322 = vtanh.pop %v4320
  %v4323 = vtanh.pop %v4321
  %v4324 = vmul.f32 %v4314, %v4322
  %v4325 = vmul.f32 %v4315, %v4323
  %v4326 = vld [vmem:[%s2124] sm:$0xff]
  %v4327 = vld [vmem:[%s2124 + $0x8] sm:$0xff]
  %v4328 = vld [vmem:[%s2124 + $0x10] sm:$0xff]
  %v4329 = vld [vmem:[%s2124 + $0x18] sm:$0xff]
  %v4330 = vld [vmem:[%s2124 + $0x20] sm:$0xff]
  %v4331 = vld [vmem:[%s2124 + $0x28] sm:$0xff]
  %v4332 = vld [vmem:[%s2124 + $0x30] sm:$0xff]
  %v4333 = vld [vmem:[%s2124 + $0x38] sm:$0xff]
  %v4334 = vpack.c.bf16 %v4325, %v4324
  %4335 = vmatpush.bf16.msra.mxu0 %v3754
  %4336 = vmatpush.bf16.msra.mxu0 %v3750
  %4337 = vmatpush.bf16.msra.mxu0 %v3746
  %4338 = vmatpush.bf16.msra.mxu0 %v3742
  %4339 = vmatpush.bf16.msra.mxu0 %v3738
  %4340 = vmatpush.bf16.msra.mxu0 %v3734
  %4341 = vmatpush.bf16.msra.mxu0 %v3730
  %4342 = vmatpush.bf16.msra.mxu0 %v3726
  %4343 = vmatmul.bf16.gmra.mxu0 %v4334
  %v4344 = vpop.f32.mrf.mxu0
  %v4345 = vadd.f32 0.0, %v4344
  %v4346 = vpop.f32.mrf.mxu0
  %v4347 = vadd.f32 0.0, %v4346
  %4348 = vdwg.mxu0
  %4349 = vmatpush.bf16.msra.mxu0 %v3755
  %4350 = vmatpush.bf16.msra.mxu0 %v3751
  %4351 = vmatpush.bf16.msra.mxu0 %v3747
  %4352 = vmatpush.bf16.msra.mxu0 %v3743
  %4353 = vmatpush.bf16.msra.mxu0 %v3739
  %4354 = vmatpush.bf16.msra.mxu0 %v3735
  %4355 = vmatpush.bf16.msra.mxu0 %v3731
  %4356 = vmatpush.bf16.msra.mxu0 %v3727
  %4357 = vmatmul.bf16.gmra.mxu0 %v4334
  %v4358 = vpop.f32.mrf.mxu0
  %v4359 = vadd.f32 0.0, %v4358
  %v4360 = vpop.f32.mrf.mxu0
  %v4361 = vadd.f32 0.0, %v4360
  %4362 = vdwg.mxu0
  %4363 = vmatpush.bf16.msra.mxu0 %v3756
  %4364 = vmatpush.bf16.msra.mxu0 %v3752
  %4365 = vmatpush.bf16.msra.mxu0 %v3748
  %4366 = vmatpush.bf16.msra.mxu0 %v3744
  %4367 = vmatpush.bf16.msra.mxu0 %v3740
  %4368 = vmatpush.bf16.msra.mxu0 %v3736
  %4369 = vmatpush.bf16.msra.mxu0 %v3732
  %4370 = vmatpush.bf16.msra.mxu0 %v3728
  %4371 = vmatmul.bf16.gmra.mxu0 %v4334
  %v4372 = vpop.f32.mrf.mxu0
  %v4373 = vadd.f32 0.0, %v4372
  %v4374 = vpop.f32.mrf.mxu0
  %v4375 = vadd.f32 0.0, %v4374
  %4376 = vdwg.mxu0
  %4377 = vmatpush.bf16.msra.mxu0 %v3757
  %4378 = vmatpush.bf16.msra.mxu0 %v3753
  %4379 = vmatpush.bf16.msra.mxu0 %v3749
  %4380 = vmatpush.bf16.msra.mxu0 %v3745
  %4381 = vmatpush.bf16.msra.mxu0 %v3741
  %4382 = vmatpush.bf16.msra.mxu0 %v3737
  %4383 = vmatpush.bf16.msra.mxu0 %v3733
  %4384 = vmatpush.bf16.msra.mxu0 %v3729
  %4385 = vmatmul.bf16.gmra.mxu0 %v4334
  %v4386 = vpop.f32.mrf.mxu0
  %v4387 = vadd.f32 0.0, %v4386
  %v4388 = vpop.f32.mrf.mxu0
  %v4389 = vadd.f32 0.0, %v4388
  %4390 = vdwg.mxu0
  %v4391 = vadd.f32 %v4326, %v4345
  %v4392 = vadd.f32 %v4327, %v4359
  %v4393 = vadd.f32 %v4328, %v4373
  %v4394 = vadd.f32 %v4329, %v4387
  %v4395 = vadd.f32 %v4330, %v4347
  %v4396 = vadd.f32 %v4331, %v4361
  %v4397 = vadd.f32 %v4332, %v4375
  %v4398 = vadd.f32 %v4333, %v4389
  %v4399 = vmul.f32 %v4391, 0.5
  %v4400 = vmul.f32 %v4395, 0.5
  %v4401 = vtanh.pop %v4399
  %v4402 = vtanh.pop %v4400
  %v4403 = vmul.f32 %v4401, 0.5
  %v4404 = vmul.f32 %v4402, 0.5
  %v4405 = vadd.f32 %v4403, 0.5
  %v4406 = vadd.f32 %v4404, 0.5
  %v4407 = vmul.f32 %v4392, 0.5
  %v4408 = vmul.f32 %v4396, 0.5
  %v4409 = vtanh.pop %v4407
  %v4410 = vtanh.pop %v4408
  %v4411 = vmul.f32 %v4409, 0.5
  %v4412 = vmul.f32 %v4410, 0.5
  %v4413 = vadd.f32 %v4411, 0.5
  %v4414 = vadd.f32 %v4412, 0.5
  %v4415 = vtanh.pop %v4393
  %v4416 = vtanh.pop %v4397
  %v4417 = vmul.f32 %v4394, 0.5
  %v4418 = vmul.f32 %v4398, 0.5
  %v4419 = vtanh.pop %v4417
  %v4420 = vtanh.pop %v4418
  %v4421 = vmul.f32 %v4419, 0.5
  %v4422 = vmul.f32 %v4420, 0.5
  %v4423 = vadd.f32 %v4421, 0.5
  %v4424 = vadd.f32 %v4422, 0.5
  %v4425 = vmul.f32 %v4413, %v4320
  %v4426 = vmul.f32 %v4414, %v4321
  %v4427 = vmul.f32 %v4405, %v4415
  %v4428 = vmul.f32 %v4406, %v4416
  %v4429 = vadd.f32 %v4425, %v4427
  %v4430 = vadd.f32 %v4426, %v4428
  %v4431 = vtanh.pop %v4429
  %v4432 = vtanh.pop %v4430
  %v4433 = vmul.f32 %v4423, %v4431
  %v4434 = vmul.f32 %v4424, %v4432
  %v4435 = vld [vmem:[%s2438] sm:$0xff]
  %v4436 = vld [vmem:[%s2438 + $0x8] sm:$0xff]
  %v4437 = vld [vmem:[%s2438 + $0x10] sm:$0xff]
  %v4438 = vld [vmem:[%s2438 + $0x18] sm:$0xff]
  %v4439 = vld [vmem:[%s2438 + $0x20] sm:$0xff]
  %v4440 = vld [vmem:[%s2438 + $0x28] sm:$0xff]
  %v4441 = vld [vmem:[%s2438 + $0x30] sm:$0xff]
  %v4442 = vld [vmem:[%s2438 + $0x38] sm:$0xff]
  %v4443 = vpack.c.bf16 %v4434, %v4433
  %4444 = vmatpush.bf16.msra.mxu0 %v3754
  %4445 = vmatpush.bf16.msra.mxu0 %v3750
  %4446 = vmatpush.bf16.msra.mxu0 %v3746
  %4447 = vmatpush.bf16.msra.mxu0 %v3742
  %4448 = vmatpush.bf16.msra.mxu0 %v3738
  %4449 = vmatpush.bf16.msra.mxu0 %v3734
  %4450 = vmatpush.bf16.msra.mxu0 %v3730
  %4451 = vmatpush.bf16.msra.mxu0 %v3726
  %4452 = vmatmul.bf16.gmra.mxu0 %v4443
  %v4453 = vpop.f32.mrf.mxu0
  %v4454 = vadd.f32 0.0, %v4453
  %v4455 = vpop.f32.mrf.mxu0
  %v4456 = vadd.f32 0.0, %v4455
  %4457 = vdwg.mxu0
  %4458 = vmatpush.bf16.msra.mxu0 %v3755
  %4459 = vmatpush.bf16.msra.mxu0 %v3751
  %4460 = vmatpush.bf16.msra.mxu0 %v3747
  %4461 = vmatpush.bf16.msra.mxu0 %v3743
  %4462 = vmatpush.bf16.msra.mxu0 %v3739
  %4463 = vmatpush.bf16.msra.mxu0 %v3735
  %4464 = vmatpush.bf16.msra.mxu0 %v3731
  %4465 = vmatpush.bf16.msra.mxu0 %v3727
  %4466 = vmatmul.bf16.gmra.mxu0 %v4443
  %v4467 = vpop.f32.mrf.mxu0
  %v4468 = vadd.f32 0.0, %v4467
  %v4469 = vpop.f32.mrf.mxu0
  %v4470 = vadd.f32 0.0, %v4469
  %4471 = vdwg.mxu0
  %4472 = vmatpush.bf16.msra.mxu0 %v3756
  %4473 = vmatpush.bf16.msra.mxu0 %v3752
  %4474 = vmatpush.bf16.msra.mxu0 %v3748
  %4475 = vmatpush.bf16.msra.mxu0 %v3744
  %4476 = vmatpush.bf16.msra.mxu0 %v3740
  %4477 = vmatpush.bf16.msra.mxu0 %v3736
  %4478 = vmatpush.bf16.msra.mxu0 %v3732
  %4479 = vmatpush.bf16.msra.mxu0 %v3728
  %4480 = vmatmul.bf16.gmra.mxu0 %v4443
  %v4481 = vpop.f32.mrf.mxu0
  %v4482 = vadd.f32 0.0, %v4481
  %v4483 = vpop.f32.mrf.mxu0
  %v4484 = vadd.f32 0.0, %v4483
  %4485 = vdwg.mxu0
  %4486 = vmatpush.bf16.msra.mxu0 %v3757
  %4487 = vmatpush.bf16.msra.mxu0 %v3753
  %4488 = vmatpush.bf16.msra.mxu0 %v3749
  %4489 = vmatpush.bf16.msra.mxu0 %v3745
  %4490 = vmatpush.bf16.msra.mxu0 %v3741
  %4491 = vmatpush.bf16.msra.mxu0 %v3737
  %4492 = vmatpush.bf16.msra.mxu0 %v3733
  %4493 = vmatpush.bf16.msra.mxu0 %v3729
  %4494 = vmatmul.bf16.gmra.mxu0 %v4443
  %v4495 = vpop.f32.mrf.mxu0
  %v4496 = vadd.f32 0.0, %v4495
  %v4497 = vpop.f32.mrf.mxu0
  %v4498 = vadd.f32 0.0, %v4497
  %4499 = vdwg.mxu0
  %v4500 = vadd.f32 %v4435, %v4454
  %v4501 = vadd.f32 %v4436, %v4468
  %v4502 = vadd.f32 %v4437, %v4482
  %v4503 = vadd.f32 %v4438, %v4496
  %v4504 = vadd.f32 %v4439, %v4456
  %v4505 = vadd.f32 %v4440, %v4470
  %v4506 = vadd.f32 %v4441, %v4484
  %v4507 = vadd.f32 %v4442, %v4498
  %v4508 = vmul.f32 %v4500, 0.5
  %v4509 = vmul.f32 %v4504, 0.5
  %v4510 = vtanh.pop %v4508
  %v4511 = vtanh.pop %v4509
  %v4512 = vmul.f32 %v4510, 0.5
  %v4513 = vmul.f32 %v4511, 0.5
  %v4514 = vadd.f32 %v4512, 0.5
  %v4515 = vadd.f32 %v4513, 0.5
  %v4516 = vmul.f32 %v4501, 0.5
  %v4517 = vmul.f32 %v4505, 0.5
  %v4518 = vtanh.pop %v4516
  %v4519 = vtanh.pop %v4517
  %v4520 = vmul.f32 %v4518, 0.5
  %v4521 = vmul.f32 %v4519, 0.5
  %v4522 = vadd.f32 %v4520, 0.5
  %v4523 = vadd.f32 %v4521, 0.5
  %v4524 = vtanh.pop %v4502
  %v4525 = vtanh.pop %v4506
  %v4526 = vmul.f32 %v4503, 0.5
  %v4527 = vmul.f32 %v4507, 0.5
  %v4528 = vtanh.pop %v4526
  %v4529 = vtanh.pop %v4527
  %v4530 = vmul.f32 %v4528, 0.5
  %v4531 = vmul.f32 %v4529, 0.5
  %v4532 = vadd.f32 %v4530, 0.5
  %v4533 = vadd.f32 %v4531, 0.5
  %v4534 = vmul.f32 %v4522, %v4429
  %v4535 = vmul.f32 %v4523, %v4430
  %v4536 = vmul.f32 %v4514, %v4524
  %v4537 = vmul.f32 %v4515, %v4525
  %v4538 = vadd.f32 %v4534, %v4536
  %v4539 = vadd.f32 %v4535, %v4537
  %v4540 = vtanh.pop %v4538
  %v4541 = vtanh.pop %v4539
  %v4542 = vmul.f32 %v4532, %v4540
  %v4543 = vmul.f32 %v4533, %v4541
  %v4544 = vld [vmem:[%s2752] sm:$0xff]
  %v4545 = vld [vmem:[%s2752 + $0x8] sm:$0xff]
  %v4546 = vld [vmem:[%s2752 + $0x10] sm:$0xff]
  %v4547 = vld [vmem:[%s2752 + $0x18] sm:$0xff]
  %v4548 = vld [vmem:[%s2752 + $0x20] sm:$0xff]
  %v4549 = vld [vmem:[%s2752 + $0x28] sm:$0xff]
  %v4550 = vld [vmem:[%s2752 + $0x30] sm:$0xff]
  %v4551 = vld [vmem:[%s2752 + $0x38] sm:$0xff]
  %v4552 = vpack.c.bf16 %v4543, %v4542
  %4553 = vmatpush.bf16.msra.mxu0 %v3754
  %4554 = vmatpush.bf16.msra.mxu0 %v3750
  %4555 = vmatpush.bf16.msra.mxu0 %v3746
  %4556 = vmatpush.bf16.msra.mxu0 %v3742
  %4557 = vmatpush.bf16.msra.mxu0 %v3738
  %4558 = vmatpush.bf16.msra.mxu0 %v3734
  %4559 = vmatpush.bf16.msra.mxu0 %v3730
  %4560 = vmatpush.bf16.msra.mxu0 %v3726
  %4561 = vmatmul.bf16.gmra.mxu0 %v4552
  %v4562 = vpop.f32.mrf.mxu0
  %v4563 = vadd.f32 0.0, %v4562
  %v4564 = vpop.f32.mrf.mxu0
  %v4565 = vadd.f32 0.0, %v4564
  %4566 = vdwg.mxu0
  %4567 = vmatpush.bf16.msra.mxu0 %v3755
  %4568 = vmatpush.bf16.msra.mxu0 %v3751
  %4569 = vmatpush.bf16.msra.mxu0 %v3747
  %4570 = vmatpush.bf16.msra.mxu0 %v3743
  %4571 = vmatpush.bf16.msra.mxu0 %v3739
  %4572 = vmatpush.bf16.msra.mxu0 %v3735
  %4573 = vmatpush.bf16.msra.mxu0 %v3731
  %4574 = vmatpush.bf16.msra.mxu0 %v3727
  %4575 = vmatmul.bf16.gmra.mxu0 %v4552
  %v4576 = vpop.f32.mrf.mxu0
  %v4577 = vadd.f32 0.0, %v4576
  %v4578 = vpop.f32.mrf.mxu0
  %v4579 = vadd.f32 0.0, %v4578
  %4580 = vdwg.mxu0
  %4581 = vmatpush.bf16.msra.mxu0 %v3756
  %4582 = vmatpush.bf16.msra.mxu0 %v3752
  %4583 = vmatpush.bf16.msra.mxu0 %v3748
  %4584 = vmatpush.bf16.msra.mxu0 %v3744
  %4585 = vmatpush.bf16.msra.mxu0 %v3740
  %4586 = vmatpush.bf16.msra.mxu0 %v3736
  %4587 = vmatpush.bf16.msra.mxu0 %v3732
  %4588 = vmatpush.bf16.msra.mxu0 %v3728
  %4589 = vmatmul.bf16.gmra.mxu0 %v4552
  %v4590 = vpop.f32.mrf.mxu0
  %v4591 = vadd.f32 0.0, %v4590
  %v4592 = vpop.f32.mrf.mxu0
  %v4593 = vadd.f32 0.0, %v4592
  %4594 = vdwg.mxu0
  %4595 = vmatpush.bf16.msra.mxu0 %v3757
  %4596 = vmatpush.bf16.msra.mxu0 %v3753
  %4597 = vmatpush.bf16.msra.mxu0 %v3749
  %4598 = vmatpush.bf16.msra.mxu0 %v3745
  %4599 = vmatpush.bf16.msra.mxu0 %v3741
  %4600 = vmatpush.bf16.msra.mxu0 %v3737
  %4601 = vmatpush.bf16.msra.mxu0 %v3733
  %4602 = vmatpush.bf16.msra.mxu0 %v3729
  %4603 = vmatmul.bf16.gmra.mxu0 %v4552
  %v4604 = vpop.f32.mrf.mxu0
  %v4605 = vadd.f32 0.0, %v4604
  %v4606 = vpop.f32.mrf.mxu0
  %v4607 = vadd.f32 0.0, %v4606
  %4608 = vdwg.mxu0
  %v4609 = vadd.f32 %v4544, %v4563
  %v4610 = vadd.f32 %v4545, %v4577
  %v4611 = vadd.f32 %v4546, %v4591
  %v4612 = vadd.f32 %v4547, %v4605
  %v4613 = vadd.f32 %v4548, %v4565
  %v4614 = vadd.f32 %v4549, %v4579
  %v4615 = vadd.f32 %v4550, %v4593
  %v4616 = vadd.f32 %v4551, %v4607
  %v4617 = vmul.f32 %v4609, 0.5
  %v4618 = vmul.f32 %v4613, 0.5
  %v4619 = vtanh.pop %v4617
  %v4620 = vtanh.pop %v4618
  %v4621 = vmul.f32 %v4619, 0.5
  %v4622 = vmul.f32 %v4620, 0.5
  %v4623 = vadd.f32 %v4621, 0.5
  %v4624 = vadd.f32 %v4622, 0.5
  %v4625 = vmul.f32 %v4610, 0.5
  %v4626 = vmul.f32 %v4614, 0.5
  %v4627 = vtanh.pop %v4625
  %v4628 = vtanh.pop %v4626
  %v4629 = vmul.f32 %v4627, 0.5
  %v4630 = vmul.f32 %v4628, 0.5
  %v4631 = vadd.f32 %v4629, 0.5
  %v4632 = vadd.f32 %v4630, 0.5
  %v4633 = vtanh.pop %v4611
  %v4634 = vtanh.pop %v4615
  %v4635 = vmul.f32 %v4612, 0.5
  %v4636 = vmul.f32 %v4616, 0.5
  %v4637 = vtanh.pop %v4635
  %v4638 = vtanh.pop %v4636
  %v4639 = vmul.f32 %v4637, 0.5
  %v4640 = vmul.f32 %v4638, 0.5
  %v4641 = vadd.f32 %v4639, 0.5
  %v4642 = vadd.f32 %v4640, 0.5
  %v4643 = vmul.f32 %v4631, %v4538
  %v4644 = vmul.f32 %v4632, %v4539
  %v4645 = vmul.f32 %v4623, %v4633
  %v4646 = vmul.f32 %v4624, %v4634
  %v4647 = vadd.f32 %v4643, %v4645
  %v4648 = vadd.f32 %v4644, %v4646
  %v4649 = vtanh.pop %v4647
  %v4650 = vtanh.pop %v4648
  %v4651 = vmul.f32 %v4641, %v4649
  %v4652 = vmul.f32 %v4642, %v4650
  %v4653 = vpack.c.bf16 %v4652, %v4651
  %v4654 = vld [vmem:[%s7] sm:$0xf]
  %v4655 = vld [vmem:[%s7 + $0x4] sm:$0xf]
  %v4656 = vld [vmem:[%s7 + $0x8] sm:$0xf]
  %v4657 = vld [vmem:[%s7 + $0xc] sm:$0xf]
  %v4658 = vld [vmem:[%s7 + $0x10] sm:$0xf]
  %v4659 = vld [vmem:[%s7 + $0x14] sm:$0xf]
  %v4660 = vld [vmem:[%s7 + $0x18] sm:$0xf]
  %v4661 = vld [vmem:[%s7 + $0x1c] sm:$0xf]
  %v4662 = vld [vmem:[%s7 + $0x20] sm:$0xf]
  %v4663 = vld [vmem:[%s7 + $0x24] sm:$0xf]
  %v4664 = vld [vmem:[%s7 + $0x28] sm:$0xf]
  %v4665 = vld [vmem:[%s7 + $0x2c] sm:$0xf]
  %v4666 = vld [vmem:[%s7 + $0x30] sm:$0xf]
  %v4667 = vld [vmem:[%s7 + $0x34] sm:$0xf]
  %v4668 = vld [vmem:[%s7 + $0x38] sm:$0xf]
  %v4669 = vld [vmem:[%s7 + $0x3c] sm:$0xf]
  %v4670 = vld [vmem:[%s8] sm:$0x1]
  %v4672 = vperm.slane %v4670, 0
  %v4690 = vunpack.c.l.b16 %v4654
  %v4691 = vunpack.c.l.b16 %v4655
  %v4692 = vunpack.c.l.b16 %v4656
  %v4693 = vunpack.c.l.b16 %v4657
  %v4694 = vunpack.c.l.b16 %v4658
  %v4695 = vunpack.c.l.b16 %v4659
  %v4696 = vunpack.c.l.b16 %v4660
  %v4697 = vunpack.c.l.b16 %v4661
  %v4698 = vunpack.c.l.b16 %v4662
  %v4699 = vunpack.c.l.b16 %v4663
  %v4700 = vunpack.c.l.b16 %v4664
  %v4701 = vunpack.c.l.b16 %v4665
  %v4702 = vunpack.c.l.b16 %v4666
  %v4703 = vunpack.c.l.b16 %v4667
  %v4704 = vunpack.c.l.b16 %v4668
  %v4705 = vunpack.c.l.b16 %v4669
  %v4706 = vpack.c.b16 %v4691, %v4690
  %v4707 = vpack.c.b16 %v4693, %v4692
  %v4708 = vpack.c.b16 %v4695, %v4694
  %v4709 = vpack.c.b16 %v4697, %v4696
  %v4710 = vpack.c.b16 %v4699, %v4698
  %v4711 = vpack.c.b16 %v4701, %v4700
  %v4712 = vpack.c.b16 %v4703, %v4702
  %v4713 = vpack.c.b16 %v4705, %v4704
  %4722 = vmatpush.bf16.msra.mxu0 %v4713
  %4723 = vmatpush.bf16.msra.mxu0 %v4712
  %4724 = vmatpush.bf16.msra.mxu0 %v4711
  %4725 = vmatpush.bf16.msra.mxu0 %v4710
  %4726 = vmatpush.bf16.msra.mxu0 %v4709
  %4727 = vmatpush.bf16.msra.mxu0 %v4708
  %4728 = vmatpush.bf16.msra.mxu0 %v4707
  %4729 = vmatpush.bf16.msra.mxu0 %v4706
  %4730 = vmatmul.bf16.gmra.mxu0 %v4653
  %v4731 = vpop.f32.mrf.mxu0
  %v4732 = vadd.f32 %v4672, %v4731
  %v4733 = vpop.f32.mrf.mxu0
  %v4734 = vadd.f32 %v4672, %v4733
  %4735 = vdwg.mxu0
  %4736 = vmax.xlane.f32.xlu0 %v4732
  %v4737 = vpop.xlane.xlu0 %4736
  %4738 = vmax.xlane.f32.xlu0 %v4734
  %v4739 = vpop.xlane.xlu0 %4738
  %v4740 = vsub.f32 %v4732, %v4737
  %v4741 = vsub.f32 %v4734, %v4739
  %v4742 = vmul.f32 %v4740, 1.442695
  %v4743 = vpow.pop %v4742
  %v4744 = vmul.f32 %v4741, 1.442695
  %v4745 = vpow.pop %v4744
  %4746 = vadd.xlane.f32.xlu0 %v4743
  %v4747 = vpop.xlane.xlu0 %4746
  %4748 = vadd.xlane.f32.xlu0 %v4745
  %v4749 = vpop.xlane.xlu0 %4748
  %v4750 = vrcp.pop %v4747
  %v4751 = vrcp.pop %v4749
  %v4752 = vmul.f32 %v4743, %v4750
  %v4753 = vmul.f32 %v4745, %v4751
  %4754 = vst [vmem:[%s9] sm:$0xff] %v4752
  %4755 = vst [vmem:[%s9 + $0x8] sm:$0xff] %v4753
  // Predicated region
  $region38: #{lstm_contempt_net_forward.1} parent=0 // pred_check
    _
  $region39: #{lstm_contempt_net_forward.1} parent=0 // pred_check_branch
    %4757 = sbr.rel (0) target = $region41
  $region40: #{lstm_contempt_net_forward.1} parent=0 // pred_region
    _
  $region41: #{lstm_contempt_net_forward.1} parent=0 // pred_fallthru
    _
  // Predicated region
  $region42: #{lstm_contempt_net_forward.1} parent=0 // pred_check
    _
  $region43: #{lstm_contempt_net_forward.1} parent=0 // pred_check_branch
    %4759 = sbr.rel (0) target = $region45
  $region44: #{lstm_contempt_net_forward.1} parent=0 // pred_region
    _
  $region45: #{lstm_contempt_net_forward.1} parent=0 // pred_fallthru
    _

</llo_original>
